<compile_context>
chip_gen: v7x
topology: tpu7x:2x2x1
jax: 0.10.0
libtpu: 0.0.40
codegen_flags: <defaults>
</compile_context>

<pallas_src>
import math

import jax
import jax.numpy as jnp
from jax.experimental import pallas as pl
from jax.experimental.pallas import tpu as pltpu


# ----------------------------- model config ---------------------------------
INPUT_NODE_DIM = 10
HIDDEN_DIM = 32
N_LAYERS = 4
NUM_HEADS = 4
LN_EPS = 1e-5

# packed-weight layout constants
_QKV = NUM_HEADS * HIDDEN_DIM            # 128 (all heads of Q, of K, of V)
_SKIP_OFF = 3 * _QKV                     # 384
_W_PACK = 512                            # [Q|K|V|skip|pad] -> multiple of 256


# ------------------------------ tiling helpers --------------------------------
def _round_up(n, m):
    return ((n + m - 1) // m) * m


def _choose_tile_q(n_padded):
    """q-row block size; full rows for small graphs, 128-row blocks otherwise."""
    return n_padded if n_padded <= 256 else 128


def _pad_num_nodes(n):
    n_pad = _round_up(max(n, 8), 8)
    if n_pad > 256:
        n_pad = _round_up(n_pad, 128)
    return n_pad


def _vmem_limit_bytes(n_pad, num_graphs):
    """Scoped VMEM request sized to the kernel working set (with headroom)."""
    h, heads, layers = HIDDEN_DIM, NUM_HEADS, N_LAYERS
    t = _choose_tile_q(n_pad)
    total = 0
    total += n_pad * n_pad * 2                                   # adj mask (bf16)
    total += num_graphs * n_pad * 2 + num_graphs * h * 4         # pool + out
    total += n_pad * (INPUT_NODE_DIM + 1) * 2                    # augmented x
    total += layers * h * _W_PACK * 2 + layers * 2 * _W_PACK * 4 # packed weights
    total += (INPUT_NODE_DIM + 1) * h * 2                        # w0
    total += n_pad * _W_PACK * 4                                 # proj (f32)
    total += 4 * n_pad * h * 4                                   # x / attn / y temps
    total += heads * n_pad * h * 2                               # V stack (bf16)
    total += 3 * t * n_pad * 4                                   # score temps (f32)
    total += t * heads * n_pad * 2                               # P stack (bf16)
    total = int(total * 3) + (4 << 20)                           # pipeline headroom
    return max(32 << 20, min(total, 64 << 20))


# ------------------------------- kernel -------------------------------------
def kspace_ctgnn_kernel(
    xa_ref,      # (N, D_in+1) bf16  raw node features with ones column appended
    adj_ref,     # (N, N)      bf16  adj[i, j] = 1 iff edge j -> i
    pool_ref,    # (G, N)      bf16  one-hot graph membership (0/1)
    w0_ref,      # (D_in+1, H) bf16  [W0; b0] initial projection
    wmat_ref,    # (L, H, 512) bf16  fused [Q|K|V|skip|pad] weights (Q pre-scaled)
    bvec_ref,    # (L, 2, 512) f32   row0: fused biases; row1: [beta_a|beta_b|ln_g|ln_b]
    out_ref,     # (G, H)      f32   pooled graph embeddings
):
    f32 = jnp.float32
    bf16 = jnp.bfloat16
    H = HIDDEN_DIM
    heads = NUM_HEADS
    inv_heads = f32(1.0 / heads)

    n_nodes = adj_ref.shape[0]
    tile_q = _choose_tile_q(n_nodes)
    n_blk = n_nodes // tile_q

    # initial projection: [x | 1] @ [[W0]; [b0]]   (bf16 MXU, f32 accumulate)
    x = jnp.dot(xa_ref[...], w0_ref[...],
                preferred_element_type=jnp.float32)              # (N, H) f32

    for l in range(N_LAYERS):
        w_l = wmat_ref[l]                                        # (H, 512) bf16
        bv_l = bvec_ref[l]                                       # (2, 512) f32
        b_l = bv_l[0:1, :]                                       # (1, 512)
        row2 = bv_l[1:2, :]                                      # (1, 512)

        # one lane-dense (256-aligned) matmul for all heads' Q,K,V and skip
        proj = jnp.dot(x.astype(bf16), w_l,
                       preferred_element_type=jnp.float32) + b_l  # (N, 512) f32

        q_all = proj[:, 0:_QKV]                                  # (N, 128) f32
        k_all = proj[:, _QKV:2 * _QKV].astype(bf16)              # (N, 128) bf16
        v_all = proj[:, 2 * _QKV:3 * _QKV]                       # (N, 128) f32
        x_r = proj[:, _SKIP_OFF:_SKIP_OFF + H]                   # (N, H)  skip path

        # V stacked along sublanes once per layer -> single fused P.V matmul
        v_stack = jnp.concatenate(
            [v_all[:, h * H:(h + 1) * H] for h in range(heads)],
            axis=0).astype(bf16)                                 # (heads*N, H)

        # --- TransformerConv (multi-head graph attention, concat=False) -----
        attn_blocks = []
        for qb in range(n_blk):
            r0 = qb * tile_q
            mask_blk = adj_ref[r0:r0 + tile_q, :]                # (T, N) bf16
            edge_blk = mask_blk != 0                             # bool, hoisted per block

            p_list = []
            for h in range(heads):
                q_h = q_all[r0:r0 + tile_q, h * H:(h + 1) * H].astype(bf16)
                k_h = k_all[:, h * H:(h + 1) * H]
                # s[i, j] = q_i . k_j (scores of incoming edge j -> i); scale prefolded
                s = jax.lax.dot_general(
                    q_h, k_h, (((1,), (1,)), ((), ())),
                    preferred_element_type=jnp.float32)          # (T, N) f32

                # masked softmax restricted to existing incoming edges
                s = jnp.where(edge_blk, s, f32(-1e30))
                m = jnp.max(s, axis=-1, keepdims=True)
                p = jnp.exp(s - m)
                p = jnp.where(edge_blk, p, f32(0.0))             # zero-in-degree rows -> 0
                denom = jnp.sum(p, axis=-1, keepdims=True)
                p = p * pl.reciprocal(jnp.maximum(denom, f32(1e-16)), approx=True)
                # dropout(p=0.1) is identity at inference time.
                p_list.append(p.astype(bf16))

            p_stack = jnp.concatenate(p_list, axis=1)            # (T, heads*N) bf16
            attn_blk = jnp.dot(p_stack, v_stack,
                               preferred_element_type=jnp.float32) * inv_heads
            attn_blocks.append(attn_blk)                         # (T, H) f32

        attn_out = (attn_blocks[0] if n_blk == 1
                    else jnp.concatenate(attn_blocks, axis=0))   # (N, H)

        # --- skip connection with learned beta gate ---------------------------
        beta_a = row2[:, 0:H]                                    # (1, H) = (w1+w3)^T
        beta_b = row2[:, H:2 * H]                                # (1, H) = (w2-w3)^T
        ln_g = row2[:, 2 * H:3 * H]
        ln_b = row2[:, 3 * H:4 * H]

        beta_logit = jnp.sum(attn_out * beta_a + x_r * beta_b,
                             axis=-1, keepdims=True)             # (N, 1)
        beta = jax.nn.sigmoid(beta_logit)
        y = beta * x_r + (f32(1.0) - beta) * attn_out            # (N, H)

        # --- LayerNorm (f32 statistics) ---------------------------------------
        mu = jnp.mean(y, axis=-1, keepdims=True)
        var = jnp.mean((y - mu) * (y - mu), axis=-1, keepdims=True)
        y = (y - mu) * jax.lax.rsqrt(var + f32(LN_EPS))
        y = y * ln_g + ln_b

        # --- ReLU ---------------------------------------------------------------
        x = jnp.maximum(y, f32(0.0))

    # global_mean_pool: 0/1 pool matmul (bf16 MXU) then exact f32 count divide
    pool_b = pool_ref[...]                                       # (G, N) bf16 0/1
    counts = jnp.sum(pool_b.astype(f32), axis=-1, keepdims=True) # (G, 1) f32
    summed = jnp.dot(pool_b, x.astype(bf16),
                     preferred_element_type=jnp.float32)         # (G, H) f32
    out_ref[...] = summed / jnp.maximum(counts, f32(1.0))


# --------------------------- parameter packing --------------------------------
def pack_params(params):
    """Repack per-head / per-role weights into the fused kernel layout."""
    L, heads, H = N_LAYERS, NUM_HEADS, HIDDEN_DIM
    scale = jnp.float32(1.0 / math.sqrt(H))

    def heads_pack(w):  # (L, heads, A, H) -> (L, A, heads*H)
        L_, h_, a_, o_ = w.shape
        return jnp.transpose(w, (0, 2, 1, 3)).reshape(L_, a_, h_ * o_)

    wq = heads_pack(params["wq"]) * scale      # fold 1/sqrt(H) into Q weights
    wk = heads_pack(params["wk"])
    wv = heads_pack(params["wv"])
    bq = heads_pack(params["bq"]) * scale      # ...and into the Q bias
    bk = heads_pack(params["bk"])
    bv = heads_pack(params["bv"])

    pad_w = jnp.zeros((L, H, _W_PACK - (_SKIP_OFF + H)), jnp.float32)
    wmat = jnp.concatenate([wq, wk, wv, params["wskip"], pad_w], axis=2)   # (L,H,512)

    pad_b = jnp.zeros((L, 1, _W_PACK - (_SKIP_OFF + H)), jnp.float32)
    brow = jnp.concatenate([bq, bk, bv, params["bskip"], pad_b], axis=2)   # (L,1,512)

    # lin_beta: logit = attn@w1 + x_r@w2 + (attn - x_r)@w3
    #                 = attn@(w1+w3) + x_r@(w2-w3)   (merged host-side)
    wb = params["wbeta"][..., 0]                                           # (L, 3H)
    beta_a = (wb[:, 0:H] + wb[:, 2 * H:3 * H])[:, None, :]                 # (L,1,H)
    beta_b = (wb[:, H:2 * H] - wb[:, 2 * H:3 * H])[:, None, :]             # (L,1,H)
    pad_r = jnp.zeros((L, 1, _W_PACK - 4 * H), jnp.float32)
    row2 = jnp.concatenate([beta_a, beta_b, params["lng"], params["lnb"], pad_r],
                           axis=2)                                         # (L,1,512)

    bvec = jnp.concatenate([brow, row2], axis=1).astype(jnp.float32)       # (L,2,512)

    w0b = jnp.concatenate([params["w0"], params["b0"]], axis=0)            # (D_in+1,H)
    return w0b.astype(jnp.bfloat16), wmat.astype(jnp.bfloat16), bvec


# ------------------------------- wrapper -------------------------------------
def kspace_ctgnn_forward(x, edge_index, batch, num_graphs, params):
    n = x.shape[0]
    n_pad = _pad_num_nodes(n)
    src, dst = edge_index[0], edge_index[1]

    # dense adjacency mask (bf16, 0/1 exact): adj[i, j] = 1 iff edge j -> i
    adj = (jnp.zeros((n_pad, n_pad), jnp.float32)
           .at[dst, src].set(1.0)).astype(jnp.bfloat16)

    # one-hot pool matrix (bf16, 0/1 exact); mean divide happens in-kernel (f32)
    one_hot = (batch[None, :] == jnp.arange(num_graphs)[:, None]).astype(jnp.float32)
    pool = (jnp.zeros((num_graphs, n_pad), jnp.float32)
            .at[:, :n].set(one_hot)).astype(jnp.bfloat16)

    # fold initial-projection bias via a ones column; pad nodes with zeros
    x_pad = jnp.zeros((n_pad, INPUT_NODE_DIM), jnp.float32).at[:n].set(
        x.astype(jnp.float32))
    x_aug = jnp.concatenate(
        [x_pad, jnp.ones((n_pad, 1), jnp.float32)], axis=1).astype(jnp.bfloat16)

    w0b, wmat, bvec = pack_params(params)

    inputs = (x_aug, adj, pool, w0b, wmat, bvec)
    vmem_spec = pl.BlockSpec(memory_space=pltpu.MemorySpace.VMEM)
    return pl.pallas_call(
        kspace_ctgnn_kernel,
        out_shape=jax.ShapeDtypeStruct((num_graphs, HIDDEN_DIM), jnp.float32),
        in_specs=[vmem_spec] * len(inputs),
        out_specs=vmem_spec,
        compiler_params=pltpu.CompilerParams(
            vmem_limit_bytes=_vmem_limit_bytes(n_pad, num_graphs)),
    )(*inputs)


# ---------------------------- parameter init ----------------------------------
def init_params(key):
    L, Hh, D, H = N_LAYERS, NUM_HEADS, INPUT_NODE_DIM, HIDDEN_DIM
    ks = jax.random.split(key, 12)

    def nrm(k, shape, scale=0.1):
        return (scale * jax.random.normal(k, shape)).astype(jnp.float32)

    params = {
        "w0":    nrm(ks[0], (D, H)),
        "b0":    nrm(ks[1], (1, H)),
        "wq":    nrm(ks[2], (L, Hh, H, H)),
        "bq":    nrm(ks[3], (L, Hh, 1, H)),
        "wk":    nrm(ks[4], (L, Hh, H, H)),
        "bk":    nrm(ks[5], (L, Hh, 1, H)),
        "wv":    nrm(ks[6], (L, Hh, H, H)),
        "bv":    nrm(ks[7], (L, Hh, 1, H)),
        "wskip": nrm(ks[8], (L, H, H)),
        "bskip": nrm(ks[9], (L, 1, H)),
        "wbeta": nrm(ks[10], (L, 3 * H, 1)),
        "lng":   jnp.ones((L, 1, H), jnp.float32),
        "lnb":   jnp.zeros((L, 1, H), jnp.float32),
    }
    return params


# ---------------------------------- main --------------------------------------
if __name__ == "__main__":
    key = jax.random.PRNGKey(0)
    k_x, k_p = jax.random.split(key)

    # 2 graphs, 8 nodes each -> 16 nodes total; ring edges in both directions
    nodes_per_graph = 8
    num_graphs = 2
    n_nodes = nodes_per_graph * num_graphs

    src_list, dst_list = [], []
    for g in range(num_graphs):
        off = g * nodes_per_graph
        for i in range(nodes_per_graph):
            a = off + i
            b = off + (i + 1) % nodes_per_graph
            src_list += [a, b]
            dst_list += [b, a]
    edge_index = jnp.array([src_list, dst_list], dtype=jnp.int32)
    batch = jnp.repeat(jnp.arange(num_graphs, dtype=jnp.int32), nodes_per_graph)

    x = jax.random.normal(k_x, (n_nodes, INPUT_NODE_DIM), dtype=jnp.float32)
    params = init_params(k_p)

    out = kspace_ctgnn_forward(x, edge_index, batch, num_graphs, params)
    out = jax.block_until_ready(out)

    assert out.shape == (num_graphs, HIDDEN_DIM)
    assert bool(jnp.all(jnp.isfinite(out)))
    print("KERNEL_OK")
</pallas_src>

<mosaic_0001>
module attributes {stable_mosaic.version = 11 : i64} {
  func.func @kspace_ctgnn_kernel(%arg0: memref<16x11xbf16, #tpu.memory_space<vmem>>, %arg1: memref<16x16xbf16, #tpu.memory_space<vmem>>, %arg2: memref<2x16xbf16, #tpu.memory_space<vmem>>, %arg3: memref<11x32xbf16, #tpu.memory_space<vmem>>, %arg4: memref<4x32x512xbf16, #tpu.memory_space<vmem>>, %arg5: memref<4x2x512xf32, #tpu.memory_space<vmem>>, %arg6: memref<2x32xf32, #tpu.memory_space<vmem>>) attributes {dimension_semantics = [], scalar_prefetch = 0 : i64, scratch_operands = 0 : i64, tpu.core_type = #tpu.core_type<tc>} {
    %c0 = arith.constant 0 : index
    %c0_0 = arith.constant 0 : index
    %0 = vector.load %arg0[%c0, %c0_0] : memref<16x11xbf16, #tpu.memory_space<vmem>>, vector<16x11xbf16>
    %c0_1 = arith.constant 0 : index
    %c0_2 = arith.constant 0 : index
    %1 = vector.load %arg3[%c0_1, %c0_2] : memref<11x32xbf16, #tpu.memory_space<vmem>>, vector<11x32xbf16>
    %cst = arith.constant dense<0.000000e+00> : vector<16x32xf32>
    %2 = tpu.matmul %0, %1, %cst {dimension_numbers = #tpu.dot_dimension_numbers<[1], [0], [0], [1], [0, 0, 1, 1], [], []>} : vector<16x11xbf16>, vector<11x32xbf16>, vector<16x32xf32> -> vector<16x32xf32>
    %c0_3 = arith.constant 0 : index
    %c0_4 = arith.constant 0 : index
    %c0_5 = arith.constant 0 : index
    %3 = vector.load %arg4[%c0_3, %c0_4, %c0_5] : memref<4x32x512xbf16, #tpu.memory_space<vmem>>, vector<1x32x512xbf16>
    %4 = vector.shape_cast %3 : vector<1x32x512xbf16> to vector<32x512xbf16>
    %c0_6 = arith.constant 0 : index
    %c0_7 = arith.constant 0 : index
    %c0_8 = arith.constant 0 : index
    %5 = vector.load %arg5[%c0_6, %c0_7, %c0_8] : memref<4x2x512xf32, #tpu.memory_space<vmem>>, vector<1x2x512xf32>
    %6 = vector.shape_cast %5 : vector<1x2x512xf32> to vector<2x512xf32>
    %7 = vector.extract_strided_slice %6 {offsets = [0, 0], sizes = [1, 512], strides = [1, 1]} : vector<2x512xf32> to vector<1x512xf32>
    %8 = vector.extract_strided_slice %6 {offsets = [1, 0], sizes = [1, 512], strides = [1, 1]} : vector<2x512xf32> to vector<1x512xf32>
    %9 = arith.truncf %2 : vector<16x32xf32> to vector<16x32xbf16>
    %cst_9 = arith.constant dense<0.000000e+00> : vector<16x512xf32>
    %10 = tpu.matmul %9, %4, %cst_9 {dimension_numbers = #tpu.dot_dimension_numbers<[1], [0], [0], [1], [0, 0, 1, 1], [], []>} : vector<16x32xbf16>, vector<32x512xbf16>, vector<16x512xf32> -> vector<16x512xf32>
    %11 = vector.broadcast %7 : vector<1x512xf32> to vector<16x512xf32>
    %12 = arith.addf %10, %11 : vector<16x512xf32>
    %13 = vector.extract_strided_slice %12 {offsets = [0, 0], sizes = [16, 128], strides = [1, 1]} : vector<16x512xf32> to vector<16x128xf32>
    %14 = vector.extract_strided_slice %12 {offsets = [0, 128], sizes = [16, 128], strides = [1, 1]} : vector<16x512xf32> to vector<16x128xf32>
    %15 = arith.truncf %14 : vector<16x128xf32> to vector<16x128xbf16>
    %16 = vector.extract_strided_slice %12 {offsets = [0, 256], sizes = [16, 128], strides = [1, 1]} : vector<16x512xf32> to vector<16x128xf32>
    %17 = vector.extract_strided_slice %12 {offsets = [0, 384], sizes = [16, 32], strides = [1, 1]} : vector<16x512xf32> to vector<16x32xf32>
    %18 = vector.extract_strided_slice %16 {offsets = [0, 0], sizes = [16, 32], strides = [1, 1]} : vector<16x128xf32> to vector<16x32xf32>
    %19 = vector.extract_strided_slice %16 {offsets = [0, 32], sizes = [16, 32], strides = [1, 1]} : vector<16x128xf32> to vector<16x32xf32>
    %20 = vector.extract_strided_slice %16 {offsets = [0, 64], sizes = [16, 32], strides = [1, 1]} : vector<16x128xf32> to vector<16x32xf32>
    %21 = vector.extract_strided_slice %16 {offsets = [0, 96], sizes = [16, 32], strides = [1, 1]} : vector<16x128xf32> to vector<16x32xf32>
    %22 = tpu.concatenate %18, %19, %20, %21 in 0 : vector<16x32xf32>, vector<16x32xf32>, vector<16x32xf32>, vector<16x32xf32> -> vector<64x32xf32>
    %23 = arith.truncf %22 : vector<64x32xf32> to vector<64x32xbf16>
    %c0_10 = arith.constant 0 : index
    %c0_11 = arith.constant 0 : index
    %24 = vector.load %arg1[%c0_10, %c0_11] : memref<16x16xbf16, #tpu.memory_space<vmem>>, vector<16x16xbf16>
    %cst_12 = arith.constant 0.000000e+00 : bf16
    %25 = vector.broadcast %cst_12 : bf16 to vector<16x16xbf16>
    %26 = arith.cmpf one, %24, %25 : vector<16x16xbf16>
    %27 = vector.extract_strided_slice %13 {offsets = [0, 0], sizes = [16, 32], strides = [1, 1]} : vector<16x128xf32> to vector<16x32xf32>
    %28 = arith.truncf %27 : vector<16x32xf32> to vector<16x32xbf16>
    %29 = vector.extract_strided_slice %15 {offsets = [0, 0], sizes = [16, 32], strides = [1, 1]} : vector<16x128xbf16> to vector<16x32xbf16>
    %cst_13 = arith.constant dense<0.000000e+00> : vector<16x16xf32>
    %30 = tpu.matmul %28, %29, %cst_13 {dimension_numbers = #tpu.dot_dimension_numbers<[1], [1], [0], [0], [0, 0, 1, 0], [], []>} : vector<16x32xbf16>, vector<16x32xbf16>, vector<16x16xf32> -> vector<16x16xf32>
    %cst_14 = arith.constant -1.000000e+30 : f32
    %31 = vector.broadcast %cst_14 : f32 to vector<16x16xf32>
    %32 = arith.select %26, %30, %31 : vector<16x16xi1>, vector<16x16xf32>
    %cst_15 = arith.constant dense<0xFF800000> : vector<16xf32>
    %33 = vector.multi_reduction <maximumf>, %32, %cst_15 [1] : vector<16x16xf32> to vector<16xf32>
    %34 = vector.shape_cast %33 : vector<16xf32> to vector<16x1xf32>
    %35 = vector.broadcast %34 : vector<16x1xf32> to vector<16x16xf32>
    %36 = arith.subf %32, %35 : vector<16x16xf32>
    %37 = math.exp %36 : vector<16x16xf32>
    %cst_16 = arith.constant 0.000000e+00 : f32
    %38 = vector.broadcast %cst_16 : f32 to vector<16x16xf32>
    %39 = arith.select %26, %37, %38 : vector<16x16xi1>, vector<16x16xf32>
    %cst_17 = arith.constant dense<0.000000e+00> : vector<16xf32>
    %40 = vector.multi_reduction <add>, %39, %cst_17 [1] : vector<16x16xf32> to vector<16xf32>
    %41 = vector.shape_cast %40 : vector<16xf32> to vector<16x1xf32>
    %cst_18 = arith.constant 1.000000e-16 : f32
    %42 = vector.broadcast %cst_18 : f32 to vector<16x1xf32>
    %43 = arith.maximumf %41, %42 : vector<16x1xf32>
    %44 = tpu.reciprocal %43 {approx = true} : vector<16x1xf32> -> vector<16x1xf32>
    %45 = vector.broadcast %44 : vector<16x1xf32> to vector<16x16xf32>
    %46 = arith.mulf %39, %45 : vector<16x16xf32>
    %47 = arith.truncf %46 : vector<16x16xf32> to vector<16x16xbf16>
    %48 = vector.extract_strided_slice %13 {offsets = [0, 32], sizes = [16, 32], strides = [1, 1]} : vector<16x128xf32> to vector<16x32xf32>
    %49 = arith.truncf %48 : vector<16x32xf32> to vector<16x32xbf16>
    %50 = vector.extract_strided_slice %15 {offsets = [0, 32], sizes = [16, 32], strides = [1, 1]} : vector<16x128xbf16> to vector<16x32xbf16>
    %cst_19 = arith.constant dense<0.000000e+00> : vector<16x16xf32>
    %51 = tpu.matmul %49, %50, %cst_19 {dimension_numbers = #tpu.dot_dimension_numbers<[1], [1], [0], [0], [0, 0, 1, 0], [], []>} : vector<16x32xbf16>, vector<16x32xbf16>, vector<16x16xf32> -> vector<16x16xf32>
    %cst_20 = arith.constant -1.000000e+30 : f32
    %52 = vector.broadcast %cst_20 : f32 to vector<16x16xf32>
    %53 = arith.select %26, %51, %52 : vector<16x16xi1>, vector<16x16xf32>
    %cst_21 = arith.constant dense<0xFF800000> : vector<16xf32>
    %54 = vector.multi_reduction <maximumf>, %53, %cst_21 [1] : vector<16x16xf32> to vector<16xf32>
    %55 = vector.shape_cast %54 : vector<16xf32> to vector<16x1xf32>
    %56 = vector.broadcast %55 : vector<16x1xf32> to vector<16x16xf32>
    %57 = arith.subf %53, %56 : vector<16x16xf32>
    %58 = math.exp %57 : vector<16x16xf32>
    %cst_22 = arith.constant 0.000000e+00 : f32
    %59 = vector.broadcast %cst_22 : f32 to vector<16x16xf32>
    %60 = arith.select %26, %58, %59 : vector<16x16xi1>, vector<16x16xf32>
    %cst_23 = arith.constant dense<0.000000e+00> : vector<16xf32>
    %61 = vector.multi_reduction <add>, %60, %cst_23 [1] : vector<16x16xf32> to vector<16xf32>
    %62 = vector.shape_cast %61 : vector<16xf32> to vector<16x1xf32>
    %cst_24 = arith.constant 1.000000e-16 : f32
    %63 = vector.broadcast %cst_24 : f32 to vector<16x1xf32>
    %64 = arith.maximumf %62, %63 : vector<16x1xf32>
    %65 = tpu.reciprocal %64 {approx = true} : vector<16x1xf32> -> vector<16x1xf32>
    %66 = vector.broadcast %65 : vector<16x1xf32> to vector<16x16xf32>
    %67 = arith.mulf %60, %66 : vector<16x16xf32>
    %68 = arith.truncf %67 : vector<16x16xf32> to vector<16x16xbf16>
    %69 = vector.extract_strided_slice %13 {offsets = [0, 64], sizes = [16, 32], strides = [1, 1]} : vector<16x128xf32> to vector<16x32xf32>
    %70 = arith.truncf %69 : vector<16x32xf32> to vector<16x32xbf16>
    %71 = vector.extract_strided_slice %15 {offsets = [0, 64], sizes = [16, 32], strides = [1, 1]} : vector<16x128xbf16> to vector<16x32xbf16>
    %cst_25 = arith.constant dense<0.000000e+00> : vector<16x16xf32>
    %72 = tpu.matmul %70, %71, %cst_25 {dimension_numbers = #tpu.dot_dimension_numbers<[1], [1], [0], [0], [0, 0, 1, 0], [], []>} : vector<16x32xbf16>, vector<16x32xbf16>, vector<16x16xf32> -> vector<16x16xf32>
    %cst_26 = arith.constant -1.000000e+30 : f32
    %73 = vector.broadcast %cst_26 : f32 to vector<16x16xf32>
    %74 = arith.select %26, %72, %73 : vector<16x16xi1>, vector<16x16xf32>
    %cst_27 = arith.constant dense<0xFF800000> : vector<16xf32>
    %75 = vector.multi_reduction <maximumf>, %74, %cst_27 [1] : vector<16x16xf32> to vector<16xf32>
    %76 = vector.shape_cast %75 : vector<16xf32> to vector<16x1xf32>
    %77 = vector.broadcast %76 : vector<16x1xf32> to vector<16x16xf32>
    %78 = arith.subf %74, %77 : vector<16x16xf32>
    %79 = math.exp %78 : vector<16x16xf32>
    %cst_28 = arith.constant 0.000000e+00 : f32
    %80 = vector.broadcast %cst_28 : f32 to vector<16x16xf32>
    %81 = arith.select %26, %79, %80 : vector<16x16xi1>, vector<16x16xf32>
    %cst_29 = arith.constant dense<0.000000e+00> : vector<16xf32>
    %82 = vector.multi_reduction <add>, %81, %cst_29 [1] : vector<16x16xf32> to vector<16xf32>
    %83 = vector.shape_cast %82 : vector<16xf32> to vector<16x1xf32>
    %cst_30 = arith.constant 1.000000e-16 : f32
    %84 = vector.broadcast %cst_30 : f32 to vector<16x1xf32>
    %85 = arith.maximumf %83, %84 : vector<16x1xf32>
    %86 = tpu.reciprocal %85 {approx = true} : vector<16x1xf32> -> vector<16x1xf32>
    %87 = vector.broadcast %86 : vector<16x1xf32> to vector<16x16xf32>
    %88 = arith.mulf %81, %87 : vector<16x16xf32>
    %89 = arith.truncf %88 : vector<16x16xf32> to vector<16x16xbf16>
    %90 = vector.extract_strided_slice %13 {offsets = [0, 96], sizes = [16, 32], strides = [1, 1]} : vector<16x128xf32> to vector<16x32xf32>
    %91 = arith.truncf %90 : vector<16x32xf32> to vector<16x32xbf16>
    %92 = vector.extract_strided_slice %15 {offsets = [0, 96], sizes = [16, 32], strides = [1, 1]} : vector<16x128xbf16> to vector<16x32xbf16>
    %cst_31 = arith.constant dense<0.000000e+00> : vector<16x16xf32>
    %93 = tpu.matmul %91, %92, %cst_31 {dimension_numbers = #tpu.dot_dimension_numbers<[1], [1], [0], [0], [0, 0, 1, 0], [], []>} : vector<16x32xbf16>, vector<16x32xbf16>, vector<16x16xf32> -> vector<16x16xf32>
    %cst_32 = arith.constant -1.000000e+30 : f32
    %94 = vector.broadcast %cst_32 : f32 to vector<16x16xf32>
    %95 = arith.select %26, %93, %94 : vector<16x16xi1>, vector<16x16xf32>
    %cst_33 = arith.constant dense<0xFF800000> : vector<16xf32>
    %96 = vector.multi_reduction <maximumf>, %95, %cst_33 [1] : vector<16x16xf32> to vector<16xf32>
    %97 = vector.shape_cast %96 : vector<16xf32> to vector<16x1xf32>
    %98 = vector.broadcast %97 : vector<16x1xf32> to vector<16x16xf32>
    %99 = arith.subf %95, %98 : vector<16x16xf32>
    %100 = math.exp %99 : vector<16x16xf32>
    %cst_34 = arith.constant 0.000000e+00 : f32
    %101 = vector.broadcast %cst_34 : f32 to vector<16x16xf32>
    %102 = arith.select %26, %100, %101 : vector<16x16xi1>, vector<16x16xf32>
    %cst_35 = arith.constant dense<0.000000e+00> : vector<16xf32>
    %103 = vector.multi_reduction <add>, %102, %cst_35 [1] : vector<16x16xf32> to vector<16xf32>
    %104 = vector.shape_cast %103 : vector<16xf32> to vector<16x1xf32>
    %cst_36 = arith.constant 1.000000e-16 : f32
    %105 = vector.broadcast %cst_36 : f32 to vector<16x1xf32>
    %106 = arith.maximumf %104, %105 : vector<16x1xf32>
    %107 = tpu.reciprocal %106 {approx = true} : vector<16x1xf32> -> vector<16x1xf32>
    %108 = vector.broadcast %107 : vector<16x1xf32> to vector<16x16xf32>
    %109 = arith.mulf %102, %108 : vector<16x16xf32>
    %110 = arith.truncf %109 : vector<16x16xf32> to vector<16x16xbf16>
    %111 = tpu.concatenate %47, %68, %89, %110 in 1 : vector<16x16xbf16>, vector<16x16xbf16>, vector<16x16xbf16>, vector<16x16xbf16> -> vector<16x64xbf16>
    %cst_37 = arith.constant dense<0.000000e+00> : vector<16x32xf32>
    %112 = tpu.matmul %111, %23, %cst_37 {dimension_numbers = #tpu.dot_dimension_numbers<[1], [0], [0], [1], [0, 0, 1, 1], [], []>} : vector<16x64xbf16>, vector<64x32xbf16>, vector<16x32xf32> -> vector<16x32xf32>
    %cst_38 = arith.constant 2.500000e-01 : f32
    %113 = vector.broadcast %cst_38 : f32 to vector<16x32xf32>
    %114 = arith.mulf %112, %113 : vector<16x32xf32>
    %115 = vector.extract_strided_slice %8 {offsets = [0, 0], sizes = [1, 32], strides = [1, 1]} : vector<1x512xf32> to vector<1x32xf32>
    %116 = vector.extract_strided_slice %8 {offsets = [0, 32], sizes = [1, 32], strides = [1, 1]} : vector<1x512xf32> to vector<1x32xf32>
    %117 = vector.extract_strided_slice %8 {offsets = [0, 64], sizes = [1, 32], strides = [1, 1]} : vector<1x512xf32> to vector<1x32xf32>
    %118 = vector.extract_strided_slice %8 {offsets = [0, 96], sizes = [1, 32], strides = [1, 1]} : vector<1x512xf32> to vector<1x32xf32>
    %119 = vector.broadcast %115 : vector<1x32xf32> to vector<16x32xf32>
    %120 = arith.mulf %114, %119 : vector<16x32xf32>
    %121 = vector.broadcast %116 : vector<1x32xf32> to vector<16x32xf32>
    %122 = arith.mulf %17, %121 : vector<16x32xf32>
    %123 = arith.addf %120, %122 : vector<16x32xf32>
    %cst_39 = arith.constant dense<0.000000e+00> : vector<16xf32>
    %124 = vector.multi_reduction <add>, %123, %cst_39 [1] : vector<16x32xf32> to vector<16xf32>
    %125 = vector.shape_cast %124 : vector<16xf32> to vector<16x1xf32>
    %126 = arith.negf %125 : vector<16x1xf32>
    %127 = math.exp %126 : vector<16x1xf32>
    %cst_40 = arith.constant 1.000000e+00 : f32
    %128 = vector.broadcast %cst_40 : f32 to vector<16x1xf32>
    %129 = arith.addf %128, %127 : vector<16x1xf32>
    %130 = arith.divf %128, %129 : vector<16x1xf32>
    %131 = vector.broadcast %130 : vector<16x1xf32> to vector<16x32xf32>
    %132 = arith.mulf %131, %17 : vector<16x32xf32>
    %cst_41 = arith.constant 1.000000e+00 : f32
    %133 = vector.broadcast %cst_41 : f32 to vector<16x1xf32>
    %134 = arith.subf %133, %130 : vector<16x1xf32>
    %135 = vector.broadcast %134 : vector<16x1xf32> to vector<16x32xf32>
    %136 = arith.mulf %135, %114 : vector<16x32xf32>
    %137 = arith.addf %132, %136 : vector<16x32xf32>
    %cst_42 = arith.constant dense<0.000000e+00> : vector<16xf32>
    %138 = vector.multi_reduction <add>, %137, %cst_42 [1] : vector<16x32xf32> to vector<16xf32>
    %139 = vector.shape_cast %138 : vector<16xf32> to vector<16x1xf32>
    %cst_43 = arith.constant 3.200000e+01 : f32
    %140 = vector.broadcast %cst_43 : f32 to vector<16x1xf32>
    %141 = arith.divf %139, %140 : vector<16x1xf32>
    %142 = vector.broadcast %141 : vector<16x1xf32> to vector<16x32xf32>
    %143 = arith.subf %137, %142 : vector<16x32xf32>
    %144 = vector.broadcast %141 : vector<16x1xf32> to vector<16x32xf32>
    %145 = arith.subf %137, %144 : vector<16x32xf32>
    %146 = arith.mulf %143, %145 : vector<16x32xf32>
    %cst_44 = arith.constant dense<0.000000e+00> : vector<16xf32>
    %147 = vector.multi_reduction <add>, %146, %cst_44 [1] : vector<16x32xf32> to vector<16xf32>
    %148 = vector.shape_cast %147 : vector<16xf32> to vector<16x1xf32>
    %cst_45 = arith.constant 3.200000e+01 : f32
    %149 = vector.broadcast %cst_45 : f32 to vector<16x1xf32>
    %150 = arith.divf %148, %149 : vector<16x1xf32>
    %151 = vector.broadcast %141 : vector<16x1xf32> to vector<16x32xf32>
    %152 = arith.subf %137, %151 : vector<16x32xf32>
    %cst_46 = arith.constant 9.99999974E-6 : f32
    %153 = vector.broadcast %cst_46 : f32 to vector<16x1xf32>
    %154 = arith.addf %150, %153 : vector<16x1xf32>
    %155 = math.rsqrt %154 : vector<16x1xf32>
    %156 = vector.broadcast %155 : vector<16x1xf32> to vector<16x32xf32>
    %157 = arith.mulf %152, %156 : vector<16x32xf32>
    %158 = vector.broadcast %117 : vector<1x32xf32> to vector<16x32xf32>
    %159 = arith.mulf %157, %158 : vector<16x32xf32>
    %160 = vector.broadcast %118 : vector<1x32xf32> to vector<16x32xf32>
    %161 = arith.addf %159, %160 : vector<16x32xf32>
    %cst_47 = arith.constant 0.000000e+00 : f32
    %162 = vector.broadcast %cst_47 : f32 to vector<16x32xf32>
    %163 = arith.maximumf %161, %162 : vector<16x32xf32>
    %c1 = arith.constant 1 : index
    %c0_48 = arith.constant 0 : index
    %c0_49 = arith.constant 0 : index
    %164 = vector.load %arg4[%c1, %c0_48, %c0_49] : memref<4x32x512xbf16, #tpu.memory_space<vmem>>, vector<1x32x512xbf16>
    %165 = vector.shape_cast %164 : vector<1x32x512xbf16> to vector<32x512xbf16>
    %c1_50 = arith.constant 1 : index
    %c0_51 = arith.constant 0 : index
    %c0_52 = arith.constant 0 : index
    %166 = vector.load %arg5[%c1_50, %c0_51, %c0_52] : memref<4x2x512xf32, #tpu.memory_space<vmem>>, vector<1x2x512xf32>
    %167 = vector.shape_cast %166 : vector<1x2x512xf32> to vector<2x512xf32>
    %168 = vector.extract_strided_slice %167 {offsets = [0, 0], sizes = [1, 512], strides = [1, 1]} : vector<2x512xf32> to vector<1x512xf32>
    %169 = vector.extract_strided_slice %167 {offsets = [1, 0], sizes = [1, 512], strides = [1, 1]} : vector<2x512xf32> to vector<1x512xf32>
    %170 = arith.truncf %163 : vector<16x32xf32> to vector<16x32xbf16>
    %cst_53 = arith.constant dense<0.000000e+00> : vector<16x512xf32>
    %171 = tpu.matmul %170, %165, %cst_53 {dimension_numbers = #tpu.dot_dimension_numbers<[1], [0], [0], [1], [0, 0, 1, 1], [], []>} : vector<16x32xbf16>, vector<32x512xbf16>, vector<16x512xf32> -> vector<16x512xf32>
    %172 = vector.broadcast %168 : vector<1x512xf32> to vector<16x512xf32>
    %173 = arith.addf %171, %172 : vector<16x512xf32>
    %174 = vector.extract_strided_slice %173 {offsets = [0, 0], sizes = [16, 128], strides = [1, 1]} : vector<16x512xf32> to vector<16x128xf32>
    %175 = vector.extract_strided_slice %173 {offsets = [0, 128], sizes = [16, 128], strides = [1, 1]} : vector<16x512xf32> to vector<16x128xf32>
    %176 = arith.truncf %175 : vector<16x128xf32> to vector<16x128xbf16>
    %177 = vector.extract_strided_slice %173 {offsets = [0, 256], sizes = [16, 128], strides = [1, 1]} : vector<16x512xf32> to vector<16x128xf32>
    %178 = vector.extract_strided_slice %173 {offsets = [0, 384], sizes = [16, 32], strides = [1, 1]} : vector<16x512xf32> to vector<16x32xf32>
    %179 = vector.extract_strided_slice %177 {offsets = [0, 0], sizes = [16, 32], strides = [1, 1]} : vector<16x128xf32> to vector<16x32xf32>
    %180 = vector.extract_strided_slice %177 {offsets = [0, 32], sizes = [16, 32], strides = [1, 1]} : vector<16x128xf32> to vector<16x32xf32>
    %181 = vector.extract_strided_slice %177 {offsets = [0, 64], sizes = [16, 32], strides = [1, 1]} : vector<16x128xf32> to vector<16x32xf32>
    %182 = vector.extract_strided_slice %177 {offsets = [0, 96], sizes = [16, 32], strides = [1, 1]} : vector<16x128xf32> to vector<16x32xf32>
    %183 = tpu.concatenate %179, %180, %181, %182 in 0 : vector<16x32xf32>, vector<16x32xf32>, vector<16x32xf32>, vector<16x32xf32> -> vector<64x32xf32>
    %184 = arith.truncf %183 : vector<64x32xf32> to vector<64x32xbf16>
    %c0_54 = arith.constant 0 : index
    %c0_55 = arith.constant 0 : index
    %185 = vector.load %arg1[%c0_54, %c0_55] : memref<16x16xbf16, #tpu.memory_space<vmem>>, vector<16x16xbf16>
    %cst_56 = arith.constant 0.000000e+00 : bf16
    %186 = vector.broadcast %cst_56 : bf16 to vector<16x16xbf16>
    %187 = arith.cmpf one, %185, %186 : vector<16x16xbf16>
    %188 = vector.extract_strided_slice %174 {offsets = [0, 0], sizes = [16, 32], strides = [1, 1]} : vector<16x128xf32> to vector<16x32xf32>
    %189 = arith.truncf %188 : vector<16x32xf32> to vector<16x32xbf16>
    %190 = vector.extract_strided_slice %176 {offsets = [0, 0], sizes = [16, 32], strides = [1, 1]} : vector<16x128xbf16> to vector<16x32xbf16>
    %cst_57 = arith.constant dense<0.000000e+00> : vector<16x16xf32>
    %191 = tpu.matmul %189, %190, %cst_57 {dimension_numbers = #tpu.dot_dimension_numbers<[1], [1], [0], [0], [0, 0, 1, 0], [], []>} : vector<16x32xbf16>, vector<16x32xbf16>, vector<16x16xf32> -> vector<16x16xf32>
    %cst_58 = arith.constant -1.000000e+30 : f32
    %192 = vector.broadcast %cst_58 : f32 to vector<16x16xf32>
    %193 = arith.select %187, %191, %192 : vector<16x16xi1>, vector<16x16xf32>
    %cst_59 = arith.constant dense<0xFF800000> : vector<16xf32>
    %194 = vector.multi_reduction <maximumf>, %193, %cst_59 [1] : vector<16x16xf32> to vector<16xf32>
    %195 = vector.shape_cast %194 : vector<16xf32> to vector<16x1xf32>
    %196 = vector.broadcast %195 : vector<16x1xf32> to vector<16x16xf32>
    %197 = arith.subf %193, %196 : vector<16x16xf32>
    %198 = math.exp %197 : vector<16x16xf32>
    %cst_60 = arith.constant 0.000000e+00 : f32
    %199 = vector.broadcast %cst_60 : f32 to vector<16x16xf32>
    %200 = arith.select %187, %198, %199 : vector<16x16xi1>, vector<16x16xf32>
    %cst_61 = arith.constant dense<0.000000e+00> : vector<16xf32>
    %201 = vector.multi_reduction <add>, %200, %cst_61 [1] : vector<16x16xf32> to vector<16xf32>
    %202 = vector.shape_cast %201 : vector<16xf32> to vector<16x1xf32>
    %cst_62 = arith.constant 1.000000e-16 : f32
    %203 = vector.broadcast %cst_62 : f32 to vector<16x1xf32>
    %204 = arith.maximumf %202, %203 : vector<16x1xf32>
    %205 = tpu.reciprocal %204 {approx = true} : vector<16x1xf32> -> vector<16x1xf32>
    %206 = vector.broadcast %205 : vector<16x1xf32> to vector<16x16xf32>
    %207 = arith.mulf %200, %206 : vector<16x16xf32>
    %208 = arith.truncf %207 : vector<16x16xf32> to vector<16x16xbf16>
    %209 = vector.extract_strided_slice %174 {offsets = [0, 32], sizes = [16, 32], strides = [1, 1]} : vector<16x128xf32> to vector<16x32xf32>
    %210 = arith.truncf %209 : vector<16x32xf32> to vector<16x32xbf16>
    %211 = vector.extract_strided_slice %176 {offsets = [0, 32], sizes = [16, 32], strides = [1, 1]} : vector<16x128xbf16> to vector<16x32xbf16>
    %cst_63 = arith.constant dense<0.000000e+00> : vector<16x16xf32>
    %212 = tpu.matmul %210, %211, %cst_63 {dimension_numbers = #tpu.dot_dimension_numbers<[1], [1], [0], [0], [0, 0, 1, 0], [], []>} : vector<16x32xbf16>, vector<16x32xbf16>, vector<16x16xf32> -> vector<16x16xf32>
    %cst_64 = arith.constant -1.000000e+30 : f32
    %213 = vector.broadcast %cst_64 : f32 to vector<16x16xf32>
    %214 = arith.select %187, %212, %213 : vector<16x16xi1>, vector<16x16xf32>
    %cst_65 = arith.constant dense<0xFF800000> : vector<16xf32>
    %215 = vector.multi_reduction <maximumf>, %214, %cst_65 [1] : vector<16x16xf32> to vector<16xf32>
    %216 = vector.shape_cast %215 : vector<16xf32> to vector<16x1xf32>
    %217 = vector.broadcast %216 : vector<16x1xf32> to vector<16x16xf32>
    %218 = arith.subf %214, %217 : vector<16x16xf32>
    %219 = math.exp %218 : vector<16x16xf32>
    %cst_66 = arith.constant 0.000000e+00 : f32
    %220 = vector.broadcast %cst_66 : f32 to vector<16x16xf32>
    %221 = arith.select %187, %219, %220 : vector<16x16xi1>, vector<16x16xf32>
    %cst_67 = arith.constant dense<0.000000e+00> : vector<16xf32>
    %222 = vector.multi_reduction <add>, %221, %cst_67 [1] : vector<16x16xf32> to vector<16xf32>
    %223 = vector.shape_cast %222 : vector<16xf32> to vector<16x1xf32>
    %cst_68 = arith.constant 1.000000e-16 : f32
    %224 = vector.broadcast %cst_68 : f32 to vector<16x1xf32>
    %225 = arith.maximumf %223, %224 : vector<16x1xf32>
    %226 = tpu.reciprocal %225 {approx = true} : vector<16x1xf32> -> vector<16x1xf32>
    %227 = vector.broadcast %226 : vector<16x1xf32> to vector<16x16xf32>
    %228 = arith.mulf %221, %227 : vector<16x16xf32>
    %229 = arith.truncf %228 : vector<16x16xf32> to vector<16x16xbf16>
    %230 = vector.extract_strided_slice %174 {offsets = [0, 64], sizes = [16, 32], strides = [1, 1]} : vector<16x128xf32> to vector<16x32xf32>
    %231 = arith.truncf %230 : vector<16x32xf32> to vector<16x32xbf16>
    %232 = vector.extract_strided_slice %176 {offsets = [0, 64], sizes = [16, 32], strides = [1, 1]} : vector<16x128xbf16> to vector<16x32xbf16>
    %cst_69 = arith.constant dense<0.000000e+00> : vector<16x16xf32>
    %233 = tpu.matmul %231, %232, %cst_69 {dimension_numbers = #tpu.dot_dimension_numbers<[1], [1], [0], [0], [0, 0, 1, 0], [], []>} : vector<16x32xbf16>, vector<16x32xbf16>, vector<16x16xf32> -> vector<16x16xf32>
    %cst_70 = arith.constant -1.000000e+30 : f32
    %234 = vector.broadcast %cst_70 : f32 to vector<16x16xf32>
    %235 = arith.select %187, %233, %234 : vector<16x16xi1>, vector<16x16xf32>
    %cst_71 = arith.constant dense<0xFF800000> : vector<16xf32>
    %236 = vector.multi_reduction <maximumf>, %235, %cst_71 [1] : vector<16x16xf32> to vector<16xf32>
    %237 = vector.shape_cast %236 : vector<16xf32> to vector<16x1xf32>
    %238 = vector.broadcast %237 : vector<16x1xf32> to vector<16x16xf32>
    %239 = arith.subf %235, %238 : vector<16x16xf32>
    %240 = math.exp %239 : vector<16x16xf32>
    %cst_72 = arith.constant 0.000000e+00 : f32
    %241 = vector.broadcast %cst_72 : f32 to vector<16x16xf32>
    %242 = arith.select %187, %240, %241 : vector<16x16xi1>, vector<16x16xf32>
    %cst_73 = arith.constant dense<0.000000e+00> : vector<16xf32>
    %243 = vector.multi_reduction <add>, %242, %cst_73 [1] : vector<16x16xf32> to vector<16xf32>
    %244 = vector.shape_cast %243 : vector<16xf32> to vector<16x1xf32>
    %cst_74 = arith.constant 1.000000e-16 : f32
    %245 = vector.broadcast %cst_74 : f32 to vector<16x1xf32>
    %246 = arith.maximumf %244, %245 : vector<16x1xf32>
    %247 = tpu.reciprocal %246 {approx = true} : vector<16x1xf32> -> vector<16x1xf32>
    %248 = vector.broadcast %247 : vector<16x1xf32> to vector<16x16xf32>
    %249 = arith.mulf %242, %248 : vector<16x16xf32>
    %250 = arith.truncf %249 : vector<16x16xf32> to vector<16x16xbf16>
    %251 = vector.extract_strided_slice %174 {offsets = [0, 96], sizes = [16, 32], strides = [1, 1]} : vector<16x128xf32> to vector<16x32xf32>
    %252 = arith.truncf %251 : vector<16x32xf32> to vector<16x32xbf16>
    %253 = vector.extract_strided_slice %176 {offsets = [0, 96], sizes = [16, 32], strides = [1, 1]} : vector<16x128xbf16> to vector<16x32xbf16>
    %cst_75 = arith.constant dense<0.000000e+00> : vector<16x16xf32>
    %254 = tpu.matmul %252, %253, %cst_75 {dimension_numbers = #tpu.dot_dimension_numbers<[1], [1], [0], [0], [0, 0, 1, 0], [], []>} : vector<16x32xbf16>, vector<16x32xbf16>, vector<16x16xf32> -> vector<16x16xf32>
    %cst_76 = arith.constant -1.000000e+30 : f32
    %255 = vector.broadcast %cst_76 : f32 to vector<16x16xf32>
    %256 = arith.select %187, %254, %255 : vector<16x16xi1>, vector<16x16xf32>
    %cst_77 = arith.constant dense<0xFF800000> : vector<16xf32>
    %257 = vector.multi_reduction <maximumf>, %256, %cst_77 [1] : vector<16x16xf32> to vector<16xf32>
    %258 = vector.shape_cast %257 : vector<16xf32> to vector<16x1xf32>
    %259 = vector.broadcast %258 : vector<16x1xf32> to vector<16x16xf32>
    %260 = arith.subf %256, %259 : vector<16x16xf32>
    %261 = math.exp %260 : vector<16x16xf32>
    %cst_78 = arith.constant 0.000000e+00 : f32
    %262 = vector.broadcast %cst_78 : f32 to vector<16x16xf32>
    %263 = arith.select %187, %261, %262 : vector<16x16xi1>, vector<16x16xf32>
    %cst_79 = arith.constant dense<0.000000e+00> : vector<16xf32>
    %264 = vector.multi_reduction <add>, %263, %cst_79 [1] : vector<16x16xf32> to vector<16xf32>
    %265 = vector.shape_cast %264 : vector<16xf32> to vector<16x1xf32>
    %cst_80 = arith.constant 1.000000e-16 : f32
    %266 = vector.broadcast %cst_80 : f32 to vector<16x1xf32>
    %267 = arith.maximumf %265, %266 : vector<16x1xf32>
    %268 = tpu.reciprocal %267 {approx = true} : vector<16x1xf32> -> vector<16x1xf32>
    %269 = vector.broadcast %268 : vector<16x1xf32> to vector<16x16xf32>
    %270 = arith.mulf %263, %269 : vector<16x16xf32>
    %271 = arith.truncf %270 : vector<16x16xf32> to vector<16x16xbf16>
    %272 = tpu.concatenate %208, %229, %250, %271 in 1 : vector<16x16xbf16>, vector<16x16xbf16>, vector<16x16xbf16>, vector<16x16xbf16> -> vector<16x64xbf16>
    %cst_81 = arith.constant dense<0.000000e+00> : vector<16x32xf32>
    %273 = tpu.matmul %272, %184, %cst_81 {dimension_numbers = #tpu.dot_dimension_numbers<[1], [0], [0], [1], [0, 0, 1, 1], [], []>} : vector<16x64xbf16>, vector<64x32xbf16>, vector<16x32xf32> -> vector<16x32xf32>
    %cst_82 = arith.constant 2.500000e-01 : f32
    %274 = vector.broadcast %cst_82 : f32 to vector<16x32xf32>
    %275 = arith.mulf %273, %274 : vector<16x32xf32>
    %276 = vector.extract_strided_slice %169 {offsets = [0, 0], sizes = [1, 32], strides = [1, 1]} : vector<1x512xf32> to vector<1x32xf32>
    %277 = vector.extract_strided_slice %169 {offsets = [0, 32], sizes = [1, 32], strides = [1, 1]} : vector<1x512xf32> to vector<1x32xf32>
    %278 = vector.extract_strided_slice %169 {offsets = [0, 64], sizes = [1, 32], strides = [1, 1]} : vector<1x512xf32> to vector<1x32xf32>
    %279 = vector.extract_strided_slice %169 {offsets = [0, 96], sizes = [1, 32], strides = [1, 1]} : vector<1x512xf32> to vector<1x32xf32>
    %280 = vector.broadcast %276 : vector<1x32xf32> to vector<16x32xf32>
    %281 = arith.mulf %275, %280 : vector<16x32xf32>
    %282 = vector.broadcast %277 : vector<1x32xf32> to vector<16x32xf32>
    %283 = arith.mulf %178, %282 : vector<16x32xf32>
    %284 = arith.addf %281, %283 : vector<16x32xf32>
    %cst_83 = arith.constant dense<0.000000e+00> : vector<16xf32>
    %285 = vector.multi_reduction <add>, %284, %cst_83 [1] : vector<16x32xf32> to vector<16xf32>
    %286 = vector.shape_cast %285 : vector<16xf32> to vector<16x1xf32>
    %287 = arith.negf %286 : vector<16x1xf32>
    %288 = math.exp %287 : vector<16x1xf32>
    %cst_84 = arith.constant 1.000000e+00 : f32
    %289 = vector.broadcast %cst_84 : f32 to vector<16x1xf32>
    %290 = arith.addf %289, %288 : vector<16x1xf32>
    %291 = arith.divf %289, %290 : vector<16x1xf32>
    %292 = vector.broadcast %291 : vector<16x1xf32> to vector<16x32xf32>
    %293 = arith.mulf %292, %178 : vector<16x32xf32>
    %cst_85 = arith.constant 1.000000e+00 : f32
    %294 = vector.broadcast %cst_85 : f32 to vector<16x1xf32>
    %295 = arith.subf %294, %291 : vector<16x1xf32>
    %296 = vector.broadcast %295 : vector<16x1xf32> to vector<16x32xf32>
    %297 = arith.mulf %296, %275 : vector<16x32xf32>
    %298 = arith.addf %293, %297 : vector<16x32xf32>
    %cst_86 = arith.constant dense<0.000000e+00> : vector<16xf32>
    %299 = vector.multi_reduction <add>, %298, %cst_86 [1] : vector<16x32xf32> to vector<16xf32>
    %300 = vector.shape_cast %299 : vector<16xf32> to vector<16x1xf32>
    %cst_87 = arith.constant 3.200000e+01 : f32
    %301 = vector.broadcast %cst_87 : f32 to vector<16x1xf32>
    %302 = arith.divf %300, %301 : vector<16x1xf32>
    %303 = vector.broadcast %302 : vector<16x1xf32> to vector<16x32xf32>
    %304 = arith.subf %298, %303 : vector<16x32xf32>
    %305 = vector.broadcast %302 : vector<16x1xf32> to vector<16x32xf32>
    %306 = arith.subf %298, %305 : vector<16x32xf32>
    %307 = arith.mulf %304, %306 : vector<16x32xf32>
    %cst_88 = arith.constant dense<0.000000e+00> : vector<16xf32>
    %308 = vector.multi_reduction <add>, %307, %cst_88 [1] : vector<16x32xf32> to vector<16xf32>
    %309 = vector.shape_cast %308 : vector<16xf32> to vector<16x1xf32>
    %cst_89 = arith.constant 3.200000e+01 : f32
    %310 = vector.broadcast %cst_89 : f32 to vector<16x1xf32>
    %311 = arith.divf %309, %310 : vector<16x1xf32>
    %312 = vector.broadcast %302 : vector<16x1xf32> to vector<16x32xf32>
    %313 = arith.subf %298, %312 : vector<16x32xf32>
    %cst_90 = arith.constant 9.99999974E-6 : f32
    %314 = vector.broadcast %cst_90 : f32 to vector<16x1xf32>
    %315 = arith.addf %311, %314 : vector<16x1xf32>
    %316 = math.rsqrt %315 : vector<16x1xf32>
    %317 = vector.broadcast %316 : vector<16x1xf32> to vector<16x32xf32>
    %318 = arith.mulf %313, %317 : vector<16x32xf32>
    %319 = vector.broadcast %278 : vector<1x32xf32> to vector<16x32xf32>
    %320 = arith.mulf %318, %319 : vector<16x32xf32>
    %321 = vector.broadcast %279 : vector<1x32xf32> to vector<16x32xf32>
    %322 = arith.addf %320, %321 : vector<16x32xf32>
    %cst_91 = arith.constant 0.000000e+00 : f32
    %323 = vector.broadcast %cst_91 : f32 to vector<16x32xf32>
    %324 = arith.maximumf %322, %323 : vector<16x32xf32>
    %c2 = arith.constant 2 : index
    %c0_92 = arith.constant 0 : index
    %c0_93 = arith.constant 0 : index
    %325 = vector.load %arg4[%c2, %c0_92, %c0_93] : memref<4x32x512xbf16, #tpu.memory_space<vmem>>, vector<1x32x512xbf16>
    %326 = vector.shape_cast %325 : vector<1x32x512xbf16> to vector<32x512xbf16>
    %c2_94 = arith.constant 2 : index
    %c0_95 = arith.constant 0 : index
    %c0_96 = arith.constant 0 : index
    %327 = vector.load %arg5[%c2_94, %c0_95, %c0_96] : memref<4x2x512xf32, #tpu.memory_space<vmem>>, vector<1x2x512xf32>
    %328 = vector.shape_cast %327 : vector<1x2x512xf32> to vector<2x512xf32>
    %329 = vector.extract_strided_slice %328 {offsets = [0, 0], sizes = [1, 512], strides = [1, 1]} : vector<2x512xf32> to vector<1x512xf32>
    %330 = vector.extract_strided_slice %328 {offsets = [1, 0], sizes = [1, 512], strides = [1, 1]} : vector<2x512xf32> to vector<1x512xf32>
    %331 = arith.truncf %324 : vector<16x32xf32> to vector<16x32xbf16>
    %cst_97 = arith.constant dense<0.000000e+00> : vector<16x512xf32>
    %332 = tpu.matmul %331, %326, %cst_97 {dimension_numbers = #tpu.dot_dimension_numbers<[1], [0], [0], [1], [0, 0, 1, 1], [], []>} : vector<16x32xbf16>, vector<32x512xbf16>, vector<16x512xf32> -> vector<16x512xf32>
    %333 = vector.broadcast %329 : vector<1x512xf32> to vector<16x512xf32>
    %334 = arith.addf %332, %333 : vector<16x512xf32>
    %335 = vector.extract_strided_slice %334 {offsets = [0, 0], sizes = [16, 128], strides = [1, 1]} : vector<16x512xf32> to vector<16x128xf32>
    %336 = vector.extract_strided_slice %334 {offsets = [0, 128], sizes = [16, 128], strides = [1, 1]} : vector<16x512xf32> to vector<16x128xf32>
    %337 = arith.truncf %336 : vector<16x128xf32> to vector<16x128xbf16>
    %338 = vector.extract_strided_slice %334 {offsets = [0, 256], sizes = [16, 128], strides = [1, 1]} : vector<16x512xf32> to vector<16x128xf32>
    %339 = vector.extract_strided_slice %334 {offsets = [0, 384], sizes = [16, 32], strides = [1, 1]} : vector<16x512xf32> to vector<16x32xf32>
    %340 = vector.extract_strided_slice %338 {offsets = [0, 0], sizes = [16, 32], strides = [1, 1]} : vector<16x128xf32> to vector<16x32xf32>
    %341 = vector.extract_strided_slice %338 {offsets = [0, 32], sizes = [16, 32], strides = [1, 1]} : vector<16x128xf32> to vector<16x32xf32>
    %342 = vector.extract_strided_slice %338 {offsets = [0, 64], sizes = [16, 32], strides = [1, 1]} : vector<16x128xf32> to vector<16x32xf32>
    %343 = vector.extract_strided_slice %338 {offsets = [0, 96], sizes = [16, 32], strides = [1, 1]} : vector<16x128xf32> to vector<16x32xf32>
    %344 = tpu.concatenate %340, %341, %342, %343 in 0 : vector<16x32xf32>, vector<16x32xf32>, vector<16x32xf32>, vector<16x32xf32> -> vector<64x32xf32>
    %345 = arith.truncf %344 : vector<64x32xf32> to vector<64x32xbf16>
    %c0_98 = arith.constant 0 : index
    %c0_99 = arith.constant 0 : index
    %346 = vector.load %arg1[%c0_98, %c0_99] : memref<16x16xbf16, #tpu.memory_space<vmem>>, vector<16x16xbf16>
    %cst_100 = arith.constant 0.000000e+00 : bf16
    %347 = vector.broadcast %cst_100 : bf16 to vector<16x16xbf16>
    %348 = arith.cmpf one, %346, %347 : vector<16x16xbf16>
    %349 = vector.extract_strided_slice %335 {offsets = [0, 0], sizes = [16, 32], strides = [1, 1]} : vector<16x128xf32> to vector<16x32xf32>
    %350 = arith.truncf %349 : vector<16x32xf32> to vector<16x32xbf16>
    %351 = vector.extract_strided_slice %337 {offsets = [0, 0], sizes = [16, 32], strides = [1, 1]} : vector<16x128xbf16> to vector<16x32xbf16>
    %cst_101 = arith.constant dense<0.000000e+00> : vector<16x16xf32>
    %352 = tpu.matmul %350, %351, %cst_101 {dimension_numbers = #tpu.dot_dimension_numbers<[1], [1], [0], [0], [0, 0, 1, 0], [], []>} : vector<16x32xbf16>, vector<16x32xbf16>, vector<16x16xf32> -> vector<16x16xf32>
    %cst_102 = arith.constant -1.000000e+30 : f32
    %353 = vector.broadcast %cst_102 : f32 to vector<16x16xf32>
    %354 = arith.select %348, %352, %353 : vector<16x16xi1>, vector<16x16xf32>
    %cst_103 = arith.constant dense<0xFF800000> : vector<16xf32>
    %355 = vector.multi_reduction <maximumf>, %354, %cst_103 [1] : vector<16x16xf32> to vector<16xf32>
    %356 = vector.shape_cast %355 : vector<16xf32> to vector<16x1xf32>
    %357 = vector.broadcast %356 : vector<16x1xf32> to vector<16x16xf32>
    %358 = arith.subf %354, %357 : vector<16x16xf32>
    %359 = math.exp %358 : vector<16x16xf32>
    %cst_104 = arith.constant 0.000000e+00 : f32
    %360 = vector.broadcast %cst_104 : f32 to vector<16x16xf32>
    %361 = arith.select %348, %359, %360 : vector<16x16xi1>, vector<16x16xf32>
    %cst_105 = arith.constant dense<0.000000e+00> : vector<16xf32>
    %362 = vector.multi_reduction <add>, %361, %cst_105 [1] : vector<16x16xf32> to vector<16xf32>
    %363 = vector.shape_cast %362 : vector<16xf32> to vector<16x1xf32>
    %cst_106 = arith.constant 1.000000e-16 : f32
    %364 = vector.broadcast %cst_106 : f32 to vector<16x1xf32>
    %365 = arith.maximumf %363, %364 : vector<16x1xf32>
    %366 = tpu.reciprocal %365 {approx = true} : vector<16x1xf32> -> vector<16x1xf32>
    %367 = vector.broadcast %366 : vector<16x1xf32> to vector<16x16xf32>
    %368 = arith.mulf %361, %367 : vector<16x16xf32>
    %369 = arith.truncf %368 : vector<16x16xf32> to vector<16x16xbf16>
    %370 = vector.extract_strided_slice %335 {offsets = [0, 32], sizes = [16, 32], strides = [1, 1]} : vector<16x128xf32> to vector<16x32xf32>
    %371 = arith.truncf %370 : vector<16x32xf32> to vector<16x32xbf16>
    %372 = vector.extract_strided_slice %337 {offsets = [0, 32], sizes = [16, 32], strides = [1, 1]} : vector<16x128xbf16> to vector<16x32xbf16>
    %cst_107 = arith.constant dense<0.000000e+00> : vector<16x16xf32>
    %373 = tpu.matmul %371, %372, %cst_107 {dimension_numbers = #tpu.dot_dimension_numbers<[1], [1], [0], [0], [0, 0, 1, 0], [], []>} : vector<16x32xbf16>, vector<16x32xbf16>, vector<16x16xf32> -> vector<16x16xf32>
    %cst_108 = arith.constant -1.000000e+30 : f32
    %374 = vector.broadcast %cst_108 : f32 to vector<16x16xf32>
    %375 = arith.select %348, %373, %374 : vector<16x16xi1>, vector<16x16xf32>
    %cst_109 = arith.constant dense<0xFF800000> : vector<16xf32>
    %376 = vector.multi_reduction <maximumf>, %375, %cst_109 [1] : vector<16x16xf32> to vector<16xf32>
    %377 = vector.shape_cast %376 : vector<16xf32> to vector<16x1xf32>
    %378 = vector.broadcast %377 : vector<16x1xf32> to vector<16x16xf32>
    %379 = arith.subf %375, %378 : vector<16x16xf32>
    %380 = math.exp %379 : vector<16x16xf32>
    %cst_110 = arith.constant 0.000000e+00 : f32
    %381 = vector.broadcast %cst_110 : f32 to vector<16x16xf32>
    %382 = arith.select %348, %380, %381 : vector<16x16xi1>, vector<16x16xf32>
    %cst_111 = arith.constant dense<0.000000e+00> : vector<16xf32>
    %383 = vector.multi_reduction <add>, %382, %cst_111 [1] : vector<16x16xf32> to vector<16xf32>
    %384 = vector.shape_cast %383 : vector<16xf32> to vector<16x1xf32>
    %cst_112 = arith.constant 1.000000e-16 : f32
    %385 = vector.broadcast %cst_112 : f32 to vector<16x1xf32>
    %386 = arith.maximumf %384, %385 : vector<16x1xf32>
    %387 = tpu.reciprocal %386 {approx = true} : vector<16x1xf32> -> vector<16x1xf32>
    %388 = vector.broadcast %387 : vector<16x1xf32> to vector<16x16xf32>
    %389 = arith.mulf %382, %388 : vector<16x16xf32>
    %390 = arith.truncf %389 : vector<16x16xf32> to vector<16x16xbf16>
    %391 = vector.extract_strided_slice %335 {offsets = [0, 64], sizes = [16, 32], strides = [1, 1]} : vector<16x128xf32> to vector<16x32xf32>
    %392 = arith.truncf %391 : vector<16x32xf32> to vector<16x32xbf16>
    %393 = vector.extract_strided_slice %337 {offsets = [0, 64], sizes = [16, 32], strides = [1, 1]} : vector<16x128xbf16> to vector<16x32xbf16>
    %cst_113 = arith.constant dense<0.000000e+00> : vector<16x16xf32>
    %394 = tpu.matmul %392, %393, %cst_113 {dimension_numbers = #tpu.dot_dimension_numbers<[1], [1], [0], [0], [0, 0, 1, 0], [], []>} : vector<16x32xbf16>, vector<16x32xbf16>, vector<16x16xf32> -> vector<16x16xf32>
    %cst_114 = arith.constant -1.000000e+30 : f32
    %395 = vector.broadcast %cst_114 : f32 to vector<16x16xf32>
    %396 = arith.select %348, %394, %395 : vector<16x16xi1>, vector<16x16xf32>
    %cst_115 = arith.constant dense<0xFF800000> : vector<16xf32>
    %397 = vector.multi_reduction <maximumf>, %396, %cst_115 [1] : vector<16x16xf32> to vector<16xf32>
    %398 = vector.shape_cast %397 : vector<16xf32> to vector<16x1xf32>
    %399 = vector.broadcast %398 : vector<16x1xf32> to vector<16x16xf32>
    %400 = arith.subf %396, %399 : vector<16x16xf32>
    %401 = math.exp %400 : vector<16x16xf32>
    %cst_116 = arith.constant 0.000000e+00 : f32
    %402 = vector.broadcast %cst_116 : f32 to vector<16x16xf32>
    %403 = arith.select %348, %401, %402 : vector<16x16xi1>, vector<16x16xf32>
    %cst_117 = arith.constant dense<0.000000e+00> : vector<16xf32>
    %404 = vector.multi_reduction <add>, %403, %cst_117 [1] : vector<16x16xf32> to vector<16xf32>
    %405 = vector.shape_cast %404 : vector<16xf32> to vector<16x1xf32>
    %cst_118 = arith.constant 1.000000e-16 : f32
    %406 = vector.broadcast %cst_118 : f32 to vector<16x1xf32>
    %407 = arith.maximumf %405, %406 : vector<16x1xf32>
    %408 = tpu.reciprocal %407 {approx = true} : vector<16x1xf32> -> vector<16x1xf32>
    %409 = vector.broadcast %408 : vector<16x1xf32> to vector<16x16xf32>
    %410 = arith.mulf %403, %409 : vector<16x16xf32>
    %411 = arith.truncf %410 : vector<16x16xf32> to vector<16x16xbf16>
    %412 = vector.extract_strided_slice %335 {offsets = [0, 96], sizes = [16, 32], strides = [1, 1]} : vector<16x128xf32> to vector<16x32xf32>
    %413 = arith.truncf %412 : vector<16x32xf32> to vector<16x32xbf16>
    %414 = vector.extract_strided_slice %337 {offsets = [0, 96], sizes = [16, 32], strides = [1, 1]} : vector<16x128xbf16> to vector<16x32xbf16>
    %cst_119 = arith.constant dense<0.000000e+00> : vector<16x16xf32>
    %415 = tpu.matmul %413, %414, %cst_119 {dimension_numbers = #tpu.dot_dimension_numbers<[1], [1], [0], [0], [0, 0, 1, 0], [], []>} : vector<16x32xbf16>, vector<16x32xbf16>, vector<16x16xf32> -> vector<16x16xf32>
    %cst_120 = arith.constant -1.000000e+30 : f32
    %416 = vector.broadcast %cst_120 : f32 to vector<16x16xf32>
    %417 = arith.select %348, %415, %416 : vector<16x16xi1>, vector<16x16xf32>
    %cst_121 = arith.constant dense<0xFF800000> : vector<16xf32>
    %418 = vector.multi_reduction <maximumf>, %417, %cst_121 [1] : vector<16x16xf32> to vector<16xf32>
    %419 = vector.shape_cast %418 : vector<16xf32> to vector<16x1xf32>
    %420 = vector.broadcast %419 : vector<16x1xf32> to vector<16x16xf32>
    %421 = arith.subf %417, %420 : vector<16x16xf32>
    %422 = math.exp %421 : vector<16x16xf32>
    %cst_122 = arith.constant 0.000000e+00 : f32
    %423 = vector.broadcast %cst_122 : f32 to vector<16x16xf32>
    %424 = arith.select %348, %422, %423 : vector<16x16xi1>, vector<16x16xf32>
    %cst_123 = arith.constant dense<0.000000e+00> : vector<16xf32>
    %425 = vector.multi_reduction <add>, %424, %cst_123 [1] : vector<16x16xf32> to vector<16xf32>
    %426 = vector.shape_cast %425 : vector<16xf32> to vector<16x1xf32>
    %cst_124 = arith.constant 1.000000e-16 : f32
    %427 = vector.broadcast %cst_124 : f32 to vector<16x1xf32>
    %428 = arith.maximumf %426, %427 : vector<16x1xf32>
    %429 = tpu.reciprocal %428 {approx = true} : vector<16x1xf32> -> vector<16x1xf32>
    %430 = vector.broadcast %429 : vector<16x1xf32> to vector<16x16xf32>
    %431 = arith.mulf %424, %430 : vector<16x16xf32>
    %432 = arith.truncf %431 : vector<16x16xf32> to vector<16x16xbf16>
    %433 = tpu.concatenate %369, %390, %411, %432 in 1 : vector<16x16xbf16>, vector<16x16xbf16>, vector<16x16xbf16>, vector<16x16xbf16> -> vector<16x64xbf16>
    %cst_125 = arith.constant dense<0.000000e+00> : vector<16x32xf32>
    %434 = tpu.matmul %433, %345, %cst_125 {dimension_numbers = #tpu.dot_dimension_numbers<[1], [0], [0], [1], [0, 0, 1, 1], [], []>} : vector<16x64xbf16>, vector<64x32xbf16>, vector<16x32xf32> -> vector<16x32xf32>
    %cst_126 = arith.constant 2.500000e-01 : f32
    %435 = vector.broadcast %cst_126 : f32 to vector<16x32xf32>
    %436 = arith.mulf %434, %435 : vector<16x32xf32>
    %437 = vector.extract_strided_slice %330 {offsets = [0, 0], sizes = [1, 32], strides = [1, 1]} : vector<1x512xf32> to vector<1x32xf32>
    %438 = vector.extract_strided_slice %330 {offsets = [0, 32], sizes = [1, 32], strides = [1, 1]} : vector<1x512xf32> to vector<1x32xf32>
    %439 = vector.extract_strided_slice %330 {offsets = [0, 64], sizes = [1, 32], strides = [1, 1]} : vector<1x512xf32> to vector<1x32xf32>
    %440 = vector.extract_strided_slice %330 {offsets = [0, 96], sizes = [1, 32], strides = [1, 1]} : vector<1x512xf32> to vector<1x32xf32>
    %441 = vector.broadcast %437 : vector<1x32xf32> to vector<16x32xf32>
    %442 = arith.mulf %436, %441 : vector<16x32xf32>
    %443 = vector.broadcast %438 : vector<1x32xf32> to vector<16x32xf32>
    %444 = arith.mulf %339, %443 : vector<16x32xf32>
    %445 = arith.addf %442, %444 : vector<16x32xf32>
    %cst_127 = arith.constant dense<0.000000e+00> : vector<16xf32>
    %446 = vector.multi_reduction <add>, %445, %cst_127 [1] : vector<16x32xf32> to vector<16xf32>
    %447 = vector.shape_cast %446 : vector<16xf32> to vector<16x1xf32>
    %448 = arith.negf %447 : vector<16x1xf32>
    %449 = math.exp %448 : vector<16x1xf32>
    %cst_128 = arith.constant 1.000000e+00 : f32
    %450 = vector.broadcast %cst_128 : f32 to vector<16x1xf32>
    %451 = arith.addf %450, %449 : vector<16x1xf32>
    %452 = arith.divf %450, %451 : vector<16x1xf32>
    %453 = vector.broadcast %452 : vector<16x1xf32> to vector<16x32xf32>
    %454 = arith.mulf %453, %339 : vector<16x32xf32>
    %cst_129 = arith.constant 1.000000e+00 : f32
    %455 = vector.broadcast %cst_129 : f32 to vector<16x1xf32>
    %456 = arith.subf %455, %452 : vector<16x1xf32>
    %457 = vector.broadcast %456 : vector<16x1xf32> to vector<16x32xf32>
    %458 = arith.mulf %457, %436 : vector<16x32xf32>
    %459 = arith.addf %454, %458 : vector<16x32xf32>
    %cst_130 = arith.constant dense<0.000000e+00> : vector<16xf32>
    %460 = vector.multi_reduction <add>, %459, %cst_130 [1] : vector<16x32xf32> to vector<16xf32>
    %461 = vector.shape_cast %460 : vector<16xf32> to vector<16x1xf32>
    %cst_131 = arith.constant 3.200000e+01 : f32
    %462 = vector.broadcast %cst_131 : f32 to vector<16x1xf32>
    %463 = arith.divf %461, %462 : vector<16x1xf32>
    %464 = vector.broadcast %463 : vector<16x1xf32> to vector<16x32xf32>
    %465 = arith.subf %459, %464 : vector<16x32xf32>
    %466 = vector.broadcast %463 : vector<16x1xf32> to vector<16x32xf32>
    %467 = arith.subf %459, %466 : vector<16x32xf32>
    %468 = arith.mulf %465, %467 : vector<16x32xf32>
    %cst_132 = arith.constant dense<0.000000e+00> : vector<16xf32>
    %469 = vector.multi_reduction <add>, %468, %cst_132 [1] : vector<16x32xf32> to vector<16xf32>
    %470 = vector.shape_cast %469 : vector<16xf32> to vector<16x1xf32>
    %cst_133 = arith.constant 3.200000e+01 : f32
    %471 = vector.broadcast %cst_133 : f32 to vector<16x1xf32>
    %472 = arith.divf %470, %471 : vector<16x1xf32>
    %473 = vector.broadcast %463 : vector<16x1xf32> to vector<16x32xf32>
    %474 = arith.subf %459, %473 : vector<16x32xf32>
    %cst_134 = arith.constant 9.99999974E-6 : f32
    %475 = vector.broadcast %cst_134 : f32 to vector<16x1xf32>
    %476 = arith.addf %472, %475 : vector<16x1xf32>
    %477 = math.rsqrt %476 : vector<16x1xf32>
    %478 = vector.broadcast %477 : vector<16x1xf32> to vector<16x32xf32>
    %479 = arith.mulf %474, %478 : vector<16x32xf32>
    %480 = vector.broadcast %439 : vector<1x32xf32> to vector<16x32xf32>
    %481 = arith.mulf %479, %480 : vector<16x32xf32>
    %482 = vector.broadcast %440 : vector<1x32xf32> to vector<16x32xf32>
    %483 = arith.addf %481, %482 : vector<16x32xf32>
    %cst_135 = arith.constant 0.000000e+00 : f32
    %484 = vector.broadcast %cst_135 : f32 to vector<16x32xf32>
    %485 = arith.maximumf %483, %484 : vector<16x32xf32>
    %c3 = arith.constant 3 : index
    %c0_136 = arith.constant 0 : index
    %c0_137 = arith.constant 0 : index
    %486 = vector.load %arg4[%c3, %c0_136, %c0_137] : memref<4x32x512xbf16, #tpu.memory_space<vmem>>, vector<1x32x512xbf16>
    %487 = vector.shape_cast %486 : vector<1x32x512xbf16> to vector<32x512xbf16>
    %c3_138 = arith.constant 3 : index
    %c0_139 = arith.constant 0 : index
    %c0_140 = arith.constant 0 : index
    %488 = vector.load %arg5[%c3_138, %c0_139, %c0_140] : memref<4x2x512xf32, #tpu.memory_space<vmem>>, vector<1x2x512xf32>
    %489 = vector.shape_cast %488 : vector<1x2x512xf32> to vector<2x512xf32>
    %490 = vector.extract_strided_slice %489 {offsets = [0, 0], sizes = [1, 512], strides = [1, 1]} : vector<2x512xf32> to vector<1x512xf32>
    %491 = vector.extract_strided_slice %489 {offsets = [1, 0], sizes = [1, 512], strides = [1, 1]} : vector<2x512xf32> to vector<1x512xf32>
    %492 = arith.truncf %485 : vector<16x32xf32> to vector<16x32xbf16>
    %cst_141 = arith.constant dense<0.000000e+00> : vector<16x512xf32>
    %493 = tpu.matmul %492, %487, %cst_141 {dimension_numbers = #tpu.dot_dimension_numbers<[1], [0], [0], [1], [0, 0, 1, 1], [], []>} : vector<16x32xbf16>, vector<32x512xbf16>, vector<16x512xf32> -> vector<16x512xf32>
    %494 = vector.broadcast %490 : vector<1x512xf32> to vector<16x512xf32>
    %495 = arith.addf %493, %494 : vector<16x512xf32>
    %496 = vector.extract_strided_slice %495 {offsets = [0, 0], sizes = [16, 128], strides = [1, 1]} : vector<16x512xf32> to vector<16x128xf32>
    %497 = vector.extract_strided_slice %495 {offsets = [0, 128], sizes = [16, 128], strides = [1, 1]} : vector<16x512xf32> to vector<16x128xf32>
    %498 = arith.truncf %497 : vector<16x128xf32> to vector<16x128xbf16>
    %499 = vector.extract_strided_slice %495 {offsets = [0, 256], sizes = [16, 128], strides = [1, 1]} : vector<16x512xf32> to vector<16x128xf32>
    %500 = vector.extract_strided_slice %495 {offsets = [0, 384], sizes = [16, 32], strides = [1, 1]} : vector<16x512xf32> to vector<16x32xf32>
    %501 = vector.extract_strided_slice %499 {offsets = [0, 0], sizes = [16, 32], strides = [1, 1]} : vector<16x128xf32> to vector<16x32xf32>
    %502 = vector.extract_strided_slice %499 {offsets = [0, 32], sizes = [16, 32], strides = [1, 1]} : vector<16x128xf32> to vector<16x32xf32>
    %503 = vector.extract_strided_slice %499 {offsets = [0, 64], sizes = [16, 32], strides = [1, 1]} : vector<16x128xf32> to vector<16x32xf32>
    %504 = vector.extract_strided_slice %499 {offsets = [0, 96], sizes = [16, 32], strides = [1, 1]} : vector<16x128xf32> to vector<16x32xf32>
    %505 = tpu.concatenate %501, %502, %503, %504 in 0 : vector<16x32xf32>, vector<16x32xf32>, vector<16x32xf32>, vector<16x32xf32> -> vector<64x32xf32>
    %506 = arith.truncf %505 : vector<64x32xf32> to vector<64x32xbf16>
    %c0_142 = arith.constant 0 : index
    %c0_143 = arith.constant 0 : index
    %507 = vector.load %arg1[%c0_142, %c0_143] : memref<16x16xbf16, #tpu.memory_space<vmem>>, vector<16x16xbf16>
    %cst_144 = arith.constant 0.000000e+00 : bf16
    %508 = vector.broadcast %cst_144 : bf16 to vector<16x16xbf16>
    %509 = arith.cmpf one, %507, %508 : vector<16x16xbf16>
    %510 = vector.extract_strided_slice %496 {offsets = [0, 0], sizes = [16, 32], strides = [1, 1]} : vector<16x128xf32> to vector<16x32xf32>
    %511 = arith.truncf %510 : vector<16x32xf32> to vector<16x32xbf16>
    %512 = vector.extract_strided_slice %498 {offsets = [0, 0], sizes = [16, 32], strides = [1, 1]} : vector<16x128xbf16> to vector<16x32xbf16>
    %cst_145 = arith.constant dense<0.000000e+00> : vector<16x16xf32>
    %513 = tpu.matmul %511, %512, %cst_145 {dimension_numbers = #tpu.dot_dimension_numbers<[1], [1], [0], [0], [0, 0, 1, 0], [], []>} : vector<16x32xbf16>, vector<16x32xbf16>, vector<16x16xf32> -> vector<16x16xf32>
    %cst_146 = arith.constant -1.000000e+30 : f32
    %514 = vector.broadcast %cst_146 : f32 to vector<16x16xf32>
    %515 = arith.select %509, %513, %514 : vector<16x16xi1>, vector<16x16xf32>
    %cst_147 = arith.constant dense<0xFF800000> : vector<16xf32>
    %516 = vector.multi_reduction <maximumf>, %515, %cst_147 [1] : vector<16x16xf32> to vector<16xf32>
    %517 = vector.shape_cast %516 : vector<16xf32> to vector<16x1xf32>
    %518 = vector.broadcast %517 : vector<16x1xf32> to vector<16x16xf32>
    %519 = arith.subf %515, %518 : vector<16x16xf32>
    %520 = math.exp %519 : vector<16x16xf32>
    %cst_148 = arith.constant 0.000000e+00 : f32
    %521 = vector.broadcast %cst_148 : f32 to vector<16x16xf32>
    %522 = arith.select %509, %520, %521 : vector<16x16xi1>, vector<16x16xf32>
    %cst_149 = arith.constant dense<0.000000e+00> : vector<16xf32>
    %523 = vector.multi_reduction <add>, %522, %cst_149 [1] : vector<16x16xf32> to vector<16xf32>
    %524 = vector.shape_cast %523 : vector<16xf32> to vector<16x1xf32>
    %cst_150 = arith.constant 1.000000e-16 : f32
    %525 = vector.broadcast %cst_150 : f32 to vector<16x1xf32>
    %526 = arith.maximumf %524, %525 : vector<16x1xf32>
    %527 = tpu.reciprocal %526 {approx = true} : vector<16x1xf32> -> vector<16x1xf32>
    %528 = vector.broadcast %527 : vector<16x1xf32> to vector<16x16xf32>
    %529 = arith.mulf %522, %528 : vector<16x16xf32>
    %530 = arith.truncf %529 : vector<16x16xf32> to vector<16x16xbf16>
    %531 = vector.extract_strided_slice %496 {offsets = [0, 32], sizes = [16, 32], strides = [1, 1]} : vector<16x128xf32> to vector<16x32xf32>
    %532 = arith.truncf %531 : vector<16x32xf32> to vector<16x32xbf16>
    %533 = vector.extract_strided_slice %498 {offsets = [0, 32], sizes = [16, 32], strides = [1, 1]} : vector<16x128xbf16> to vector<16x32xbf16>
    %cst_151 = arith.constant dense<0.000000e+00> : vector<16x16xf32>
    %534 = tpu.matmul %532, %533, %cst_151 {dimension_numbers = #tpu.dot_dimension_numbers<[1], [1], [0], [0], [0, 0, 1, 0], [], []>} : vector<16x32xbf16>, vector<16x32xbf16>, vector<16x16xf32> -> vector<16x16xf32>
    %cst_152 = arith.constant -1.000000e+30 : f32
    %535 = vector.broadcast %cst_152 : f32 to vector<16x16xf32>
    %536 = arith.select %509, %534, %535 : vector<16x16xi1>, vector<16x16xf32>
    %cst_153 = arith.constant dense<0xFF800000> : vector<16xf32>
    %537 = vector.multi_reduction <maximumf>, %536, %cst_153 [1] : vector<16x16xf32> to vector<16xf32>
    %538 = vector.shape_cast %537 : vector<16xf32> to vector<16x1xf32>
    %539 = vector.broadcast %538 : vector<16x1xf32> to vector<16x16xf32>
    %540 = arith.subf %536, %539 : vector<16x16xf32>
    %541 = math.exp %540 : vector<16x16xf32>
    %cst_154 = arith.constant 0.000000e+00 : f32
    %542 = vector.broadcast %cst_154 : f32 to vector<16x16xf32>
    %543 = arith.select %509, %541, %542 : vector<16x16xi1>, vector<16x16xf32>
    %cst_155 = arith.constant dense<0.000000e+00> : vector<16xf32>
    %544 = vector.multi_reduction <add>, %543, %cst_155 [1] : vector<16x16xf32> to vector<16xf32>
    %545 = vector.shape_cast %544 : vector<16xf32> to vector<16x1xf32>
    %cst_156 = arith.constant 1.000000e-16 : f32
    %546 = vector.broadcast %cst_156 : f32 to vector<16x1xf32>
    %547 = arith.maximumf %545, %546 : vector<16x1xf32>
    %548 = tpu.reciprocal %547 {approx = true} : vector<16x1xf32> -> vector<16x1xf32>
    %549 = vector.broadcast %548 : vector<16x1xf32> to vector<16x16xf32>
    %550 = arith.mulf %543, %549 : vector<16x16xf32>
    %551 = arith.truncf %550 : vector<16x16xf32> to vector<16x16xbf16>
    %552 = vector.extract_strided_slice %496 {offsets = [0, 64], sizes = [16, 32], strides = [1, 1]} : vector<16x128xf32> to vector<16x32xf32>
    %553 = arith.truncf %552 : vector<16x32xf32> to vector<16x32xbf16>
    %554 = vector.extract_strided_slice %498 {offsets = [0, 64], sizes = [16, 32], strides = [1, 1]} : vector<16x128xbf16> to vector<16x32xbf16>
    %cst_157 = arith.constant dense<0.000000e+00> : vector<16x16xf32>
    %555 = tpu.matmul %553, %554, %cst_157 {dimension_numbers = #tpu.dot_dimension_numbers<[1], [1], [0], [0], [0, 0, 1, 0], [], []>} : vector<16x32xbf16>, vector<16x32xbf16>, vector<16x16xf32> -> vector<16x16xf32>
    %cst_158 = arith.constant -1.000000e+30 : f32
    %556 = vector.broadcast %cst_158 : f32 to vector<16x16xf32>
    %557 = arith.select %509, %555, %556 : vector<16x16xi1>, vector<16x16xf32>
    %cst_159 = arith.constant dense<0xFF800000> : vector<16xf32>
    %558 = vector.multi_reduction <maximumf>, %557, %cst_159 [1] : vector<16x16xf32> to vector<16xf32>
    %559 = vector.shape_cast %558 : vector<16xf32> to vector<16x1xf32>
    %560 = vector.broadcast %559 : vector<16x1xf32> to vector<16x16xf32>
    %561 = arith.subf %557, %560 : vector<16x16xf32>
    %562 = math.exp %561 : vector<16x16xf32>
    %cst_160 = arith.constant 0.000000e+00 : f32
    %563 = vector.broadcast %cst_160 : f32 to vector<16x16xf32>
    %564 = arith.select %509, %562, %563 : vector<16x16xi1>, vector<16x16xf32>
    %cst_161 = arith.constant dense<0.000000e+00> : vector<16xf32>
    %565 = vector.multi_reduction <add>, %564, %cst_161 [1] : vector<16x16xf32> to vector<16xf32>
    %566 = vector.shape_cast %565 : vector<16xf32> to vector<16x1xf32>
    %cst_162 = arith.constant 1.000000e-16 : f32
    %567 = vector.broadcast %cst_162 : f32 to vector<16x1xf32>
    %568 = arith.maximumf %566, %567 : vector<16x1xf32>
    %569 = tpu.reciprocal %568 {approx = true} : vector<16x1xf32> -> vector<16x1xf32>
    %570 = vector.broadcast %569 : vector<16x1xf32> to vector<16x16xf32>
    %571 = arith.mulf %564, %570 : vector<16x16xf32>
    %572 = arith.truncf %571 : vector<16x16xf32> to vector<16x16xbf16>
    %573 = vector.extract_strided_slice %496 {offsets = [0, 96], sizes = [16, 32], strides = [1, 1]} : vector<16x128xf32> to vector<16x32xf32>
    %574 = arith.truncf %573 : vector<16x32xf32> to vector<16x32xbf16>
    %575 = vector.extract_strided_slice %498 {offsets = [0, 96], sizes = [16, 32], strides = [1, 1]} : vector<16x128xbf16> to vector<16x32xbf16>
    %cst_163 = arith.constant dense<0.000000e+00> : vector<16x16xf32>
    %576 = tpu.matmul %574, %575, %cst_163 {dimension_numbers = #tpu.dot_dimension_numbers<[1], [1], [0], [0], [0, 0, 1, 0], [], []>} : vector<16x32xbf16>, vector<16x32xbf16>, vector<16x16xf32> -> vector<16x16xf32>
    %cst_164 = arith.constant -1.000000e+30 : f32
    %577 = vector.broadcast %cst_164 : f32 to vector<16x16xf32>
    %578 = arith.select %509, %576, %577 : vector<16x16xi1>, vector<16x16xf32>
    %cst_165 = arith.constant dense<0xFF800000> : vector<16xf32>
    %579 = vector.multi_reduction <maximumf>, %578, %cst_165 [1] : vector<16x16xf32> to vector<16xf32>
    %580 = vector.shape_cast %579 : vector<16xf32> to vector<16x1xf32>
    %581 = vector.broadcast %580 : vector<16x1xf32> to vector<16x16xf32>
    %582 = arith.subf %578, %581 : vector<16x16xf32>
    %583 = math.exp %582 : vector<16x16xf32>
    %cst_166 = arith.constant 0.000000e+00 : f32
    %584 = vector.broadcast %cst_166 : f32 to vector<16x16xf32>
    %585 = arith.select %509, %583, %584 : vector<16x16xi1>, vector<16x16xf32>
    %cst_167 = arith.constant dense<0.000000e+00> : vector<16xf32>
    %586 = vector.multi_reduction <add>, %585, %cst_167 [1] : vector<16x16xf32> to vector<16xf32>
    %587 = vector.shape_cast %586 : vector<16xf32> to vector<16x1xf32>
    %cst_168 = arith.constant 1.000000e-16 : f32
    %588 = vector.broadcast %cst_168 : f32 to vector<16x1xf32>
    %589 = arith.maximumf %587, %588 : vector<16x1xf32>
    %590 = tpu.reciprocal %589 {approx = true} : vector<16x1xf32> -> vector<16x1xf32>
    %591 = vector.broadcast %590 : vector<16x1xf32> to vector<16x16xf32>
    %592 = arith.mulf %585, %591 : vector<16x16xf32>
    %593 = arith.truncf %592 : vector<16x16xf32> to vector<16x16xbf16>
    %594 = tpu.concatenate %530, %551, %572, %593 in 1 : vector<16x16xbf16>, vector<16x16xbf16>, vector<16x16xbf16>, vector<16x16xbf16> -> vector<16x64xbf16>
    %cst_169 = arith.constant dense<0.000000e+00> : vector<16x32xf32>
    %595 = tpu.matmul %594, %506, %cst_169 {dimension_numbers = #tpu.dot_dimension_numbers<[1], [0], [0], [1], [0, 0, 1, 1], [], []>} : vector<16x64xbf16>, vector<64x32xbf16>, vector<16x32xf32> -> vector<16x32xf32>
    %cst_170 = arith.constant 2.500000e-01 : f32
    %596 = vector.broadcast %cst_170 : f32 to vector<16x32xf32>
    %597 = arith.mulf %595, %596 : vector<16x32xf32>
    %598 = vector.extract_strided_slice %491 {offsets = [0, 0], sizes = [1, 32], strides = [1, 1]} : vector<1x512xf32> to vector<1x32xf32>
    %599 = vector.extract_strided_slice %491 {offsets = [0, 32], sizes = [1, 32], strides = [1, 1]} : vector<1x512xf32> to vector<1x32xf32>
    %600 = vector.extract_strided_slice %491 {offsets = [0, 64], sizes = [1, 32], strides = [1, 1]} : vector<1x512xf32> to vector<1x32xf32>
    %601 = vector.extract_strided_slice %491 {offsets = [0, 96], sizes = [1, 32], strides = [1, 1]} : vector<1x512xf32> to vector<1x32xf32>
    %602 = vector.broadcast %598 : vector<1x32xf32> to vector<16x32xf32>
    %603 = arith.mulf %597, %602 : vector<16x32xf32>
    %604 = vector.broadcast %599 : vector<1x32xf32> to vector<16x32xf32>
    %605 = arith.mulf %500, %604 : vector<16x32xf32>
    %606 = arith.addf %603, %605 : vector<16x32xf32>
    %cst_171 = arith.constant dense<0.000000e+00> : vector<16xf32>
    %607 = vector.multi_reduction <add>, %606, %cst_171 [1] : vector<16x32xf32> to vector<16xf32>
    %608 = vector.shape_cast %607 : vector<16xf32> to vector<16x1xf32>
    %609 = arith.negf %608 : vector<16x1xf32>
    %610 = math.exp %609 : vector<16x1xf32>
    %cst_172 = arith.constant 1.000000e+00 : f32
    %611 = vector.broadcast %cst_172 : f32 to vector<16x1xf32>
    %612 = arith.addf %611, %610 : vector<16x1xf32>
    %613 = arith.divf %611, %612 : vector<16x1xf32>
    %614 = vector.broadcast %613 : vector<16x1xf32> to vector<16x32xf32>
    %615 = arith.mulf %614, %500 : vector<16x32xf32>
    %cst_173 = arith.constant 1.000000e+00 : f32
    %616 = vector.broadcast %cst_173 : f32 to vector<16x1xf32>
    %617 = arith.subf %616, %613 : vector<16x1xf32>
    %618 = vector.broadcast %617 : vector<16x1xf32> to vector<16x32xf32>
    %619 = arith.mulf %618, %597 : vector<16x32xf32>
    %620 = arith.addf %615, %619 : vector<16x32xf32>
    %cst_174 = arith.constant dense<0.000000e+00> : vector<16xf32>
    %621 = vector.multi_reduction <add>, %620, %cst_174 [1] : vector<16x32xf32> to vector<16xf32>
    %622 = vector.shape_cast %621 : vector<16xf32> to vector<16x1xf32>
    %cst_175 = arith.constant 3.200000e+01 : f32
    %623 = vector.broadcast %cst_175 : f32 to vector<16x1xf32>
    %624 = arith.divf %622, %623 : vector<16x1xf32>
    %625 = vector.broadcast %624 : vector<16x1xf32> to vector<16x32xf32>
    %626 = arith.subf %620, %625 : vector<16x32xf32>
    %627 = vector.broadcast %624 : vector<16x1xf32> to vector<16x32xf32>
    %628 = arith.subf %620, %627 : vector<16x32xf32>
    %629 = arith.mulf %626, %628 : vector<16x32xf32>
    %cst_176 = arith.constant dense<0.000000e+00> : vector<16xf32>
    %630 = vector.multi_reduction <add>, %629, %cst_176 [1] : vector<16x32xf32> to vector<16xf32>
    %631 = vector.shape_cast %630 : vector<16xf32> to vector<16x1xf32>
    %cst_177 = arith.constant 3.200000e+01 : f32
    %632 = vector.broadcast %cst_177 : f32 to vector<16x1xf32>
    %633 = arith.divf %631, %632 : vector<16x1xf32>
    %634 = vector.broadcast %624 : vector<16x1xf32> to vector<16x32xf32>
    %635 = arith.subf %620, %634 : vector<16x32xf32>
    %cst_178 = arith.constant 9.99999974E-6 : f32
    %636 = vector.broadcast %cst_178 : f32 to vector<16x1xf32>
    %637 = arith.addf %633, %636 : vector<16x1xf32>
    %638 = math.rsqrt %637 : vector<16x1xf32>
    %639 = vector.broadcast %638 : vector<16x1xf32> to vector<16x32xf32>
    %640 = arith.mulf %635, %639 : vector<16x32xf32>
    %641 = vector.broadcast %600 : vector<1x32xf32> to vector<16x32xf32>
    %642 = arith.mulf %640, %641 : vector<16x32xf32>
    %643 = vector.broadcast %601 : vector<1x32xf32> to vector<16x32xf32>
    %644 = arith.addf %642, %643 : vector<16x32xf32>
    %cst_179 = arith.constant 0.000000e+00 : f32
    %645 = vector.broadcast %cst_179 : f32 to vector<16x32xf32>
    %646 = arith.maximumf %644, %645 : vector<16x32xf32>
    %c0_180 = arith.constant 0 : index
    %c0_181 = arith.constant 0 : index
    %647 = vector.load %arg2[%c0_180, %c0_181] : memref<2x16xbf16, #tpu.memory_space<vmem>>, vector<2x16xbf16>
    %648 = arith.extf %647 : vector<2x16xbf16> to vector<2x16xf32>
    %cst_182 = arith.constant dense<0.000000e+00> : vector<2xf32>
    %649 = vector.multi_reduction <add>, %648, %cst_182 [1] : vector<2x16xf32> to vector<2xf32>
    %650 = vector.shape_cast %649 : vector<2xf32> to vector<2x1xf32>
    %651 = arith.truncf %646 : vector<16x32xf32> to vector<16x32xbf16>
    %cst_183 = arith.constant dense<0.000000e+00> : vector<2x32xf32>
    %652 = tpu.matmul %647, %651, %cst_183 {dimension_numbers = #tpu.dot_dimension_numbers<[1], [0], [0], [1], [0, 0, 1, 1], [], []>} : vector<2x16xbf16>, vector<16x32xbf16>, vector<2x32xf32> -> vector<2x32xf32>
    %cst_184 = arith.constant 1.000000e+00 : f32
    %653 = vector.broadcast %cst_184 : f32 to vector<2x1xf32>
    %654 = arith.maximumf %650, %653 : vector<2x1xf32>
    %655 = vector.broadcast %654 : vector<2x1xf32> to vector<2x32xf32>
    %656 = arith.divf %652, %655 : vector<2x32xf32>
    %c0_185 = arith.constant 0 : index
    %c0_186 = arith.constant 0 : index
    %657 = vector.load %arg6[%c0_185, %c0_186] : memref<2x32xf32, #tpu.memory_space<vmem>>, vector<2x32xf32>
    tpu.vector_store %arg6[%c0_185, %c0_186], %656 {strides = array<i32>} : memref<2x32xf32, #tpu.memory_space<vmem>>, vector<2x32xf32>,
    return
  }
}

</mosaic_0001>

<llo_original>
// kernel: tpu_custom_call.1
$region0: #{tpu_custom_call.1}
  #allocation0 [shape = 'u32[]', space=smem, size = 0x4, offset = 0x4, fixed_abs, tag = 'smem constant byte address 0x4 - core index']
  #allocation1 [shape = 'u32[144,128]{1,0:T(1,128)}', space=vmem, size = 0x12000, scoped, tag = 'internal scratch']
  %s0 = inlined_call_operand.hbm [shape: bf16[16,11], index: 0, kind: input, shape index: {}]
  %s1 = inlined_call_operand.hbm [shape: bf16[16,16], index: 1, kind: input, shape index: {}]
  %s2 = inlined_call_operand.vmem [shape: bf16[2,16], index: 2, kind: input, shape index: {}]
  %s3 = inlined_call_operand.vmem [shape: bf16[11,32], index: 3, kind: input, shape index: {}]
  %s4 = inlined_call_operand.hbm [shape: bf16[4,32,512], index: 4, kind: input, shape index: {}]
  %s5 = inlined_call_operand.hbm [shape: f32[4,2,512], index: 5, kind: input, shape index: {}]
  %s6 = inlined_call_operand.hbm [shape: f32[2,32], index: 6, kind: output, shape index: {}]
  %s7 = sld [smem:[#allocation0]]
  $region50: #{tpu_custom_call.1} parent=0
    _
  %s9 = ssub.s32 1, %s7
  %s10 = scalar_select 0, %s9, %s7
  $region1: #{tpu_custom_call.1} parent=0
    #allocation2 [shape = 'u8[4096]{0}', space=vmem, size = 0x1000, scoped, tag = 'input window, operand 0, single buffered']
    #allocation3 [shape = 's32[1]{0}', space=sflag, size = 0x4, scoped, tag = 'scoped memory for tpu_custom_call.1']
    #allocation4 [shape = 's32[1]{0}', space=sflag, size = 0x4, scoped, tag = 'scoped memory for tpu_custom_call.1']
    #allocation5 [shape = 'u8[4096]{0}', space=vmem, size = 0x1000, scoped, tag = 'input window, operand 1, single buffered']
    #allocation6 [shape = 's32[1]{0}', space=sflag, size = 0x4, scoped, tag = 'scoped memory for tpu_custom_call.1']
    #allocation7 [shape = 'u8[131072]{0}', space=vmem, size = 0x20000, scoped, tag = 'input window, operand 4, single buffered']
    #allocation8 [shape = 'u8[16384]{0}', space=vmem, size = 0x4000, scoped, tag = 'input window, operand 5, single buffered']
    #allocation9 [shape = 's32[1]{0}', space=sflag, size = 0x4, scoped, tag = 'scoped memory for tpu_custom_call.1']
    #allocation10 [shape = 'u8[1024]{0}', space=vmem, size = 0x400, scoped, tag = 'output window, operand 0, single buffered']
    %11 = vsyncpa [#allocation3], 0
    %12 = vsyncpa [#allocation6], 0
    %13 = vsyncpa [#allocation9], 0
    %14 = vsyncpa [#allocation4], 0
    // Predicated region
    $region2: #{tpu_custom_call.1} parent=1 // pred_check
      _
    $region3: #{tpu_custom_call.1} parent=1 // pred_check_branch
      %16 = sbr.rel (0) target = $region5
    $region4: #{tpu_custom_call.1} parent=1 // pred_region
      %s18 = ssub.s32 128, 128
      %19 = vsyncadd [#allocation3], %s18
      %s20 = sshll.u32 [#allocation2], 4
      %s21 = int_to_ptr.vmem [resolvable:$true] %s20
      %26 = dma.hbm_to_vmem [thread:$0]  %s0, 128, %s21, [#allocation3], 64, 64, 4
    $region5: #{tpu_custom_call.1} parent=1 // pred_fallthru
      _
    // Predicated region
    $region6: #{tpu_custom_call.1} parent=1 // pred_check
      _
    $region7: #{tpu_custom_call.1} parent=1 // pred_check_branch
      %28 = sbr.rel (0) target = $region9
    $region8: #{tpu_custom_call.1} parent=1 // pred_region
      %s30 = ssub.s32 128, 128
      %31 = vsyncadd [#allocation6], %s30
      %s32 = sshll.u32 [#allocation5], 4
      %s33 = int_to_ptr.vmem [resolvable:$true] %s32
      %38 = dma.hbm_to_vmem [thread:$0]  %s1, 128, %s33, [#allocation6], 64, 64, 4
    $region9: #{tpu_custom_call.1} parent=1 // pred_fallthru
      _
    // Predicated region
    $region10: #{tpu_custom_call.1} parent=1 // pred_check
      _
    $region11: #{tpu_custom_call.1} parent=1 // pred_check_branch
      %40 = sbr.rel (0) target = $region13
    $region12: #{tpu_custom_call.1} parent=1 // pred_region
      _
    $region13: #{tpu_custom_call.1} parent=1 // pred_fallthru
      _
    // Predicated region
    $region14: #{tpu_custom_call.1} parent=1 // pred_check
      _
    $region15: #{tpu_custom_call.1} parent=1 // pred_check_branch
      %42 = sbr.rel (0) target = $region17
    $region16: #{tpu_custom_call.1} parent=1 // pred_region
      _
    $region17: #{tpu_custom_call.1} parent=1 // pred_fallthru
      _
    // Predicated region
    $region18: #{tpu_custom_call.1} parent=1 // pred_check
      _
    $region19: #{tpu_custom_call.1} parent=1 // pred_check_branch
      %44 = sbr.rel (0) target = $region21
    $region20: #{tpu_custom_call.1} parent=1 // pred_region
      %s46 = ssub.s32 4096, 4096
      %47 = vsyncadd [#allocation6], %s46
      %s48 = sshll.u32 [#allocation7], 4
      %s49 = int_to_ptr.vmem [resolvable:$true] %s48
      %54 = dma.hbm_to_vmem [thread:$0]  %s4, 4096, %s49, [#allocation6], 256, 256, 16
    $region21: #{tpu_custom_call.1} parent=1 // pred_fallthru
      _
    // Predicated region
    $region22: #{tpu_custom_call.1} parent=1 // pred_check
      _
    $region23: #{tpu_custom_call.1} parent=1 // pred_check_branch
      %56 = sbr.rel (0) target = $region25
    $region24: #{tpu_custom_call.1} parent=1 // pred_region
      %s58 = ssub.s32 512, 512
      %59 = vsyncadd [#allocation9], %s58
      %s60 = sshll.u32 [#allocation8], 4
      %s61 = int_to_ptr.vmem [resolvable:$true] %s60
      %66 = dma.hbm_to_vmem [thread:$0]  %s5, 512, %s61, [#allocation9], 128, 128, 8
    $region25: #{tpu_custom_call.1} parent=1 // pred_fallthru
      _
    // Predicated region
    $region26: #{tpu_custom_call.1} parent=1 // pred_check
      _
    $region27: #{tpu_custom_call.1} parent=1 // pred_check_branch
      %68 = sbr.rel (0) target = $region29
    $region28: #{tpu_custom_call.1} parent=1 // pred_region
      %69 = dma.done [#allocation3], 128
    $region29: #{tpu_custom_call.1} parent=1 // pred_fallthru
      _
    // Predicated region
    $region30: #{tpu_custom_call.1} parent=1 // pred_check
      _
    $region31: #{tpu_custom_call.1} parent=1 // pred_check_branch
      %71 = sbr.rel (0) target = $region33
    $region32: #{tpu_custom_call.1} parent=1 // pred_region
      %72 = dma.done [#allocation6], 128
    $region33: #{tpu_custom_call.1} parent=1 // pred_fallthru
      _
    // Predicated region
    $region34: #{tpu_custom_call.1} parent=1 // pred_check
      _
    $region35: #{tpu_custom_call.1} parent=1 // pred_check_branch
      %74 = sbr.rel (0) target = $region37
    $region36: #{tpu_custom_call.1} parent=1 // pred_region
      %75 = dma.done [#allocation6], 4096
    $region37: #{tpu_custom_call.1} parent=1 // pred_fallthru
      _
    // Predicated region
    $region38: #{tpu_custom_call.1} parent=1 // pred_check
      _
    $region39: #{tpu_custom_call.1} parent=1 // pred_check_branch
      %77 = sbr.rel (0) target = $region41
    $region40: #{tpu_custom_call.1} parent=1 // pred_region
      %78 = dma.done [#allocation9], 512
    $region41: #{tpu_custom_call.1} parent=1 // pred_fallthru
      _
    %v82 = vld [vmem:[#allocation2] sm:$0xf]
    %v83 = vld [vmem:[#allocation2 + $0x4] sm:$0xf]
    %v84 = vld [vmem:[%s3] sm:$0xf]
    %v85 = vld [vmem:[%s3 + $0x4] sm:$0x3]
    %v88 = vunpack.c.l.b16 %v82
    %v89 = vunpack.c.l.b16 %v83
    %v90 = vpack.c.b16 %v89, %v88
    %v93 = vunpack.c.l.b16 %v84
    %v94 = vunpack.c.l.b16 %v85
    %v95 = vpack.c.b16 %v94, %v93
    %vm96 = vcmask 89088
    %v98 = vsel %vm96, %v90, 0
    %vm100 = vcmask 1044480
    %vm101 = vcmask 1045504
    %v102 = vsel %vm100, 4294967295, 65535
    %v103 = vsel %vm101, %v102, 0
    %v105 = vand.u32 %v95, %v103
    %107 = vmatprep.subr.bf16.mxu0 0
    %108 = vmatpush1.bf16.msra.mxu0 %v105
    %109 = vmatprep.subr.bf16.mxu0 0
    %110 = vmatpush1.bf16.msra.mxu0 0
    %111 = vmatprep.subr.bf16.mxu0 0
    %112 = vmatpush1.bf16.msra.mxu0 0
    %113 = vmatprep.subr.bf16.mxu0 0
    %114 = vmatpush1.bf16.msra.mxu0 0
    %115 = vmatprep.subr.bf16.mxu0 0
    %116 = vmatpush1.bf16.msra.mxu0 0
    %117 = vmatprep.subr.bf16.mxu0 0
    %118 = vmatpush1.bf16.msra.mxu0 0
    %119 = vmatprep.subr.bf16.mxu0 0
    %120 = vmatpush1.bf16.msra.mxu0 0
    %121 = vmatprep.subr.bf16.mxu0 0
    %122 = vmatpush1.bf16.msra.mxu0 0
    %123 = vmatprep.subr.bf16.mxu0 0
    %124 = vmatpush1.bf16.msra.mxu0 0
    %125 = vmatprep.subr.bf16.mxu0 0
    %126 = vmatpush1.bf16.msra.mxu0 0
    %127 = vmatprep.subr.bf16.mxu0 0
    %128 = vmatpush1.bf16.msra.mxu0 0
    %129 = vmatprep.subr.bf16.mxu0 0
    %130 = vmatpush1.bf16.msra.mxu0 0
    %131 = vmatprep.subr.bf16.mxu0 0
    %132 = vmatpush1.bf16.msra.mxu0 0
    %133 = vmatprep.subr.bf16.mxu0 0
    %134 = vmatpush1.bf16.msra.mxu0 0
    %135 = vmatprep.subr.bf16.mxu0 0
    %136 = vmatpush1.bf16.msra.mxu0 0
    %137 = vmatprep.subr.bf16.mxu0 0
    %138 = vmatpush1.bf16.msra.mxu0 0
    %139 = vmatprep.mubr.bf16.mxu0 0
    %140 = vmatmul.mubr.bf16.gmra.mrb[0].mxu0 %v98
    %v141 = vpop.f32.mrb[0].mxu0
    %v142 = vadd.f32 0.0, %v141
    %v143 = vpop.f32.mrb[0].mxu0
    %v144 = vpop.f32.mrb[0].mxu0
    %v145 = vadd.f32 0.0, %v144
    %v146 = vpop.f32.mrb[0].mxu0
    %147 = vdwg.mxu0
    %v148 = vld [vmem:[#allocation7] sm:$0xff]
    %v149 = vld [vmem:[#allocation7 + $0x8] sm:$0xff]
    %v150 = vld [vmem:[#allocation7 + $0x10] sm:$0xff]
    %v151 = vld [vmem:[#allocation7 + $0x18] sm:$0xff]
    %v152 = vld [vmem:[#allocation7 + $0x20] sm:$0xff]
    %v153 = vld [vmem:[#allocation7 + $0x28] sm:$0xff]
    %v154 = vld [vmem:[#allocation7 + $0x30] sm:$0xff]
    %v155 = vld [vmem:[#allocation7 + $0x38] sm:$0xff]
    %v156 = vld [vmem:[#allocation8] sm:$0xff]
    %v157 = vpack.c.bf16 %v145, %v142
    %v159 = vlaneseq
    %v160 = vshrl.u32 %v159, 7
    %v161 = vsub.s32 0, %v160
    %v162 = vrot.slane %v156, %v161
    %v163 = vlaneseq
    %v164 = vshrl.u32 %v163, 7
    %v165 = vsub.s32 2, %v164
    %v166 = vrot.slane %v156, %v165
    %v167 = vlaneseq
    %v168 = vshrl.u32 %v167, 7
    %v169 = vsub.s32 4, %v168
    %v170 = vrot.slane %v156, %v169
    %v171 = vlaneseq
    %v172 = vshrl.u32 %v171, 7
    %v173 = vsub.s32 6, %v172
    %v174 = vrot.slane %v156, %v173
    %v179 = vlaneseq
    %v180 = vshrl.u32 %v179, 7
    %v181 = vsub.s32 0, %v180
    %v182 = vrot.slane %v162, %v181
    %v183 = vlaneseq
    %v184 = vshrl.u32 %v183, 7
    %v185 = vsub.s32 0, %v184
    %v186 = vrot.slane %v166, %v185
    %v187 = vlaneseq
    %v188 = vshrl.u32 %v187, 7
    %v189 = vsub.s32 0, %v188
    %v190 = vrot.slane %v170, %v189
    %v191 = vlaneseq
    %v192 = vshrl.u32 %v191, 7
    %v193 = vsub.s32 0, %v192
    %v194 = vrot.slane %v174, %v193
    %v203 = vunpack.c.l.b16 %v148
    %v204 = vunpack.c.h.b16 %v148
    %v205 = vunpack.c.l.b16 %v149
    %v206 = vunpack.c.h.b16 %v149
    %v207 = vunpack.c.l.b16 %v150
    %v208 = vunpack.c.h.b16 %v150
    %v209 = vunpack.c.l.b16 %v151
    %v210 = vunpack.c.h.b16 %v151
    %v211 = vunpack.c.l.b16 %v152
    %v212 = vunpack.c.h.b16 %v152
    %v213 = vunpack.c.l.b16 %v153
    %v214 = vunpack.c.h.b16 %v153
    %v215 = vunpack.c.l.b16 %v154
    %v216 = vunpack.c.h.b16 %v154
    %v217 = vunpack.c.l.b16 %v155
    %v218 = vunpack.c.h.b16 %v155
    %v219 = vpack.c.b16 %v207, %v203
    %v220 = vpack.c.b16 %v208, %v204
    %v221 = vpack.c.b16 %v209, %v205
    %v222 = vpack.c.b16 %v210, %v206
    %v223 = vpack.c.b16 %v215, %v211
    %v224 = vpack.c.b16 %v216, %v212
    %v225 = vpack.c.b16 %v217, %v213
    %v226 = vpack.c.b16 %v218, %v214
    %vm235 = vcmask 261120
    %v237 = vsel %vm235, %v157, 0
    %239 = vmatprep.subr.bf16.mxu0 %v220
    %240 = vmatpush1.bf16.msra.mxu0 %v219
    %241 = vmatprep.subr.bf16.mxu0 %v224
    %242 = vmatpush1.bf16.msra.mxu0 %v223
    %243 = vmatprep.subr.bf16.mxu0 0
    %244 = vmatpush1.bf16.msra.mxu0 0
    %245 = vmatprep.subr.bf16.mxu0 0
    %246 = vmatpush1.bf16.msra.mxu0 0
    %247 = vmatprep.subr.bf16.mxu0 0
    %248 = vmatpush1.bf16.msra.mxu0 0
    %249 = vmatprep.subr.bf16.mxu0 0
    %250 = vmatpush1.bf16.msra.mxu0 0
    %251 = vmatprep.subr.bf16.mxu0 0
    %252 = vmatpush1.bf16.msra.mxu0 0
    %253 = vmatprep.subr.bf16.mxu0 0
    %254 = vmatpush1.bf16.msra.mxu0 0
    %255 = vmatprep.subr.bf16.mxu0 0
    %256 = vmatpush1.bf16.msra.mxu0 0
    %257 = vmatprep.subr.bf16.mxu0 0
    %258 = vmatpush1.bf16.msra.mxu0 0
    %259 = vmatprep.subr.bf16.mxu0 0
    %260 = vmatpush1.bf16.msra.mxu0 0
    %261 = vmatprep.subr.bf16.mxu0 0
    %262 = vmatpush1.bf16.msra.mxu0 0
    %263 = vmatprep.subr.bf16.mxu0 0
    %264 = vmatpush1.bf16.msra.mxu0 0
    %265 = vmatprep.subr.bf16.mxu0 0
    %266 = vmatpush1.bf16.msra.mxu0 0
    %267 = vmatprep.subr.bf16.mxu0 0
    %268 = vmatpush1.bf16.msra.mxu0 0
    %269 = vmatprep.subr.bf16.mxu0 0
    %270 = vmatpush1.bf16.msra.mxu0 0
    %271 = vmatprep.mubr.bf16.mxu0 0
    %272 = vmatmul.mubr.bf16.gmra.mrb[0].mxu0 %v237
    %v273 = vpop.f32.mrb[0].mxu0
    %v274 = vadd.f32 %v182, %v273
    %v275 = vpop.f32.mrb[0].mxu0
    %v276 = vadd.f32 %v186, %v275
    %v277 = vpop.f32.mrb[0].mxu0
    %v278 = vadd.f32 %v182, %v277
    %v279 = vpop.f32.mrb[0].mxu0
    %v280 = vadd.f32 %v186, %v279
    %281 = vdwg.mxu0
    %282 = vmatprep.subr.bf16.mxu0 %v222
    %283 = vmatpush1.bf16.msra.mxu0 %v221
    %284 = vmatprep.subr.bf16.mxu0 %v226
    %285 = vmatpush1.bf16.msra.mxu0 %v225
    %286 = vmatprep.subr.bf16.mxu0 0
    %287 = vmatpush1.bf16.msra.mxu0 0
    %288 = vmatprep.subr.bf16.mxu0 0
    %289 = vmatpush1.bf16.msra.mxu0 0
    %290 = vmatprep.subr.bf16.mxu0 0
    %291 = vmatpush1.bf16.msra.mxu0 0
    %292 = vmatprep.subr.bf16.mxu0 0
    %293 = vmatpush1.bf16.msra.mxu0 0
    %294 = vmatprep.subr.bf16.mxu0 0
    %295 = vmatpush1.bf16.msra.mxu0 0
    %296 = vmatprep.subr.bf16.mxu0 0
    %297 = vmatpush1.bf16.msra.mxu0 0
    %298 = vmatprep.subr.bf16.mxu0 0
    %299 = vmatpush1.bf16.msra.mxu0 0
    %300 = vmatprep.subr.bf16.mxu0 0
    %301 = vmatpush1.bf16.msra.mxu0 0
    %302 = vmatprep.subr.bf16.mxu0 0
    %303 = vmatpush1.bf16.msra.mxu0 0
    %304 = vmatprep.subr.bf16.mxu0 0
    %305 = vmatpush1.bf16.msra.mxu0 0
    %306 = vmatprep.subr.bf16.mxu0 0
    %307 = vmatpush1.bf16.msra.mxu0 0
    %308 = vmatprep.subr.bf16.mxu0 0
    %309 = vmatpush1.bf16.msra.mxu0 0
    %310 = vmatprep.subr.bf16.mxu0 0
    %311 = vmatpush1.bf16.msra.mxu0 0
    %312 = vmatprep.subr.bf16.mxu0 0
    %313 = vmatpush1.bf16.msra.mxu0 0
    %314 = vmatprep.mubr.bf16.mxu0 0
    %315 = vmatmul.mubr.bf16.gmra.mrb[0].mxu0 %v237
    %v316 = vpop.f32.mrb[0].mxu0
    %v317 = vadd.f32 %v190, %v316
    %v318 = vpop.f32.mrb[0].mxu0
    %v319 = vadd.f32 %v194, %v318
    %v320 = vpop.f32.mrb[0].mxu0
    %v321 = vadd.f32 %v190, %v320
    %v322 = vpop.f32.mrb[0].mxu0
    %v323 = vadd.f32 %v194, %v322
    %324 = vdwg.mxu0
    %v325 = vpack.c.bf16 %v280, %v276
    %328 = vrot.lane.b32.xlu0 %v317, 96
    %v329 = vpop.permute.xlu0 %328
    %330 = vrot.lane.b32.xlu0 %v321, 96
    %v331 = vpop.permute.xlu0 %330
    %334 = vrot.lane.b32.xlu0 %v317, 64
    %v335 = vpop.permute.xlu0 %334
    %336 = vrot.lane.b32.xlu0 %v321, 64
    %v337 = vpop.permute.xlu0 %336
    %340 = vrot.lane.b32.xlu0 %v317, 32
    %v341 = vpop.permute.xlu0 %340
    %342 = vrot.lane.b32.xlu0 %v321, 32
    %v343 = vpop.permute.xlu0 %342
    %v346 = vpack.c.bf16 %v321, %v317
    %v347 = vpack.c.bf16 %v331, %v329
    %v348 = vpack.c.bf16 %v337, %v335
    %v349 = vpack.c.bf16 %v343, %v341
    %v350 = vld [vmem:[#allocation5] sm:$0xf]
    %v351 = vld [vmem:[#allocation5 + $0x4] sm:$0xf]
    %vm352 = vcmp.ne.bf16.partialorder %v350, 0
    %vm353 = vcmp.ne.bf16.partialorder %v351, 0
    %v354 = vpack.c.bf16 %v278, %v274
    %v356 = vsel %vm235, %v354, 0
    %v359 = vsel %vm235, %v325, 0
    %361 = vmatprep.subr.bf16.mxu0 0
    %362 = vmatpush1.bf16.xpose.msra.mxu0 %v359
    %363 = vmatprep.subr.bf16.mxu0 0
    %364 = vmatpush1.bf16.xpose.msra.mxu0 0
    %365 = vmatprep.subr.bf16.mxu0 0
    %366 = vmatpush1.bf16.xpose.msra.mxu0 0
    %367 = vmatprep.subr.bf16.mxu0 0
    %368 = vmatpush1.bf16.xpose.msra.mxu0 0
    %369 = vmatprep.subr.bf16.mxu0 0
    %370 = vmatpush1.bf16.xpose.msra.mxu0 0
    %371 = vmatprep.subr.bf16.mxu0 0
    %372 = vmatpush1.bf16.xpose.msra.mxu0 0
    %373 = vmatprep.subr.bf16.mxu0 0
    %374 = vmatpush1.bf16.xpose.msra.mxu0 0
    %375 = vmatprep.subr.bf16.mxu0 0
    %376 = vmatpush1.bf16.xpose.msra.mxu0 0
    %377 = vmatprep.subr.bf16.mxu0 0
    %378 = vmatpush1.bf16.xpose.msra.mxu0 0
    %379 = vmatprep.subr.bf16.mxu0 0
    %380 = vmatpush1.bf16.xpose.msra.mxu0 0
    %381 = vmatprep.subr.bf16.mxu0 0
    %382 = vmatpush1.bf16.xpose.msra.mxu0 0
    %383 = vmatprep.subr.bf16.mxu0 0
    %384 = vmatpush1.bf16.xpose.msra.mxu0 0
    %385 = vmatprep.subr.bf16.mxu0 0
    %386 = vmatpush1.bf16.xpose.msra.mxu0 0
    %387 = vmatprep.subr.bf16.mxu0 0
    %388 = vmatpush1.bf16.xpose.msra.mxu0 0
    %389 = vmatprep.subr.bf16.mxu0 0
    %390 = vmatpush1.bf16.xpose.msra.mxu0 0
    %391 = vmatprep.subr.bf16.mxu0 0
    %392 = vmatpush1.bf16.xpose.msra.mxu0 0
    %393 = vmatprep.mubr.bf16.mxu0 0
    %394 = vmatmul.mubr.bf16.gmra.mrb[0].mxu0 %v356
    %v395 = vpop.f32.mrb[0].mxu0
    %v396 = vadd.f32 0.0, %v395
    %v397 = vpop.f32.mrb[0].mxu0
    %v398 = vpop.f32.mrb[0].mxu0
    %v399 = vadd.f32 0.0, %v398
    %v400 = vpop.f32.mrb[0].mxu0
    %401 = vdwg.mxu0
    %v402 = vsel %vm352, 65537, 0
    %v403 = vsel %vm353, 65537, 0
    %v404 = vunpack.c.l.b16 %v402
    %v405 = vunpack.c.l.b16 %v403
    %vm406 = vcmp.ne.s32.totalorder %v404, 0
    %vm407 = vcmp.ne.s32.totalorder %v405, 0
    %v408 = vsel %vm406, %v396, -1e+30
    %v409 = vsel %vm407, %v399, -1e+30
    %vm410 = vcmask 130048
    %v411 = vsel %vm410, %v408, -inf
    %412 = vmax.xlane.f32.xlu0 %v411
    %v413 = vpop.xlane.xlu0 %412
    %v414 = vsel %vm410, %v409, -inf
    %415 = vmax.xlane.f32.xlu0 %v414
    %v416 = vpop.xlane.xlu0 %415
    %v417 = vsub.f32 %v408, %v413
    %v418 = vsub.f32 %v409, %v416
    %v419 = vmul.f32 %v417, 1.442695
    %v420 = vpow.pop %v419
    %v421 = vmul.f32 %v418, 1.442695
    %v422 = vpow.pop %v421
    %v423 = vsel %vm406, %v420, 0.0
    %v424 = vsel %vm407, %v422, 0.0
    %v425 = vsel %vm410, %v423, 0.0
    %426 = vadd.xlane.f32.xlu0 %v425
    %v427 = vpop.xlane.xlu0 %426
    %v428 = vsel %vm410, %v424, 0.0
    %429 = vadd.xlane.f32.xlu0 %v428
    %v430 = vpop.xlane.xlu0 %429
    %v431 = vmax.f32 %v427, 1e-16
    %v432 = vmax.f32 %v430, 1e-16
    %v433 = vrcp.pop %v431
    %v434 = vrcp.pop %v432
    %v435 = vmul.f32 %v423, %v433
    %v436 = vmul.f32 %v424, %v434
    %v437 = vpack.c.bf16 %v436, %v435
    %439 = vrot.lane.b32.xlu0 %v354, 96
    %v440 = vpop.permute.xlu0 %439
    %442 = vrot.lane.b32.xlu0 %v325, 96
    %v443 = vpop.permute.xlu0 %442
    %v445 = vsel %vm235, %v440, 0
    %v448 = vsel %vm235, %v443, 0
    %450 = vmatprep.subr.bf16.mxu0 0
    %451 = vmatpush1.bf16.xpose.msra.mxu0 %v448
    %452 = vmatprep.subr.bf16.mxu0 0
    %453 = vmatpush1.bf16.xpose.msra.mxu0 0
    %454 = vmatprep.subr.bf16.mxu0 0
    %455 = vmatpush1.bf16.xpose.msra.mxu0 0
    %456 = vmatprep.subr.bf16.mxu0 0
    %457 = vmatpush1.bf16.xpose.msra.mxu0 0
    %458 = vmatprep.subr.bf16.mxu0 0
    %459 = vmatpush1.bf16.xpose.msra.mxu0 0
    %460 = vmatprep.subr.bf16.mxu0 0
    %461 = vmatpush1.bf16.xpose.msra.mxu0 0
    %462 = vmatprep.subr.bf16.mxu0 0
    %463 = vmatpush1.bf16.xpose.msra.mxu0 0
    %464 = vmatprep.subr.bf16.mxu0 0
    %465 = vmatpush1.bf16.xpose.msra.mxu0 0
    %466 = vmatprep.subr.bf16.mxu0 0
    %467 = vmatpush1.bf16.xpose.msra.mxu0 0
    %468 = vmatprep.subr.bf16.mxu0 0
    %469 = vmatpush1.bf16.xpose.msra.mxu0 0
    %470 = vmatprep.subr.bf16.mxu0 0
    %471 = vmatpush1.bf16.xpose.msra.mxu0 0
    %472 = vmatprep.subr.bf16.mxu0 0
    %473 = vmatpush1.bf16.xpose.msra.mxu0 0
    %474 = vmatprep.subr.bf16.mxu0 0
    %475 = vmatpush1.bf16.xpose.msra.mxu0 0
    %476 = vmatprep.subr.bf16.mxu0 0
    %477 = vmatpush1.bf16.xpose.msra.mxu0 0
    %478 = vmatprep.subr.bf16.mxu0 0
    %479 = vmatpush1.bf16.xpose.msra.mxu0 0
    %480 = vmatprep.subr.bf16.mxu0 0
    %481 = vmatpush1.bf16.xpose.msra.mxu0 0
    %482 = vmatprep.mubr.bf16.mxu0 0
    %483 = vmatmul.mubr.bf16.gmra.mrb[0].mxu0 %v445
    %v484 = vpop.f32.mrb[0].mxu0
    %v485 = vadd.f32 0.0, %v484
    %v486 = vpop.f32.mrb[0].mxu0
    %v487 = vpop.f32.mrb[0].mxu0
    %v488 = vadd.f32 0.0, %v487
    %v489 = vpop.f32.mrb[0].mxu0
    %490 = vdwg.mxu0
    %v491 = vsel %vm406, %v485, -1e+30
    %v492 = vsel %vm407, %v488, -1e+30
    %v493 = vsel %vm410, %v491, -inf
    %494 = vmax.xlane.f32.xlu0 %v493
    %v495 = vpop.xlane.xlu0 %494
    %v496 = vsel %vm410, %v492, -inf
    %497 = vmax.xlane.f32.xlu0 %v496
    %v498 = vpop.xlane.xlu0 %497
    %v499 = vsub.f32 %v491, %v495
    %v500 = vsub.f32 %v492, %v498
    %v501 = vmul.f32 %v499, 1.442695
    %v502 = vpow.pop %v501
    %v503 = vmul.f32 %v500, 1.442695
    %v504 = vpow.pop %v503
    %v505 = vsel %vm406, %v502, 0.0
    %v506 = vsel %vm407, %v504, 0.0
    %v507 = vsel %vm410, %v505, 0.0
    %508 = vadd.xlane.f32.xlu0 %v507
    %v509 = vpop.xlane.xlu0 %508
    %v510 = vsel %vm410, %v506, 0.0
    %511 = vadd.xlane.f32.xlu0 %v510
    %v512 = vpop.xlane.xlu0 %511
    %v513 = vmax.f32 %v509, 1e-16
    %v514 = vmax.f32 %v512, 1e-16
    %v515 = vrcp.pop %v513
    %v516 = vrcp.pop %v514
    %v517 = vmul.f32 %v505, %v515
    %v518 = vmul.f32 %v506, %v516
    %v519 = vpack.c.bf16 %v518, %v517
    %520 = vrot.lane.b32.xlu0 %v354, 64
    %v521 = vpop.permute.xlu0 %520
    %522 = vrot.lane.b32.xlu0 %v325, 64
    %v523 = vpop.permute.xlu0 %522
    %v525 = vsel %vm235, %v521, 0
    %v528 = vsel %vm235, %v523, 0
    %530 = vmatprep.subr.bf16.mxu0 0
    %531 = vmatpush1.bf16.xpose.msra.mxu0 %v528
    %532 = vmatprep.subr.bf16.mxu0 0
    %533 = vmatpush1.bf16.xpose.msra.mxu0 0
    %534 = vmatprep.subr.bf16.mxu0 0
    %535 = vmatpush1.bf16.xpose.msra.mxu0 0
    %536 = vmatprep.subr.bf16.mxu0 0
    %537 = vmatpush1.bf16.xpose.msra.mxu0 0
    %538 = vmatprep.subr.bf16.mxu0 0
    %539 = vmatpush1.bf16.xpose.msra.mxu0 0
    %540 = vmatprep.subr.bf16.mxu0 0
    %541 = vmatpush1.bf16.xpose.msra.mxu0 0
    %542 = vmatprep.subr.bf16.mxu0 0
    %543 = vmatpush1.bf16.xpose.msra.mxu0 0
    %544 = vmatprep.subr.bf16.mxu0 0
    %545 = vmatpush1.bf16.xpose.msra.mxu0 0
    %546 = vmatprep.subr.bf16.mxu0 0
    %547 = vmatpush1.bf16.xpose.msra.mxu0 0
    %548 = vmatprep.subr.bf16.mxu0 0
    %549 = vmatpush1.bf16.xpose.msra.mxu0 0
    %550 = vmatprep.subr.bf16.mxu0 0
    %551 = vmatpush1.bf16.xpose.msra.mxu0 0
    %552 = vmatprep.subr.bf16.mxu0 0
    %553 = vmatpush1.bf16.xpose.msra.mxu0 0
    %554 = vmatprep.subr.bf16.mxu0 0
    %555 = vmatpush1.bf16.xpose.msra.mxu0 0
    %556 = vmatprep.subr.bf16.mxu0 0
    %557 = vmatpush1.bf16.xpose.msra.mxu0 0
    %558 = vmatprep.subr.bf16.mxu0 0
    %559 = vmatpush1.bf16.xpose.msra.mxu0 0
    %560 = vmatprep.subr.bf16.mxu0 0
    %561 = vmatpush1.bf16.xpose.msra.mxu0 0
    %562 = vmatprep.mubr.bf16.mxu0 0
    %563 = vmatmul.mubr.bf16.gmra.mrb[0].mxu0 %v525
    %v564 = vpop.f32.mrb[0].mxu0
    %v565 = vadd.f32 0.0, %v564
    %v566 = vpop.f32.mrb[0].mxu0
    %v567 = vpop.f32.mrb[0].mxu0
    %v568 = vadd.f32 0.0, %v567
    %v569 = vpop.f32.mrb[0].mxu0
    %570 = vdwg.mxu0
    %v571 = vsel %vm406, %v565, -1e+30
    %v572 = vsel %vm407, %v568, -1e+30
    %v573 = vsel %vm410, %v571, -inf
    %574 = vmax.xlane.f32.xlu0 %v573
    %v575 = vpop.xlane.xlu0 %574
    %v576 = vsel %vm410, %v572, -inf
    %577 = vmax.xlane.f32.xlu0 %v576
    %v578 = vpop.xlane.xlu0 %577
    %v579 = vsub.f32 %v571, %v575
    %v580 = vsub.f32 %v572, %v578
    %v581 = vmul.f32 %v579, 1.442695
    %v582 = vpow.pop %v581
    %v583 = vmul.f32 %v580, 1.442695
    %v584 = vpow.pop %v583
    %v585 = vsel %vm406, %v582, 0.0
    %v586 = vsel %vm407, %v584, 0.0
    %v587 = vsel %vm410, %v585, 0.0
    %588 = vadd.xlane.f32.xlu0 %v587
    %v589 = vpop.xlane.xlu0 %588
    %v590 = vsel %vm410, %v586, 0.0
    %591 = vadd.xlane.f32.xlu0 %v590
    %v592 = vpop.xlane.xlu0 %591
    %v593 = vmax.f32 %v589, 1e-16
    %v594 = vmax.f32 %v592, 1e-16
    %v595 = vrcp.pop %v593
    %v596 = vrcp.pop %v594
    %v597 = vmul.f32 %v585, %v595
    %v598 = vmul.f32 %v586, %v596
    %v599 = vpack.c.bf16 %v598, %v597
    %600 = vrot.lane.b32.xlu0 %v354, 32
    %v601 = vpop.permute.xlu0 %600
    %602 = vrot.lane.b32.xlu0 %v325, 32
    %v603 = vpop.permute.xlu0 %602
    %v605 = vsel %vm235, %v601, 0
    %v608 = vsel %vm235, %v603, 0
    %610 = vmatprep.subr.bf16.mxu0 0
    %611 = vmatpush1.bf16.xpose.msra.mxu0 %v608
    %612 = vmatprep.subr.bf16.mxu0 0
    %613 = vmatpush1.bf16.xpose.msra.mxu0 0
    %614 = vmatprep.subr.bf16.mxu0 0
    %615 = vmatpush1.bf16.xpose.msra.mxu0 0
    %616 = vmatprep.subr.bf16.mxu0 0
    %617 = vmatpush1.bf16.xpose.msra.mxu0 0
    %618 = vmatprep.subr.bf16.mxu0 0
    %619 = vmatpush1.bf16.xpose.msra.mxu0 0
    %620 = vmatprep.subr.bf16.mxu0 0
    %621 = vmatpush1.bf16.xpose.msra.mxu0 0
    %622 = vmatprep.subr.bf16.mxu0 0
    %623 = vmatpush1.bf16.xpose.msra.mxu0 0
    %624 = vmatprep.subr.bf16.mxu0 0
    %625 = vmatpush1.bf16.xpose.msra.mxu0 0
    %626 = vmatprep.subr.bf16.mxu0 0
    %627 = vmatpush1.bf16.xpose.msra.mxu0 0
    %628 = vmatprep.subr.bf16.mxu0 0
    %629 = vmatpush1.bf16.xpose.msra.mxu0 0
    %630 = vmatprep.subr.bf16.mxu0 0
    %631 = vmatpush1.bf16.xpose.msra.mxu0 0
    %632 = vmatprep.subr.bf16.mxu0 0
    %633 = vmatpush1.bf16.xpose.msra.mxu0 0
    %634 = vmatprep.subr.bf16.mxu0 0
    %635 = vmatpush1.bf16.xpose.msra.mxu0 0
    %636 = vmatprep.subr.bf16.mxu0 0
    %637 = vmatpush1.bf16.xpose.msra.mxu0 0
    %638 = vmatprep.subr.bf16.mxu0 0
    %639 = vmatpush1.bf16.xpose.msra.mxu0 0
    %640 = vmatprep.subr.bf16.mxu0 0
    %641 = vmatpush1.bf16.xpose.msra.mxu0 0
    %642 = vmatprep.mubr.bf16.mxu0 0
    %643 = vmatmul.mubr.bf16.gmra.mrb[0].mxu0 %v605
    %v644 = vpop.f32.mrb[0].mxu0
    %v645 = vadd.f32 0.0, %v644
    %v646 = vpop.f32.mrb[0].mxu0
    %v647 = vpop.f32.mrb[0].mxu0
    %v648 = vadd.f32 0.0, %v647
    %v649 = vpop.f32.mrb[0].mxu0
    %650 = vdwg.mxu0
    %v651 = vsel %vm406, %v645, -1e+30
    %v652 = vsel %vm407, %v648, -1e+30
    %v653 = vsel %vm410, %v651, -inf
    %654 = vmax.xlane.f32.xlu0 %v653
    %v655 = vpop.xlane.xlu0 %654
    %v656 = vsel %vm410, %v652, -inf
    %657 = vmax.xlane.f32.xlu0 %v656
    %v658 = vpop.xlane.xlu0 %657
    %v659 = vsub.f32 %v651, %v655
    %v660 = vsub.f32 %v652, %v658
    %v661 = vmul.f32 %v659, 1.442695
    %v662 = vpow.pop %v661
    %v663 = vmul.f32 %v660, 1.442695
    %v664 = vpow.pop %v663
    %v665 = vsel %vm406, %v662, 0.0
    %v666 = vsel %vm407, %v664, 0.0
    %v667 = vsel %vm410, %v665, 0.0
    %668 = vadd.xlane.f32.xlu0 %v667
    %v669 = vpop.xlane.xlu0 %668
    %v670 = vsel %vm410, %v666, 0.0
    %671 = vadd.xlane.f32.xlu0 %v670
    %v672 = vpop.xlane.xlu0 %671
    %v673 = vmax.f32 %v669, 1e-16
    %v674 = vmax.f32 %v672, 1e-16
    %v675 = vrcp.pop %v673
    %v676 = vrcp.pop %v674
    %v677 = vmul.f32 %v665, %v675
    %v678 = vmul.f32 %v666, %v676
    %v679 = vpack.c.bf16 %v678, %v677
    %681 = vrot.lane.b32.xlu0 %v519, 16
    %v682 = vpop.permute.xlu0 %681
    %684 = vrot.lane.b32.xlu0 %v599, 32
    %v685 = vpop.permute.xlu0 %684
    %687 = vrot.lane.b32.xlu0 %v679, 48
    %v688 = vpop.permute.xlu0 %687
    %v691 = vsel %vm410, %v437, %v682
    %v693 = vsel %vm235, %v691, %v685
    %vm694 = vcmask 392192
    %v696 = vsel %vm694, %v693, %v688
    %vm697 = vcmask 523264
    %v698 = vsel %vm697, %v696, 0
    %700 = vmatprep.subr.bf16.mxu0 0
    %701 = vmatpush1.bf16.msra.mxu0 %v346
    %702 = vmatprep.subr.bf16.mxu0 0
    %703 = vmatpush1.bf16.msra.mxu0 %v347
    %704 = vmatprep.subr.bf16.mxu0 0
    %705 = vmatpush1.bf16.msra.mxu0 %v348
    %706 = vmatprep.subr.bf16.mxu0 0
    %707 = vmatpush1.bf16.msra.mxu0 %v349
    %708 = vmatprep.subr.bf16.mxu0 0
    %709 = vmatpush1.bf16.msra.mxu0 0
    %710 = vmatprep.subr.bf16.mxu0 0
    %711 = vmatpush1.bf16.msra.mxu0 0
    %712 = vmatprep.subr.bf16.mxu0 0
    %713 = vmatpush1.bf16.msra.mxu0 0
    %714 = vmatprep.subr.bf16.mxu0 0
    %715 = vmatpush1.bf16.msra.mxu0 0
    %716 = vmatprep.subr.bf16.mxu0 0
    %717 = vmatpush1.bf16.msra.mxu0 0
    %718 = vmatprep.subr.bf16.mxu0 0
    %719 = vmatpush1.bf16.msra.mxu0 0
    %720 = vmatprep.subr.bf16.mxu0 0
    %721 = vmatpush1.bf16.msra.mxu0 0
    %722 = vmatprep.subr.bf16.mxu0 0
    %723 = vmatpush1.bf16.msra.mxu0 0
    %724 = vmatprep.subr.bf16.mxu0 0
    %725 = vmatpush1.bf16.msra.mxu0 0
    %726 = vmatprep.subr.bf16.mxu0 0
    %727 = vmatpush1.bf16.msra.mxu0 0
    %728 = vmatprep.subr.bf16.mxu0 0
    %729 = vmatpush1.bf16.msra.mxu0 0
    %730 = vmatprep.subr.bf16.mxu0 0
    %731 = vmatpush1.bf16.msra.mxu0 0
    %732 = vmatprep.mubr.bf16.mxu0 0
    %733 = vmatmul.mubr.bf16.gmra.mrb[0].mxu0 %v698
    %v734 = vpop.f32.mrb[0].mxu0
    %v735 = vadd.f32 0.0, %v734
    %v736 = vpop.f32.mrb[0].mxu0
    %v737 = vpop.f32.mrb[0].mxu0
    %v738 = vadd.f32 0.0, %v737
    %v739 = vpop.f32.mrb[0].mxu0
    %740 = vdwg.mxu0
    %v741 = vmul.f32 %v735, 0.25
    %v742 = vmul.f32 %v738, 0.25
    %v743 = vlaneseq
    %v744 = vshrl.u32 %v743, 7
    %v745 = vsub.s32 1, %v744
    %v746 = vrot.slane %v156, %v745
    %v747 = vmul.f32 %v741, %v746
    %v748 = vmul.f32 %v742, %v746
    %750 = vrot.lane.b32.xlu0 %v746, 96
    %v751 = vpop.permute.xlu0 %750
    %v753 = vmul.f32 %v319, %v751
    %v754 = vmul.f32 %v323, %v751
    %v755 = vadd.f32 %v747, %v753
    %v756 = vadd.f32 %v748, %v754
    %v757 = vsel %vm235, %v755, 0.0
    %758 = vadd.xlane.f32.xlu0 %v757
    %v759 = vpop.xlane.xlu0 %758
    %v760 = vsel %vm235, %v756, 0.0
    %761 = vadd.xlane.f32.xlu0 %v760
    %v762 = vpop.xlane.xlu0 %761
    %v763 = vxor.u32 %v759, 2147483648
    %v764 = vxor.u32 %v762, 2147483648
    %v765 = vmul.f32 %v763, 1.442695
    %v766 = vpow.pop %v765
    %v767 = vmul.f32 %v764, 1.442695
    %v768 = vpow.pop %v767
    %v769 = vadd.f32 %v766, 1.0
    %v770 = vadd.f32 %v768, 1.0
    %v771 = vrcp.pop %v769
    %v772 = vmul.f32 1.0, %v771
    %v773 = vrcp.pop %v770
    %v774 = vmul.f32 1.0, %v773
    %v775 = vmul.f32 %v772, %v319
    %v776 = vmul.f32 %v774, %v323
    %v777 = vsub.f32 1.0, %v772
    %v778 = vsub.f32 1.0, %v774
    %v779 = vmul.f32 %v777, %v741
    %v780 = vmul.f32 %v778, %v742
    %v781 = vadd.f32 %v775, %v779
    %v782 = vadd.f32 %v776, %v780
    %v783 = vsel %vm235, %v781, 0.0
    %784 = vadd.xlane.f32.xlu0 %v783
    %v785 = vpop.xlane.xlu0 %784
    %v786 = vsel %vm235, %v782, 0.0
    %787 = vadd.xlane.f32.xlu0 %v786
    %v788 = vpop.xlane.xlu0 %787
    %v789 = vrcp.pop 32.0
    %v790 = vmul.f32 %v785, %v789
    %v791 = vmul.f32 %v788, %v789
    %v792 = vsub.f32 %v781, %v790
    %v793 = vsub.f32 %v782, %v791
    %v794 = vmul.f32 %v792, %v792
    %v795 = vmul.f32 %v793, %v793
    %v796 = vsel %vm235, %v794, 0.0
    %797 = vadd.xlane.f32.xlu0 %v796
    %v798 = vpop.xlane.xlu0 %797
    %v799 = vsel %vm235, %v795, 0.0
    %800 = vadd.xlane.f32.xlu0 %v799
    %v801 = vpop.xlane.xlu0 %800
    %v802 = vmul.f32 %v798, %v789
    %v803 = vmul.f32 %v801, %v789
    %v804 = vadd.f32 %v802, 1e-05
    %v805 = vadd.f32 %v803, 1e-05
    %v806 = vrsqrt.pop %v804
    %v807 = vrsqrt.pop %v805
    %v808 = vmul.f32 %v792, %v806
    %v809 = vmul.f32 %v793, %v807
    %810 = vrot.lane.b32.xlu0 %v746, 64
    %v811 = vpop.permute.xlu0 %810
    %v813 = vmul.f32 %v808, %v811
    %v814 = vmul.f32 %v809, %v811
    %815 = vrot.lane.b32.xlu0 %v746, 32
    %v816 = vpop.permute.xlu0 %815
    %v818 = vadd.f32 %v813, %v816
    %v819 = vadd.f32 %v814, %v816
    %v820 = vmax.f32 %v818, 0.0
    %v821 = vmax.f32 %v819, 0.0
    %s822 = scalar_lea.vmem [#allocation7], 64
    %v823 = vld [vmem:[%s822] sm:$0xff]
    %v824 = vld [vmem:[%s822 + $0x8] sm:$0xff]
    %v825 = vld [vmem:[%s822 + $0x10] sm:$0xff]
    %v826 = vld [vmem:[%s822 + $0x18] sm:$0xff]
    %v827 = vld [vmem:[%s822 + $0x20] sm:$0xff]
    %v828 = vld [vmem:[%s822 + $0x28] sm:$0xff]
    %v829 = vld [vmem:[%s822 + $0x30] sm:$0xff]
    %v830 = vld [vmem:[%s822 + $0x38] sm:$0xff]
    %s831 = scalar_lea.vmem [#allocation8], 8
    %v832 = vld [vmem:[%s831] sm:$0xff]
    %v833 = vpack.c.bf16 %v821, %v820
    %v835 = vlaneseq
    %v836 = vshrl.u32 %v835, 7
    %v837 = vsub.s32 0, %v836
    %v838 = vrot.slane %v832, %v837
    %v839 = vlaneseq
    %v840 = vshrl.u32 %v839, 7
    %v841 = vsub.s32 2, %v840
    %v842 = vrot.slane %v832, %v841
    %v843 = vlaneseq
    %v844 = vshrl.u32 %v843, 7
    %v845 = vsub.s32 4, %v844
    %v846 = vrot.slane %v832, %v845
    %v847 = vlaneseq
    %v848 = vshrl.u32 %v847, 7
    %v849 = vsub.s32 6, %v848
    %v850 = vrot.slane %v832, %v849
    %v855 = vlaneseq
    %v856 = vshrl.u32 %v855, 7
    %v857 = vsub.s32 0, %v856
    %v858 = vrot.slane %v838, %v857
    %v859 = vlaneseq
    %v860 = vshrl.u32 %v859, 7
    %v861 = vsub.s32 0, %v860
    %v862 = vrot.slane %v842, %v861
    %v863 = vlaneseq
    %v864 = vshrl.u32 %v863, 7
    %v865 = vsub.s32 0, %v864
    %v866 = vrot.slane %v846, %v865
    %v867 = vlaneseq
    %v868 = vshrl.u32 %v867, 7
    %v869 = vsub.s32 0, %v868
    %v870 = vrot.slane %v850, %v869
    %v879 = vunpack.c.l.b16 %v823
    %v880 = vunpack.c.h.b16 %v823
    %v881 = vunpack.c.l.b16 %v824
    %v882 = vunpack.c.h.b16 %v824
    %v883 = vunpack.c.l.b16 %v825
    %v884 = vunpack.c.h.b16 %v825
    %v885 = vunpack.c.l.b16 %v826
    %v886 = vunpack.c.h.b16 %v826
    %v887 = vunpack.c.l.b16 %v827
    %v888 = vunpack.c.h.b16 %v827
    %v889 = vunpack.c.l.b16 %v828
    %v890 = vunpack.c.h.b16 %v828
    %v891 = vunpack.c.l.b16 %v829
    %v892 = vunpack.c.h.b16 %v829
    %v893 = vunpack.c.l.b16 %v830
    %v894 = vunpack.c.h.b16 %v830
    %v895 = vpack.c.b16 %v883, %v879
    %v896 = vpack.c.b16 %v884, %v880
    %v897 = vpack.c.b16 %v885, %v881
    %v898 = vpack.c.b16 %v886, %v882
    %v899 = vpack.c.b16 %v891, %v887
    %v900 = vpack.c.b16 %v892, %v888
    %v901 = vpack.c.b16 %v893, %v889
    %v902 = vpack.c.b16 %v894, %v890
    %v912 = vsel %vm235, %v833, 0
    %914 = vmatprep.subr.bf16.mxu0 %v896
    %915 = vmatpush1.bf16.msra.mxu0 %v895
    %916 = vmatprep.subr.bf16.mxu0 %v900
    %917 = vmatpush1.bf16.msra.mxu0 %v899
    %918 = vmatprep.subr.bf16.mxu0 0
    %919 = vmatpush1.bf16.msra.mxu0 0
    %920 = vmatprep.subr.bf16.mxu0 0
    %921 = vmatpush1.bf16.msra.mxu0 0
    %922 = vmatprep.subr.bf16.mxu0 0
    %923 = vmatpush1.bf16.msra.mxu0 0
    %924 = vmatprep.subr.bf16.mxu0 0
    %925 = vmatpush1.bf16.msra.mxu0 0
    %926 = vmatprep.subr.bf16.mxu0 0
    %927 = vmatpush1.bf16.msra.mxu0 0
    %928 = vmatprep.subr.bf16.mxu0 0
    %929 = vmatpush1.bf16.msra.mxu0 0
    %930 = vmatprep.subr.bf16.mxu0 0
    %931 = vmatpush1.bf16.msra.mxu0 0
    %932 = vmatprep.subr.bf16.mxu0 0
    %933 = vmatpush1.bf16.msra.mxu0 0
    %934 = vmatprep.subr.bf16.mxu0 0
    %935 = vmatpush1.bf16.msra.mxu0 0
    %936 = vmatprep.subr.bf16.mxu0 0
    %937 = vmatpush1.bf16.msra.mxu0 0
    %938 = vmatprep.subr.bf16.mxu0 0
    %939 = vmatpush1.bf16.msra.mxu0 0
    %940 = vmatprep.subr.bf16.mxu0 0
    %941 = vmatpush1.bf16.msra.mxu0 0
    %942 = vmatprep.subr.bf16.mxu0 0
    %943 = vmatpush1.bf16.msra.mxu0 0
    %944 = vmatprep.subr.bf16.mxu0 0
    %945 = vmatpush1.bf16.msra.mxu0 0
    %946 = vmatprep.mubr.bf16.mxu0 0
    %947 = vmatmul.mubr.bf16.gmra.mrb[0].mxu0 %v912
    %v948 = vpop.f32.mrb[0].mxu0
    %v949 = vadd.f32 %v858, %v948
    %v950 = vpop.f32.mrb[0].mxu0
    %v951 = vadd.f32 %v862, %v950
    %v952 = vpop.f32.mrb[0].mxu0
    %v953 = vadd.f32 %v858, %v952
    %v954 = vpop.f32.mrb[0].mxu0
    %v955 = vadd.f32 %v862, %v954
    %956 = vdwg.mxu0
    %957 = vmatprep.subr.bf16.mxu0 %v898
    %958 = vmatpush1.bf16.msra.mxu0 %v897
    %959 = vmatprep.subr.bf16.mxu0 %v902
    %960 = vmatpush1.bf16.msra.mxu0 %v901
    %961 = vmatprep.subr.bf16.mxu0 0
    %962 = vmatpush1.bf16.msra.mxu0 0
    %963 = vmatprep.subr.bf16.mxu0 0
    %964 = vmatpush1.bf16.msra.mxu0 0
    %965 = vmatprep.subr.bf16.mxu0 0
    %966 = vmatpush1.bf16.msra.mxu0 0
    %967 = vmatprep.subr.bf16.mxu0 0
    %968 = vmatpush1.bf16.msra.mxu0 0
    %969 = vmatprep.subr.bf16.mxu0 0
    %970 = vmatpush1.bf16.msra.mxu0 0
    %971 = vmatprep.subr.bf16.mxu0 0
    %972 = vmatpush1.bf16.msra.mxu0 0
    %973 = vmatprep.subr.bf16.mxu0 0
    %974 = vmatpush1.bf16.msra.mxu0 0
    %975 = vmatprep.subr.bf16.mxu0 0
    %976 = vmatpush1.bf16.msra.mxu0 0
    %977 = vmatprep.subr.bf16.mxu0 0
    %978 = vmatpush1.bf16.msra.mxu0 0
    %979 = vmatprep.subr.bf16.mxu0 0
    %980 = vmatpush1.bf16.msra.mxu0 0
    %981 = vmatprep.subr.bf16.mxu0 0
    %982 = vmatpush1.bf16.msra.mxu0 0
    %983 = vmatprep.subr.bf16.mxu0 0
    %984 = vmatpush1.bf16.msra.mxu0 0
    %985 = vmatprep.subr.bf16.mxu0 0
    %986 = vmatpush1.bf16.msra.mxu0 0
    %987 = vmatprep.subr.bf16.mxu0 0
    %988 = vmatpush1.bf16.msra.mxu0 0
    %989 = vmatprep.mubr.bf16.mxu0 0
    %990 = vmatmul.mubr.bf16.gmra.mrb[0].mxu0 %v912
    %v991 = vpop.f32.mrb[0].mxu0
    %v992 = vadd.f32 %v866, %v991
    %v993 = vpop.f32.mrb[0].mxu0
    %v994 = vadd.f32 %v870, %v993
    %v995 = vpop.f32.mrb[0].mxu0
    %v996 = vadd.f32 %v866, %v995
    %v997 = vpop.f32.mrb[0].mxu0
    %v998 = vadd.f32 %v870, %v997
    %999 = vdwg.mxu0
    %v1000 = vpack.c.bf16 %v955, %v951
    %1003 = vrot.lane.b32.xlu0 %v992, 96
    %v1004 = vpop.permute.xlu0 %1003
    %1005 = vrot.lane.b32.xlu0 %v996, 96
    %v1006 = vpop.permute.xlu0 %1005
    %1009 = vrot.lane.b32.xlu0 %v992, 64
    %v1010 = vpop.permute.xlu0 %1009
    %1011 = vrot.lane.b32.xlu0 %v996, 64
    %v1012 = vpop.permute.xlu0 %1011
    %1015 = vrot.lane.b32.xlu0 %v992, 32
    %v1016 = vpop.permute.xlu0 %1015
    %1017 = vrot.lane.b32.xlu0 %v996, 32
    %v1018 = vpop.permute.xlu0 %1017
    %v1021 = vpack.c.bf16 %v996, %v992
    %v1022 = vpack.c.bf16 %v1006, %v1004
    %v1023 = vpack.c.bf16 %v1012, %v1010
    %v1024 = vpack.c.bf16 %v1018, %v1016
    %v1025 = vpack.c.bf16 %v953, %v949
    %v1027 = vsel %vm235, %v1025, 0
    %v1030 = vsel %vm235, %v1000, 0
    %1032 = vmatprep.subr.bf16.mxu0 0
    %1033 = vmatpush1.bf16.xpose.msra.mxu0 %v1030
    %1034 = vmatprep.subr.bf16.mxu0 0
    %1035 = vmatpush1.bf16.xpose.msra.mxu0 0
    %1036 = vmatprep.subr.bf16.mxu0 0
    %1037 = vmatpush1.bf16.xpose.msra.mxu0 0
    %1038 = vmatprep.subr.bf16.mxu0 0
    %1039 = vmatpush1.bf16.xpose.msra.mxu0 0
    %1040 = vmatprep.subr.bf16.mxu0 0
    %1041 = vmatpush1.bf16.xpose.msra.mxu0 0
    %1042 = vmatprep.subr.bf16.mxu0 0
    %1043 = vmatpush1.bf16.xpose.msra.mxu0 0
    %1044 = vmatprep.subr.bf16.mxu0 0
    %1045 = vmatpush1.bf16.xpose.msra.mxu0 0
    %1046 = vmatprep.subr.bf16.mxu0 0
    %1047 = vmatpush1.bf16.xpose.msra.mxu0 0
    %1048 = vmatprep.subr.bf16.mxu0 0
    %1049 = vmatpush1.bf16.xpose.msra.mxu0 0
    %1050 = vmatprep.subr.bf16.mxu0 0
    %1051 = vmatpush1.bf16.xpose.msra.mxu0 0
    %1052 = vmatprep.subr.bf16.mxu0 0
    %1053 = vmatpush1.bf16.xpose.msra.mxu0 0
    %1054 = vmatprep.subr.bf16.mxu0 0
    %1055 = vmatpush1.bf16.xpose.msra.mxu0 0
    %1056 = vmatprep.subr.bf16.mxu0 0
    %1057 = vmatpush1.bf16.xpose.msra.mxu0 0
    %1058 = vmatprep.subr.bf16.mxu0 0
    %1059 = vmatpush1.bf16.xpose.msra.mxu0 0
    %1060 = vmatprep.subr.bf16.mxu0 0
    %1061 = vmatpush1.bf16.xpose.msra.mxu0 0
    %1062 = vmatprep.subr.bf16.mxu0 0
    %1063 = vmatpush1.bf16.xpose.msra.mxu0 0
    %1064 = vmatprep.mubr.bf16.mxu0 0
    %1065 = vmatmul.mubr.bf16.gmra.mrb[0].mxu0 %v1027
    %v1066 = vpop.f32.mrb[0].mxu0
    %v1067 = vadd.f32 0.0, %v1066
    %v1068 = vpop.f32.mrb[0].mxu0
    %v1069 = vpop.f32.mrb[0].mxu0
    %v1070 = vadd.f32 0.0, %v1069
    %v1071 = vpop.f32.mrb[0].mxu0
    %1072 = vdwg.mxu0
    %v1073 = vsel %vm406, %v1067, -1e+30
    %v1074 = vsel %vm407, %v1070, -1e+30
    %v1075 = vsel %vm410, %v1073, -inf
    %1076 = vmax.xlane.f32.xlu0 %v1075
    %v1077 = vpop.xlane.xlu0 %1076
    %v1078 = vsel %vm410, %v1074, -inf
    %1079 = vmax.xlane.f32.xlu0 %v1078
    %v1080 = vpop.xlane.xlu0 %1079
    %v1081 = vsub.f32 %v1073, %v1077
    %v1082 = vsub.f32 %v1074, %v1080
    %v1083 = vmul.f32 %v1081, 1.442695
    %v1084 = vpow.pop %v1083
    %v1085 = vmul.f32 %v1082, 1.442695
    %v1086 = vpow.pop %v1085
    %v1087 = vsel %vm406, %v1084, 0.0
    %v1088 = vsel %vm407, %v1086, 0.0
    %v1089 = vsel %vm410, %v1087, 0.0
    %1090 = vadd.xlane.f32.xlu0 %v1089
    %v1091 = vpop.xlane.xlu0 %1090
    %v1092 = vsel %vm410, %v1088, 0.0
    %1093 = vadd.xlane.f32.xlu0 %v1092
    %v1094 = vpop.xlane.xlu0 %1093
    %v1095 = vmax.f32 %v1091, 1e-16
    %v1096 = vmax.f32 %v1094, 1e-16
    %v1097 = vrcp.pop %v1095
    %v1098 = vrcp.pop %v1096
    %v1099 = vmul.f32 %v1087, %v1097
    %v1100 = vmul.f32 %v1088, %v1098
    %v1101 = vpack.c.bf16 %v1100, %v1099
    %1103 = vrot.lane.b32.xlu0 %v1025, 96
    %v1104 = vpop.permute.xlu0 %1103
    %1106 = vrot.lane.b32.xlu0 %v1000, 96
    %v1107 = vpop.permute.xlu0 %1106
    %v1109 = vsel %vm235, %v1104, 0
    %v1112 = vsel %vm235, %v1107, 0
    %1114 = vmatprep.subr.bf16.mxu0 0
    %1115 = vmatpush1.bf16.xpose.msra.mxu0 %v1112
    %1116 = vmatprep.subr.bf16.mxu0 0
    %1117 = vmatpush1.bf16.xpose.msra.mxu0 0
    %1118 = vmatprep.subr.bf16.mxu0 0
    %1119 = vmatpush1.bf16.xpose.msra.mxu0 0
    %1120 = vmatprep.subr.bf16.mxu0 0
    %1121 = vmatpush1.bf16.xpose.msra.mxu0 0
    %1122 = vmatprep.subr.bf16.mxu0 0
    %1123 = vmatpush1.bf16.xpose.msra.mxu0 0
    %1124 = vmatprep.subr.bf16.mxu0 0
    %1125 = vmatpush1.bf16.xpose.msra.mxu0 0
    %1126 = vmatprep.subr.bf16.mxu0 0
    %1127 = vmatpush1.bf16.xpose.msra.mxu0 0
    %1128 = vmatprep.subr.bf16.mxu0 0
    %1129 = vmatpush1.bf16.xpose.msra.mxu0 0
    %1130 = vmatprep.subr.bf16.mxu0 0
    %1131 = vmatpush1.bf16.xpose.msra.mxu0 0
    %1132 = vmatprep.subr.bf16.mxu0 0
    %1133 = vmatpush1.bf16.xpose.msra.mxu0 0
    %1134 = vmatprep.subr.bf16.mxu0 0
    %1135 = vmatpush1.bf16.xpose.msra.mxu0 0
    %1136 = vmatprep.subr.bf16.mxu0 0
    %1137 = vmatpush1.bf16.xpose.msra.mxu0 0
    %1138 = vmatprep.subr.bf16.mxu0 0
    %1139 = vmatpush1.bf16.xpose.msra.mxu0 0
    %1140 = vmatprep.subr.bf16.mxu0 0
    %1141 = vmatpush1.bf16.xpose.msra.mxu0 0
    %1142 = vmatprep.subr.bf16.mxu0 0
    %1143 = vmatpush1.bf16.xpose.msra.mxu0 0
    %1144 = vmatprep.subr.bf16.mxu0 0
    %1145 = vmatpush1.bf16.xpose.msra.mxu0 0
    %1146 = vmatprep.mubr.bf16.mxu0 0
    %1147 = vmatmul.mubr.bf16.gmra.mrb[0].mxu0 %v1109
    %v1148 = vpop.f32.mrb[0].mxu0
    %v1149 = vadd.f32 0.0, %v1148
    %v1150 = vpop.f32.mrb[0].mxu0
    %v1151 = vpop.f32.mrb[0].mxu0
    %v1152 = vadd.f32 0.0, %v1151
    %v1153 = vpop.f32.mrb[0].mxu0
    %1154 = vdwg.mxu0
    %v1155 = vsel %vm406, %v1149, -1e+30
    %v1156 = vsel %vm407, %v1152, -1e+30
    %v1157 = vsel %vm410, %v1155, -inf
    %1158 = vmax.xlane.f32.xlu0 %v1157
    %v1159 = vpop.xlane.xlu0 %1158
    %v1160 = vsel %vm410, %v1156, -inf
    %1161 = vmax.xlane.f32.xlu0 %v1160
    %v1162 = vpop.xlane.xlu0 %1161
    %v1163 = vsub.f32 %v1155, %v1159
    %v1164 = vsub.f32 %v1156, %v1162
    %v1165 = vmul.f32 %v1163, 1.442695
    %v1166 = vpow.pop %v1165
    %v1167 = vmul.f32 %v1164, 1.442695
    %v1168 = vpow.pop %v1167
    %v1169 = vsel %vm406, %v1166, 0.0
    %v1170 = vsel %vm407, %v1168, 0.0
    %v1171 = vsel %vm410, %v1169, 0.0
    %1172 = vadd.xlane.f32.xlu0 %v1171
    %v1173 = vpop.xlane.xlu0 %1172
    %v1174 = vsel %vm410, %v1170, 0.0
    %1175 = vadd.xlane.f32.xlu0 %v1174
    %v1176 = vpop.xlane.xlu0 %1175
    %v1177 = vmax.f32 %v1173, 1e-16
    %v1178 = vmax.f32 %v1176, 1e-16
    %v1179 = vrcp.pop %v1177
    %v1180 = vrcp.pop %v1178
    %v1181 = vmul.f32 %v1169, %v1179
    %v1182 = vmul.f32 %v1170, %v1180
    %v1183 = vpack.c.bf16 %v1182, %v1181
    %1184 = vrot.lane.b32.xlu0 %v1025, 64
    %v1185 = vpop.permute.xlu0 %1184
    %1186 = vrot.lane.b32.xlu0 %v1000, 64
    %v1187 = vpop.permute.xlu0 %1186
    %v1189 = vsel %vm235, %v1185, 0
    %v1192 = vsel %vm235, %v1187, 0
    %1194 = vmatprep.subr.bf16.mxu0 0
    %1195 = vmatpush1.bf16.xpose.msra.mxu0 %v1192
    %1196 = vmatprep.subr.bf16.mxu0 0
    %1197 = vmatpush1.bf16.xpose.msra.mxu0 0
    %1198 = vmatprep.subr.bf16.mxu0 0
    %1199 = vmatpush1.bf16.xpose.msra.mxu0 0
    %1200 = vmatprep.subr.bf16.mxu0 0
    %1201 = vmatpush1.bf16.xpose.msra.mxu0 0
    %1202 = vmatprep.subr.bf16.mxu0 0
    %1203 = vmatpush1.bf16.xpose.msra.mxu0 0
    %1204 = vmatprep.subr.bf16.mxu0 0
    %1205 = vmatpush1.bf16.xpose.msra.mxu0 0
    %1206 = vmatprep.subr.bf16.mxu0 0
    %1207 = vmatpush1.bf16.xpose.msra.mxu0 0
    %1208 = vmatprep.subr.bf16.mxu0 0
    %1209 = vmatpush1.bf16.xpose.msra.mxu0 0
    %1210 = vmatprep.subr.bf16.mxu0 0
    %1211 = vmatpush1.bf16.xpose.msra.mxu0 0
    %1212 = vmatprep.subr.bf16.mxu0 0
    %1213 = vmatpush1.bf16.xpose.msra.mxu0 0
    %1214 = vmatprep.subr.bf16.mxu0 0
    %1215 = vmatpush1.bf16.xpose.msra.mxu0 0
    %1216 = vmatprep.subr.bf16.mxu0 0
    %1217 = vmatpush1.bf16.xpose.msra.mxu0 0
    %1218 = vmatprep.subr.bf16.mxu0 0
    %1219 = vmatpush1.bf16.xpose.msra.mxu0 0
    %1220 = vmatprep.subr.bf16.mxu0 0
    %1221 = vmatpush1.bf16.xpose.msra.mxu0 0
    %1222 = vmatprep.subr.bf16.mxu0 0
    %1223 = vmatpush1.bf16.xpose.msra.mxu0 0
    %1224 = vmatprep.subr.bf16.mxu0 0
    %1225 = vmatpush1.bf16.xpose.msra.mxu0 0
    %1226 = vmatprep.mubr.bf16.mxu0 0
    %1227 = vmatmul.mubr.bf16.gmra.mrb[0].mxu0 %v1189
    %v1228 = vpop.f32.mrb[0].mxu0
    %v1229 = vadd.f32 0.0, %v1228
    %v1230 = vpop.f32.mrb[0].mxu0
    %v1231 = vpop.f32.mrb[0].mxu0
    %v1232 = vadd.f32 0.0, %v1231
    %v1233 = vpop.f32.mrb[0].mxu0
    %1234 = vdwg.mxu0
    %v1235 = vsel %vm406, %v1229, -1e+30
    %v1236 = vsel %vm407, %v1232, -1e+30
    %v1237 = vsel %vm410, %v1235, -inf
    %1238 = vmax.xlane.f32.xlu0 %v1237
    %v1239 = vpop.xlane.xlu0 %1238
    %v1240 = vsel %vm410, %v1236, -inf
    %1241 = vmax.xlane.f32.xlu0 %v1240
    %v1242 = vpop.xlane.xlu0 %1241
    %v1243 = vsub.f32 %v1235, %v1239
    %v1244 = vsub.f32 %v1236, %v1242
    %v1245 = vmul.f32 %v1243, 1.442695
    %v1246 = vpow.pop %v1245
    %v1247 = vmul.f32 %v1244, 1.442695
    %v1248 = vpow.pop %v1247
    %v1249 = vsel %vm406, %v1246, 0.0
    %v1250 = vsel %vm407, %v1248, 0.0
    %v1251 = vsel %vm410, %v1249, 0.0
    %1252 = vadd.xlane.f32.xlu0 %v1251
    %v1253 = vpop.xlane.xlu0 %1252
    %v1254 = vsel %vm410, %v1250, 0.0
    %1255 = vadd.xlane.f32.xlu0 %v1254
    %v1256 = vpop.xlane.xlu0 %1255
    %v1257 = vmax.f32 %v1253, 1e-16
    %v1258 = vmax.f32 %v1256, 1e-16
    %v1259 = vrcp.pop %v1257
    %v1260 = vrcp.pop %v1258
    %v1261 = vmul.f32 %v1249, %v1259
    %v1262 = vmul.f32 %v1250, %v1260
    %v1263 = vpack.c.bf16 %v1262, %v1261
    %1264 = vrot.lane.b32.xlu0 %v1025, 32
    %v1265 = vpop.permute.xlu0 %1264
    %1266 = vrot.lane.b32.xlu0 %v1000, 32
    %v1267 = vpop.permute.xlu0 %1266
    %v1269 = vsel %vm235, %v1265, 0
    %v1272 = vsel %vm235, %v1267, 0
    %1274 = vmatprep.subr.bf16.mxu0 0
    %1275 = vmatpush1.bf16.xpose.msra.mxu0 %v1272
    %1276 = vmatprep.subr.bf16.mxu0 0
    %1277 = vmatpush1.bf16.xpose.msra.mxu0 0
    %1278 = vmatprep.subr.bf16.mxu0 0
    %1279 = vmatpush1.bf16.xpose.msra.mxu0 0
    %1280 = vmatprep.subr.bf16.mxu0 0
    %1281 = vmatpush1.bf16.xpose.msra.mxu0 0
    %1282 = vmatprep.subr.bf16.mxu0 0
    %1283 = vmatpush1.bf16.xpose.msra.mxu0 0
    %1284 = vmatprep.subr.bf16.mxu0 0
    %1285 = vmatpush1.bf16.xpose.msra.mxu0 0
    %1286 = vmatprep.subr.bf16.mxu0 0
    %1287 = vmatpush1.bf16.xpose.msra.mxu0 0
    %1288 = vmatprep.subr.bf16.mxu0 0
    %1289 = vmatpush1.bf16.xpose.msra.mxu0 0
    %1290 = vmatprep.subr.bf16.mxu0 0
    %1291 = vmatpush1.bf16.xpose.msra.mxu0 0
    %1292 = vmatprep.subr.bf16.mxu0 0
    %1293 = vmatpush1.bf16.xpose.msra.mxu0 0
    %1294 = vmatprep.subr.bf16.mxu0 0
    %1295 = vmatpush1.bf16.xpose.msra.mxu0 0
    %1296 = vmatprep.subr.bf16.mxu0 0
    %1297 = vmatpush1.bf16.xpose.msra.mxu0 0
    %1298 = vmatprep.subr.bf16.mxu0 0
    %1299 = vmatpush1.bf16.xpose.msra.mxu0 0
    %1300 = vmatprep.subr.bf16.mxu0 0
    %1301 = vmatpush1.bf16.xpose.msra.mxu0 0
    %1302 = vmatprep.subr.bf16.mxu0 0
    %1303 = vmatpush1.bf16.xpose.msra.mxu0 0
    %1304 = vmatprep.subr.bf16.mxu0 0
    %1305 = vmatpush1.bf16.xpose.msra.mxu0 0
    %1306 = vmatprep.mubr.bf16.mxu0 0
    %1307 = vmatmul.mubr.bf16.gmra.mrb[0].mxu0 %v1269
    %v1308 = vpop.f32.mrb[0].mxu0
    %v1309 = vadd.f32 0.0, %v1308
    %v1310 = vpop.f32.mrb[0].mxu0
    %v1311 = vpop.f32.mrb[0].mxu0
    %v1312 = vadd.f32 0.0, %v1311
    %v1313 = vpop.f32.mrb[0].mxu0
    %1314 = vdwg.mxu0
    %v1315 = vsel %vm406, %v1309, -1e+30
    %v1316 = vsel %vm407, %v1312, -1e+30
    %v1317 = vsel %vm410, %v1315, -inf
    %1318 = vmax.xlane.f32.xlu0 %v1317
    %v1319 = vpop.xlane.xlu0 %1318
    %v1320 = vsel %vm410, %v1316, -inf
    %1321 = vmax.xlane.f32.xlu0 %v1320
    %v1322 = vpop.xlane.xlu0 %1321
    %v1323 = vsub.f32 %v1315, %v1319
    %v1324 = vsub.f32 %v1316, %v1322
    %v1325 = vmul.f32 %v1323, 1.442695
    %v1326 = vpow.pop %v1325
    %v1327 = vmul.f32 %v1324, 1.442695
    %v1328 = vpow.pop %v1327
    %v1329 = vsel %vm406, %v1326, 0.0
    %v1330 = vsel %vm407, %v1328, 0.0
    %v1331 = vsel %vm410, %v1329, 0.0
    %1332 = vadd.xlane.f32.xlu0 %v1331
    %v1333 = vpop.xlane.xlu0 %1332
    %v1334 = vsel %vm410, %v1330, 0.0
    %1335 = vadd.xlane.f32.xlu0 %v1334
    %v1336 = vpop.xlane.xlu0 %1335
    %v1337 = vmax.f32 %v1333, 1e-16
    %v1338 = vmax.f32 %v1336, 1e-16
    %v1339 = vrcp.pop %v1337
    %v1340 = vrcp.pop %v1338
    %v1341 = vmul.f32 %v1329, %v1339
    %v1342 = vmul.f32 %v1330, %v1340
    %v1343 = vpack.c.bf16 %v1342, %v1341
    %1345 = vrot.lane.b32.xlu0 %v1183, 16
    %v1346 = vpop.permute.xlu0 %1345
    %1348 = vrot.lane.b32.xlu0 %v1263, 32
    %v1349 = vpop.permute.xlu0 %1348
    %1351 = vrot.lane.b32.xlu0 %v1343, 48
    %v1352 = vpop.permute.xlu0 %1351
    %v1355 = vsel %vm410, %v1101, %v1346
    %v1357 = vsel %vm235, %v1355, %v1349
    %v1359 = vsel %vm694, %v1357, %v1352
    %v1360 = vsel %vm697, %v1359, 0
    %1362 = vmatprep.subr.bf16.mxu0 0
    %1363 = vmatpush1.bf16.msra.mxu0 %v1021
    %1364 = vmatprep.subr.bf16.mxu0 0
    %1365 = vmatpush1.bf16.msra.mxu0 %v1022
    %1366 = vmatprep.subr.bf16.mxu0 0
    %1367 = vmatpush1.bf16.msra.mxu0 %v1023
    %1368 = vmatprep.subr.bf16.mxu0 0
    %1369 = vmatpush1.bf16.msra.mxu0 %v1024
    %1370 = vmatprep.subr.bf16.mxu0 0
    %1371 = vmatpush1.bf16.msra.mxu0 0
    %1372 = vmatprep.subr.bf16.mxu0 0
    %1373 = vmatpush1.bf16.msra.mxu0 0
    %1374 = vmatprep.subr.bf16.mxu0 0
    %1375 = vmatpush1.bf16.msra.mxu0 0
    %1376 = vmatprep.subr.bf16.mxu0 0
    %1377 = vmatpush1.bf16.msra.mxu0 0
    %1378 = vmatprep.subr.bf16.mxu0 0
    %1379 = vmatpush1.bf16.msra.mxu0 0
    %1380 = vmatprep.subr.bf16.mxu0 0
    %1381 = vmatpush1.bf16.msra.mxu0 0
    %1382 = vmatprep.subr.bf16.mxu0 0
    %1383 = vmatpush1.bf16.msra.mxu0 0
    %1384 = vmatprep.subr.bf16.mxu0 0
    %1385 = vmatpush1.bf16.msra.mxu0 0
    %1386 = vmatprep.subr.bf16.mxu0 0
    %1387 = vmatpush1.bf16.msra.mxu0 0
    %1388 = vmatprep.subr.bf16.mxu0 0
    %1389 = vmatpush1.bf16.msra.mxu0 0
    %1390 = vmatprep.subr.bf16.mxu0 0
    %1391 = vmatpush1.bf16.msra.mxu0 0
    %1392 = vmatprep.subr.bf16.mxu0 0
    %1393 = vmatpush1.bf16.msra.mxu0 0
    %1394 = vmatprep.mubr.bf16.mxu0 0
    %1395 = vmatmul.mubr.bf16.gmra.mrb[0].mxu0 %v1360
    %v1396 = vpop.f32.mrb[0].mxu0
    %v1397 = vadd.f32 0.0, %v1396
    %v1398 = vpop.f32.mrb[0].mxu0
    %v1399 = vpop.f32.mrb[0].mxu0
    %v1400 = vadd.f32 0.0, %v1399
    %v1401 = vpop.f32.mrb[0].mxu0
    %1402 = vdwg.mxu0
    %v1403 = vmul.f32 %v1397, 0.25
    %v1404 = vmul.f32 %v1400, 0.25
    %v1405 = vlaneseq
    %v1406 = vshrl.u32 %v1405, 7
    %v1407 = vsub.s32 1, %v1406
    %v1408 = vrot.slane %v832, %v1407
    %v1409 = vmul.f32 %v1403, %v1408
    %v1410 = vmul.f32 %v1404, %v1408
    %1412 = vrot.lane.b32.xlu0 %v1408, 96
    %v1413 = vpop.permute.xlu0 %1412
    %v1415 = vmul.f32 %v994, %v1413
    %v1416 = vmul.f32 %v998, %v1413
    %v1417 = vadd.f32 %v1409, %v1415
    %v1418 = vadd.f32 %v1410, %v1416
    %v1419 = vsel %vm235, %v1417, 0.0
    %1420 = vadd.xlane.f32.xlu0 %v1419
    %v1421 = vpop.xlane.xlu0 %1420
    %v1422 = vsel %vm235, %v1418, 0.0
    %1423 = vadd.xlane.f32.xlu0 %v1422
    %v1424 = vpop.xlane.xlu0 %1423
    %v1425 = vxor.u32 %v1421, 2147483648
    %v1426 = vxor.u32 %v1424, 2147483648
    %v1427 = vmul.f32 %v1425, 1.442695
    %v1428 = vpow.pop %v1427
    %v1429 = vmul.f32 %v1426, 1.442695
    %v1430 = vpow.pop %v1429
    %v1431 = vadd.f32 %v1428, 1.0
    %v1432 = vadd.f32 %v1430, 1.0
    %v1433 = vrcp.pop %v1431
    %v1434 = vmul.f32 1.0, %v1433
    %v1435 = vrcp.pop %v1432
    %v1436 = vmul.f32 1.0, %v1435
    %v1437 = vmul.f32 %v1434, %v994
    %v1438 = vmul.f32 %v1436, %v998
    %v1439 = vsub.f32 1.0, %v1434
    %v1440 = vsub.f32 1.0, %v1436
    %v1441 = vmul.f32 %v1439, %v1403
    %v1442 = vmul.f32 %v1440, %v1404
    %v1443 = vadd.f32 %v1437, %v1441
    %v1444 = vadd.f32 %v1438, %v1442
    %v1445 = vsel %vm235, %v1443, 0.0
    %1446 = vadd.xlane.f32.xlu0 %v1445
    %v1447 = vpop.xlane.xlu0 %1446
    %v1448 = vsel %vm235, %v1444, 0.0
    %1449 = vadd.xlane.f32.xlu0 %v1448
    %v1450 = vpop.xlane.xlu0 %1449
    %v1451 = vmul.f32 %v1447, %v789
    %v1452 = vmul.f32 %v1450, %v789
    %v1453 = vsub.f32 %v1443, %v1451
    %v1454 = vsub.f32 %v1444, %v1452
    %v1455 = vmul.f32 %v1453, %v1453
    %v1456 = vmul.f32 %v1454, %v1454
    %v1457 = vsel %vm235, %v1455, 0.0
    %1458 = vadd.xlane.f32.xlu0 %v1457
    %v1459 = vpop.xlane.xlu0 %1458
    %v1460 = vsel %vm235, %v1456, 0.0
    %1461 = vadd.xlane.f32.xlu0 %v1460
    %v1462 = vpop.xlane.xlu0 %1461
    %v1463 = vmul.f32 %v1459, %v789
    %v1464 = vmul.f32 %v1462, %v789
    %v1465 = vadd.f32 %v1463, 1e-05
    %v1466 = vadd.f32 %v1464, 1e-05
    %v1467 = vrsqrt.pop %v1465
    %v1468 = vrsqrt.pop %v1466
    %v1469 = vmul.f32 %v1453, %v1467
    %v1470 = vmul.f32 %v1454, %v1468
    %1471 = vrot.lane.b32.xlu0 %v1408, 64
    %v1472 = vpop.permute.xlu0 %1471
    %v1474 = vmul.f32 %v1469, %v1472
    %v1475 = vmul.f32 %v1470, %v1472
    %1476 = vrot.lane.b32.xlu0 %v1408, 32
    %v1477 = vpop.permute.xlu0 %1476
    %v1479 = vadd.f32 %v1474, %v1477
    %v1480 = vadd.f32 %v1475, %v1477
    %v1481 = vmax.f32 %v1479, 0.0
    %v1482 = vmax.f32 %v1480, 0.0
    %s1483 = scalar_lea.vmem [#allocation7], 128
    %v1484 = vld [vmem:[%s1483] sm:$0xff]
    %v1485 = vld [vmem:[%s1483 + $0x8] sm:$0xff]
    %v1486 = vld [vmem:[%s1483 + $0x10] sm:$0xff]
    %v1487 = vld [vmem:[%s1483 + $0x18] sm:$0xff]
    %v1488 = vld [vmem:[%s1483 + $0x20] sm:$0xff]
    %v1489 = vld [vmem:[%s1483 + $0x28] sm:$0xff]
    %v1490 = vld [vmem:[%s1483 + $0x30] sm:$0xff]
    %v1491 = vld [vmem:[%s1483 + $0x38] sm:$0xff]
    %s1492 = scalar_lea.vmem [#allocation8], 16
    %v1493 = vld [vmem:[%s1492] sm:$0xff]
    %v1494 = vpack.c.bf16 %v1482, %v1481
    %v1496 = vlaneseq
    %v1497 = vshrl.u32 %v1496, 7
    %v1498 = vsub.s32 0, %v1497
    %v1499 = vrot.slane %v1493, %v1498
    %v1500 = vlaneseq
    %v1501 = vshrl.u32 %v1500, 7
    %v1502 = vsub.s32 2, %v1501
    %v1503 = vrot.slane %v1493, %v1502
    %v1504 = vlaneseq
    %v1505 = vshrl.u32 %v1504, 7
    %v1506 = vsub.s32 4, %v1505
    %v1507 = vrot.slane %v1493, %v1506
    %v1508 = vlaneseq
    %v1509 = vshrl.u32 %v1508, 7
    %v1510 = vsub.s32 6, %v1509
    %v1511 = vrot.slane %v1493, %v1510
    %v1516 = vlaneseq
    %v1517 = vshrl.u32 %v1516, 7
    %v1518 = vsub.s32 0, %v1517
    %v1519 = vrot.slane %v1499, %v1518
    %v1520 = vlaneseq
    %v1521 = vshrl.u32 %v1520, 7
    %v1522 = vsub.s32 0, %v1521
    %v1523 = vrot.slane %v1503, %v1522
    %v1524 = vlaneseq
    %v1525 = vshrl.u32 %v1524, 7
    %v1526 = vsub.s32 0, %v1525
    %v1527 = vrot.slane %v1507, %v1526
    %v1528 = vlaneseq
    %v1529 = vshrl.u32 %v1528, 7
    %v1530 = vsub.s32 0, %v1529
    %v1531 = vrot.slane %v1511, %v1530
    %v1540 = vunpack.c.l.b16 %v1484
    %v1541 = vunpack.c.h.b16 %v1484
    %v1542 = vunpack.c.l.b16 %v1485
    %v1543 = vunpack.c.h.b16 %v1485
    %v1544 = vunpack.c.l.b16 %v1486
    %v1545 = vunpack.c.h.b16 %v1486
    %v1546 = vunpack.c.l.b16 %v1487
    %v1547 = vunpack.c.h.b16 %v1487
    %v1548 = vunpack.c.l.b16 %v1488
    %v1549 = vunpack.c.h.b16 %v1488
    %v1550 = vunpack.c.l.b16 %v1489
    %v1551 = vunpack.c.h.b16 %v1489
    %v1552 = vunpack.c.l.b16 %v1490
    %v1553 = vunpack.c.h.b16 %v1490
    %v1554 = vunpack.c.l.b16 %v1491
    %v1555 = vunpack.c.h.b16 %v1491
    %v1556 = vpack.c.b16 %v1544, %v1540
    %v1557 = vpack.c.b16 %v1545, %v1541
    %v1558 = vpack.c.b16 %v1546, %v1542
    %v1559 = vpack.c.b16 %v1547, %v1543
    %v1560 = vpack.c.b16 %v1552, %v1548
    %v1561 = vpack.c.b16 %v1553, %v1549
    %v1562 = vpack.c.b16 %v1554, %v1550
    %v1563 = vpack.c.b16 %v1555, %v1551
    %v1573 = vsel %vm235, %v1494, 0
    %1575 = vmatprep.subr.bf16.mxu0 %v1557
    %1576 = vmatpush1.bf16.msra.mxu0 %v1556
    %1577 = vmatprep.subr.bf16.mxu0 %v1561
    %1578 = vmatpush1.bf16.msra.mxu0 %v1560
    %1579 = vmatprep.subr.bf16.mxu0 0
    %1580 = vmatpush1.bf16.msra.mxu0 0
    %1581 = vmatprep.subr.bf16.mxu0 0
    %1582 = vmatpush1.bf16.msra.mxu0 0
    %1583 = vmatprep.subr.bf16.mxu0 0
    %1584 = vmatpush1.bf16.msra.mxu0 0
    %1585 = vmatprep.subr.bf16.mxu0 0
    %1586 = vmatpush1.bf16.msra.mxu0 0
    %1587 = vmatprep.subr.bf16.mxu0 0
    %1588 = vmatpush1.bf16.msra.mxu0 0
    %1589 = vmatprep.subr.bf16.mxu0 0
    %1590 = vmatpush1.bf16.msra.mxu0 0
    %1591 = vmatprep.subr.bf16.mxu0 0
    %1592 = vmatpush1.bf16.msra.mxu0 0
    %1593 = vmatprep.subr.bf16.mxu0 0
    %1594 = vmatpush1.bf16.msra.mxu0 0
    %1595 = vmatprep.subr.bf16.mxu0 0
    %1596 = vmatpush1.bf16.msra.mxu0 0
    %1597 = vmatprep.subr.bf16.mxu0 0
    %1598 = vmatpush1.bf16.msra.mxu0 0
    %1599 = vmatprep.subr.bf16.mxu0 0
    %1600 = vmatpush1.bf16.msra.mxu0 0
    %1601 = vmatprep.subr.bf16.mxu0 0
    %1602 = vmatpush1.bf16.msra.mxu0 0
    %1603 = vmatprep.subr.bf16.mxu0 0
    %1604 = vmatpush1.bf16.msra.mxu0 0
    %1605 = vmatprep.subr.bf16.mxu0 0
    %1606 = vmatpush1.bf16.msra.mxu0 0
    %1607 = vmatprep.mubr.bf16.mxu0 0
    %1608 = vmatmul.mubr.bf16.gmra.mrb[0].mxu0 %v1573
    %v1609 = vpop.f32.mrb[0].mxu0
    %v1610 = vadd.f32 %v1519, %v1609
    %v1611 = vpop.f32.mrb[0].mxu0
    %v1612 = vadd.f32 %v1523, %v1611
    %v1613 = vpop.f32.mrb[0].mxu0
    %v1614 = vadd.f32 %v1519, %v1613
    %v1615 = vpop.f32.mrb[0].mxu0
    %v1616 = vadd.f32 %v1523, %v1615
    %1617 = vdwg.mxu0
    %1618 = vmatprep.subr.bf16.mxu0 %v1559
    %1619 = vmatpush1.bf16.msra.mxu0 %v1558
    %1620 = vmatprep.subr.bf16.mxu0 %v1563
    %1621 = vmatpush1.bf16.msra.mxu0 %v1562
    %1622 = vmatprep.subr.bf16.mxu0 0
    %1623 = vmatpush1.bf16.msra.mxu0 0
    %1624 = vmatprep.subr.bf16.mxu0 0
    %1625 = vmatpush1.bf16.msra.mxu0 0
    %1626 = vmatprep.subr.bf16.mxu0 0
    %1627 = vmatpush1.bf16.msra.mxu0 0
    %1628 = vmatprep.subr.bf16.mxu0 0
    %1629 = vmatpush1.bf16.msra.mxu0 0
    %1630 = vmatprep.subr.bf16.mxu0 0
    %1631 = vmatpush1.bf16.msra.mxu0 0
    %1632 = vmatprep.subr.bf16.mxu0 0
    %1633 = vmatpush1.bf16.msra.mxu0 0
    %1634 = vmatprep.subr.bf16.mxu0 0
    %1635 = vmatpush1.bf16.msra.mxu0 0
    %1636 = vmatprep.subr.bf16.mxu0 0
    %1637 = vmatpush1.bf16.msra.mxu0 0
    %1638 = vmatprep.subr.bf16.mxu0 0
    %1639 = vmatpush1.bf16.msra.mxu0 0
    %1640 = vmatprep.subr.bf16.mxu0 0
    %1641 = vmatpush1.bf16.msra.mxu0 0
    %1642 = vmatprep.subr.bf16.mxu0 0
    %1643 = vmatpush1.bf16.msra.mxu0 0
    %1644 = vmatprep.subr.bf16.mxu0 0
    %1645 = vmatpush1.bf16.msra.mxu0 0
    %1646 = vmatprep.subr.bf16.mxu0 0
    %1647 = vmatpush1.bf16.msra.mxu0 0
    %1648 = vmatprep.subr.bf16.mxu0 0
    %1649 = vmatpush1.bf16.msra.mxu0 0
    %1650 = vmatprep.mubr.bf16.mxu0 0
    %1651 = vmatmul.mubr.bf16.gmra.mrb[0].mxu0 %v1573
    %v1652 = vpop.f32.mrb[0].mxu0
    %v1653 = vadd.f32 %v1527, %v1652
    %v1654 = vpop.f32.mrb[0].mxu0
    %v1655 = vadd.f32 %v1531, %v1654
    %v1656 = vpop.f32.mrb[0].mxu0
    %v1657 = vadd.f32 %v1527, %v1656
    %v1658 = vpop.f32.mrb[0].mxu0
    %v1659 = vadd.f32 %v1531, %v1658
    %1660 = vdwg.mxu0
    %v1661 = vpack.c.bf16 %v1616, %v1612
    %1664 = vrot.lane.b32.xlu0 %v1653, 96
    %v1665 = vpop.permute.xlu0 %1664
    %1666 = vrot.lane.b32.xlu0 %v1657, 96
    %v1667 = vpop.permute.xlu0 %1666
    %1670 = vrot.lane.b32.xlu0 %v1653, 64
    %v1671 = vpop.permute.xlu0 %1670
    %1672 = vrot.lane.b32.xlu0 %v1657, 64
    %v1673 = vpop.permute.xlu0 %1672
    %1676 = vrot.lane.b32.xlu0 %v1653, 32
    %v1677 = vpop.permute.xlu0 %1676
    %1678 = vrot.lane.b32.xlu0 %v1657, 32
    %v1679 = vpop.permute.xlu0 %1678
    %v1682 = vpack.c.bf16 %v1657, %v1653
    %v1683 = vpack.c.bf16 %v1667, %v1665
    %v1684 = vpack.c.bf16 %v1673, %v1671
    %v1685 = vpack.c.bf16 %v1679, %v1677
    %v1686 = vpack.c.bf16 %v1614, %v1610
    %v1688 = vsel %vm235, %v1686, 0
    %v1691 = vsel %vm235, %v1661, 0
    %1693 = vmatprep.subr.bf16.mxu0 0
    %1694 = vmatpush1.bf16.xpose.msra.mxu0 %v1691
    %1695 = vmatprep.subr.bf16.mxu0 0
    %1696 = vmatpush1.bf16.xpose.msra.mxu0 0
    %1697 = vmatprep.subr.bf16.mxu0 0
    %1698 = vmatpush1.bf16.xpose.msra.mxu0 0
    %1699 = vmatprep.subr.bf16.mxu0 0
    %1700 = vmatpush1.bf16.xpose.msra.mxu0 0
    %1701 = vmatprep.subr.bf16.mxu0 0
    %1702 = vmatpush1.bf16.xpose.msra.mxu0 0
    %1703 = vmatprep.subr.bf16.mxu0 0
    %1704 = vmatpush1.bf16.xpose.msra.mxu0 0
    %1705 = vmatprep.subr.bf16.mxu0 0
    %1706 = vmatpush1.bf16.xpose.msra.mxu0 0
    %1707 = vmatprep.subr.bf16.mxu0 0
    %1708 = vmatpush1.bf16.xpose.msra.mxu0 0
    %1709 = vmatprep.subr.bf16.mxu0 0
    %1710 = vmatpush1.bf16.xpose.msra.mxu0 0
    %1711 = vmatprep.subr.bf16.mxu0 0
    %1712 = vmatpush1.bf16.xpose.msra.mxu0 0
    %1713 = vmatprep.subr.bf16.mxu0 0
    %1714 = vmatpush1.bf16.xpose.msra.mxu0 0
    %1715 = vmatprep.subr.bf16.mxu0 0
    %1716 = vmatpush1.bf16.xpose.msra.mxu0 0
    %1717 = vmatprep.subr.bf16.mxu0 0
    %1718 = vmatpush1.bf16.xpose.msra.mxu0 0
    %1719 = vmatprep.subr.bf16.mxu0 0
    %1720 = vmatpush1.bf16.xpose.msra.mxu0 0
    %1721 = vmatprep.subr.bf16.mxu0 0
    %1722 = vmatpush1.bf16.xpose.msra.mxu0 0
    %1723 = vmatprep.subr.bf16.mxu0 0
    %1724 = vmatpush1.bf16.xpose.msra.mxu0 0
    %1725 = vmatprep.mubr.bf16.mxu0 0
    %1726 = vmatmul.mubr.bf16.gmra.mrb[0].mxu0 %v1688
    %v1727 = vpop.f32.mrb[0].mxu0
    %v1728 = vadd.f32 0.0, %v1727
    %v1729 = vpop.f32.mrb[0].mxu0
    %v1730 = vpop.f32.mrb[0].mxu0
    %v1731 = vadd.f32 0.0, %v1730
    %v1732 = vpop.f32.mrb[0].mxu0
    %1733 = vdwg.mxu0
    %v1734 = vsel %vm406, %v1728, -1e+30
    %v1735 = vsel %vm407, %v1731, -1e+30
    %v1736 = vsel %vm410, %v1734, -inf
    %1737 = vmax.xlane.f32.xlu0 %v1736
    %v1738 = vpop.xlane.xlu0 %1737
    %v1739 = vsel %vm410, %v1735, -inf
    %1740 = vmax.xlane.f32.xlu0 %v1739
    %v1741 = vpop.xlane.xlu0 %1740
    %v1742 = vsub.f32 %v1734, %v1738
    %v1743 = vsub.f32 %v1735, %v1741
    %v1744 = vmul.f32 %v1742, 1.442695
    %v1745 = vpow.pop %v1744
    %v1746 = vmul.f32 %v1743, 1.442695
    %v1747 = vpow.pop %v1746
    %v1748 = vsel %vm406, %v1745, 0.0
    %v1749 = vsel %vm407, %v1747, 0.0
    %v1750 = vsel %vm410, %v1748, 0.0
    %1751 = vadd.xlane.f32.xlu0 %v1750
    %v1752 = vpop.xlane.xlu0 %1751
    %v1753 = vsel %vm410, %v1749, 0.0
    %1754 = vadd.xlane.f32.xlu0 %v1753
    %v1755 = vpop.xlane.xlu0 %1754
    %v1756 = vmax.f32 %v1752, 1e-16
    %v1757 = vmax.f32 %v1755, 1e-16
    %v1758 = vrcp.pop %v1756
    %v1759 = vrcp.pop %v1757
    %v1760 = vmul.f32 %v1748, %v1758
    %v1761 = vmul.f32 %v1749, %v1759
    %v1762 = vpack.c.bf16 %v1761, %v1760
    %1764 = vrot.lane.b32.xlu0 %v1686, 96
    %v1765 = vpop.permute.xlu0 %1764
    %1767 = vrot.lane.b32.xlu0 %v1661, 96
    %v1768 = vpop.permute.xlu0 %1767
    %v1770 = vsel %vm235, %v1765, 0
    %v1773 = vsel %vm235, %v1768, 0
    %1775 = vmatprep.subr.bf16.mxu0 0
    %1776 = vmatpush1.bf16.xpose.msra.mxu0 %v1773
    %1777 = vmatprep.subr.bf16.mxu0 0
    %1778 = vmatpush1.bf16.xpose.msra.mxu0 0
    %1779 = vmatprep.subr.bf16.mxu0 0
    %1780 = vmatpush1.bf16.xpose.msra.mxu0 0
    %1781 = vmatprep.subr.bf16.mxu0 0
    %1782 = vmatpush1.bf16.xpose.msra.mxu0 0
    %1783 = vmatprep.subr.bf16.mxu0 0
    %1784 = vmatpush1.bf16.xpose.msra.mxu0 0
    %1785 = vmatprep.subr.bf16.mxu0 0
    %1786 = vmatpush1.bf16.xpose.msra.mxu0 0
    %1787 = vmatprep.subr.bf16.mxu0 0
    %1788 = vmatpush1.bf16.xpose.msra.mxu0 0
    %1789 = vmatprep.subr.bf16.mxu0 0
    %1790 = vmatpush1.bf16.xpose.msra.mxu0 0
    %1791 = vmatprep.subr.bf16.mxu0 0
    %1792 = vmatpush1.bf16.xpose.msra.mxu0 0
    %1793 = vmatprep.subr.bf16.mxu0 0
    %1794 = vmatpush1.bf16.xpose.msra.mxu0 0
    %1795 = vmatprep.subr.bf16.mxu0 0
    %1796 = vmatpush1.bf16.xpose.msra.mxu0 0
    %1797 = vmatprep.subr.bf16.mxu0 0
    %1798 = vmatpush1.bf16.xpose.msra.mxu0 0
    %1799 = vmatprep.subr.bf16.mxu0 0
    %1800 = vmatpush1.bf16.xpose.msra.mxu0 0
    %1801 = vmatprep.subr.bf16.mxu0 0
    %1802 = vmatpush1.bf16.xpose.msra.mxu0 0
    %1803 = vmatprep.subr.bf16.mxu0 0
    %1804 = vmatpush1.bf16.xpose.msra.mxu0 0
    %1805 = vmatprep.subr.bf16.mxu0 0
    %1806 = vmatpush1.bf16.xpose.msra.mxu0 0
    %1807 = vmatprep.mubr.bf16.mxu0 0
    %1808 = vmatmul.mubr.bf16.gmra.mrb[0].mxu0 %v1770
    %v1809 = vpop.f32.mrb[0].mxu0
    %v1810 = vadd.f32 0.0, %v1809
    %v1811 = vpop.f32.mrb[0].mxu0
    %v1812 = vpop.f32.mrb[0].mxu0
    %v1813 = vadd.f32 0.0, %v1812
    %v1814 = vpop.f32.mrb[0].mxu0
    %1815 = vdwg.mxu0
    %v1816 = vsel %vm406, %v1810, -1e+30
    %v1817 = vsel %vm407, %v1813, -1e+30
    %v1818 = vsel %vm410, %v1816, -inf
    %1819 = vmax.xlane.f32.xlu0 %v1818
    %v1820 = vpop.xlane.xlu0 %1819
    %v1821 = vsel %vm410, %v1817, -inf
    %1822 = vmax.xlane.f32.xlu0 %v1821
    %v1823 = vpop.xlane.xlu0 %1822
    %v1824 = vsub.f32 %v1816, %v1820
    %v1825 = vsub.f32 %v1817, %v1823
    %v1826 = vmul.f32 %v1824, 1.442695
    %v1827 = vpow.pop %v1826
    %v1828 = vmul.f32 %v1825, 1.442695
    %v1829 = vpow.pop %v1828
    %v1830 = vsel %vm406, %v1827, 0.0
    %v1831 = vsel %vm407, %v1829, 0.0
    %v1832 = vsel %vm410, %v1830, 0.0
    %1833 = vadd.xlane.f32.xlu0 %v1832
    %v1834 = vpop.xlane.xlu0 %1833
    %v1835 = vsel %vm410, %v1831, 0.0
    %1836 = vadd.xlane.f32.xlu0 %v1835
    %v1837 = vpop.xlane.xlu0 %1836
    %v1838 = vmax.f32 %v1834, 1e-16
    %v1839 = vmax.f32 %v1837, 1e-16
    %v1840 = vrcp.pop %v1838
    %v1841 = vrcp.pop %v1839
    %v1842 = vmul.f32 %v1830, %v1840
    %v1843 = vmul.f32 %v1831, %v1841
    %v1844 = vpack.c.bf16 %v1843, %v1842
    %1845 = vrot.lane.b32.xlu0 %v1686, 64
    %v1846 = vpop.permute.xlu0 %1845
    %1847 = vrot.lane.b32.xlu0 %v1661, 64
    %v1848 = vpop.permute.xlu0 %1847
    %v1850 = vsel %vm235, %v1846, 0
    %v1853 = vsel %vm235, %v1848, 0
    %1855 = vmatprep.subr.bf16.mxu0 0
    %1856 = vmatpush1.bf16.xpose.msra.mxu0 %v1853
    %1857 = vmatprep.subr.bf16.mxu0 0
    %1858 = vmatpush1.bf16.xpose.msra.mxu0 0
    %1859 = vmatprep.subr.bf16.mxu0 0
    %1860 = vmatpush1.bf16.xpose.msra.mxu0 0
    %1861 = vmatprep.subr.bf16.mxu0 0
    %1862 = vmatpush1.bf16.xpose.msra.mxu0 0
    %1863 = vmatprep.subr.bf16.mxu0 0
    %1864 = vmatpush1.bf16.xpose.msra.mxu0 0
    %1865 = vmatprep.subr.bf16.mxu0 0
    %1866 = vmatpush1.bf16.xpose.msra.mxu0 0
    %1867 = vmatprep.subr.bf16.mxu0 0
    %1868 = vmatpush1.bf16.xpose.msra.mxu0 0
    %1869 = vmatprep.subr.bf16.mxu0 0
    %1870 = vmatpush1.bf16.xpose.msra.mxu0 0
    %1871 = vmatprep.subr.bf16.mxu0 0
    %1872 = vmatpush1.bf16.xpose.msra.mxu0 0
    %1873 = vmatprep.subr.bf16.mxu0 0
    %1874 = vmatpush1.bf16.xpose.msra.mxu0 0
    %1875 = vmatprep.subr.bf16.mxu0 0
    %1876 = vmatpush1.bf16.xpose.msra.mxu0 0
    %1877 = vmatprep.subr.bf16.mxu0 0
    %1878 = vmatpush1.bf16.xpose.msra.mxu0 0
    %1879 = vmatprep.subr.bf16.mxu0 0
    %1880 = vmatpush1.bf16.xpose.msra.mxu0 0
    %1881 = vmatprep.subr.bf16.mxu0 0
    %1882 = vmatpush1.bf16.xpose.msra.mxu0 0
    %1883 = vmatprep.subr.bf16.mxu0 0
    %1884 = vmatpush1.bf16.xpose.msra.mxu0 0
    %1885 = vmatprep.subr.bf16.mxu0 0
    %1886 = vmatpush1.bf16.xpose.msra.mxu0 0
    %1887 = vmatprep.mubr.bf16.mxu0 0
    %1888 = vmatmul.mubr.bf16.gmra.mrb[0].mxu0 %v1850
    %v1889 = vpop.f32.mrb[0].mxu0
    %v1890 = vadd.f32 0.0, %v1889
    %v1891 = vpop.f32.mrb[0].mxu0
    %v1892 = vpop.f32.mrb[0].mxu0
    %v1893 = vadd.f32 0.0, %v1892
    %v1894 = vpop.f32.mrb[0].mxu0
    %1895 = vdwg.mxu0
    %v1896 = vsel %vm406, %v1890, -1e+30
    %v1897 = vsel %vm407, %v1893, -1e+30
    %v1898 = vsel %vm410, %v1896, -inf
    %1899 = vmax.xlane.f32.xlu0 %v1898
    %v1900 = vpop.xlane.xlu0 %1899
    %v1901 = vsel %vm410, %v1897, -inf
    %1902 = vmax.xlane.f32.xlu0 %v1901
    %v1903 = vpop.xlane.xlu0 %1902
    %v1904 = vsub.f32 %v1896, %v1900
    %v1905 = vsub.f32 %v1897, %v1903
    %v1906 = vmul.f32 %v1904, 1.442695
    %v1907 = vpow.pop %v1906
    %v1908 = vmul.f32 %v1905, 1.442695
    %v1909 = vpow.pop %v1908
    %v1910 = vsel %vm406, %v1907, 0.0
    %v1911 = vsel %vm407, %v1909, 0.0
    %v1912 = vsel %vm410, %v1910, 0.0
    %1913 = vadd.xlane.f32.xlu0 %v1912
    %v1914 = vpop.xlane.xlu0 %1913
    %v1915 = vsel %vm410, %v1911, 0.0
    %1916 = vadd.xlane.f32.xlu0 %v1915
    %v1917 = vpop.xlane.xlu0 %1916
    %v1918 = vmax.f32 %v1914, 1e-16
    %v1919 = vmax.f32 %v1917, 1e-16
    %v1920 = vrcp.pop %v1918
    %v1921 = vrcp.pop %v1919
    %v1922 = vmul.f32 %v1910, %v1920
    %v1923 = vmul.f32 %v1911, %v1921
    %v1924 = vpack.c.bf16 %v1923, %v1922
    %1925 = vrot.lane.b32.xlu0 %v1686, 32
    %v1926 = vpop.permute.xlu0 %1925
    %1927 = vrot.lane.b32.xlu0 %v1661, 32
    %v1928 = vpop.permute.xlu0 %1927
    %v1930 = vsel %vm235, %v1926, 0
    %v1933 = vsel %vm235, %v1928, 0
    %1935 = vmatprep.subr.bf16.mxu0 0
    %1936 = vmatpush1.bf16.xpose.msra.mxu0 %v1933
    %1937 = vmatprep.subr.bf16.mxu0 0
    %1938 = vmatpush1.bf16.xpose.msra.mxu0 0
    %1939 = vmatprep.subr.bf16.mxu0 0
    %1940 = vmatpush1.bf16.xpose.msra.mxu0 0
    %1941 = vmatprep.subr.bf16.mxu0 0
    %1942 = vmatpush1.bf16.xpose.msra.mxu0 0
    %1943 = vmatprep.subr.bf16.mxu0 0
    %1944 = vmatpush1.bf16.xpose.msra.mxu0 0
    %1945 = vmatprep.subr.bf16.mxu0 0
    %1946 = vmatpush1.bf16.xpose.msra.mxu0 0
    %1947 = vmatprep.subr.bf16.mxu0 0
    %1948 = vmatpush1.bf16.xpose.msra.mxu0 0
    %1949 = vmatprep.subr.bf16.mxu0 0
    %1950 = vmatpush1.bf16.xpose.msra.mxu0 0
    %1951 = vmatprep.subr.bf16.mxu0 0
    %1952 = vmatpush1.bf16.xpose.msra.mxu0 0
    %1953 = vmatprep.subr.bf16.mxu0 0
    %1954 = vmatpush1.bf16.xpose.msra.mxu0 0
    %1955 = vmatprep.subr.bf16.mxu0 0
    %1956 = vmatpush1.bf16.xpose.msra.mxu0 0
    %1957 = vmatprep.subr.bf16.mxu0 0
    %1958 = vmatpush1.bf16.xpose.msra.mxu0 0
    %1959 = vmatprep.subr.bf16.mxu0 0
    %1960 = vmatpush1.bf16.xpose.msra.mxu0 0
    %1961 = vmatprep.subr.bf16.mxu0 0
    %1962 = vmatpush1.bf16.xpose.msra.mxu0 0
    %1963 = vmatprep.subr.bf16.mxu0 0
    %1964 = vmatpush1.bf16.xpose.msra.mxu0 0
    %1965 = vmatprep.subr.bf16.mxu0 0
    %1966 = vmatpush1.bf16.xpose.msra.mxu0 0
    %1967 = vmatprep.mubr.bf16.mxu0 0
    %1968 = vmatmul.mubr.bf16.gmra.mrb[0].mxu0 %v1930
    %v1969 = vpop.f32.mrb[0].mxu0
    %v1970 = vadd.f32 0.0, %v1969
    %v1971 = vpop.f32.mrb[0].mxu0
    %v1972 = vpop.f32.mrb[0].mxu0
    %v1973 = vadd.f32 0.0, %v1972
    %v1974 = vpop.f32.mrb[0].mxu0
    %1975 = vdwg.mxu0
    %v1976 = vsel %vm406, %v1970, -1e+30
    %v1977 = vsel %vm407, %v1973, -1e+30
    %v1978 = vsel %vm410, %v1976, -inf
    %1979 = vmax.xlane.f32.xlu0 %v1978
    %v1980 = vpop.xlane.xlu0 %1979
    %v1981 = vsel %vm410, %v1977, -inf
    %1982 = vmax.xlane.f32.xlu0 %v1981
    %v1983 = vpop.xlane.xlu0 %1982
    %v1984 = vsub.f32 %v1976, %v1980
    %v1985 = vsub.f32 %v1977, %v1983
    %v1986 = vmul.f32 %v1984, 1.442695
    %v1987 = vpow.pop %v1986
    %v1988 = vmul.f32 %v1985, 1.442695
    %v1989 = vpow.pop %v1988
    %v1990 = vsel %vm406, %v1987, 0.0
    %v1991 = vsel %vm407, %v1989, 0.0
    %v1992 = vsel %vm410, %v1990, 0.0
    %1993 = vadd.xlane.f32.xlu0 %v1992
    %v1994 = vpop.xlane.xlu0 %1993
    %v1995 = vsel %vm410, %v1991, 0.0
    %1996 = vadd.xlane.f32.xlu0 %v1995
    %v1997 = vpop.xlane.xlu0 %1996
    %v1998 = vmax.f32 %v1994, 1e-16
    %v1999 = vmax.f32 %v1997, 1e-16
    %v2000 = vrcp.pop %v1998
    %v2001 = vrcp.pop %v1999
    %v2002 = vmul.f32 %v1990, %v2000
    %v2003 = vmul.f32 %v1991, %v2001
    %v2004 = vpack.c.bf16 %v2003, %v2002
    %2006 = vrot.lane.b32.xlu0 %v1844, 16
    %v2007 = vpop.permute.xlu0 %2006
    %2009 = vrot.lane.b32.xlu0 %v1924, 32
    %v2010 = vpop.permute.xlu0 %2009
    %2012 = vrot.lane.b32.xlu0 %v2004, 48
    %v2013 = vpop.permute.xlu0 %2012
    %v2016 = vsel %vm410, %v1762, %v2007
    %v2018 = vsel %vm235, %v2016, %v2010
    %v2020 = vsel %vm694, %v2018, %v2013
    %v2021 = vsel %vm697, %v2020, 0
    %2023 = vmatprep.subr.bf16.mxu0 0
    %2024 = vmatpush1.bf16.msra.mxu0 %v1682
    %2025 = vmatprep.subr.bf16.mxu0 0
    %2026 = vmatpush1.bf16.msra.mxu0 %v1683
    %2027 = vmatprep.subr.bf16.mxu0 0
    %2028 = vmatpush1.bf16.msra.mxu0 %v1684
    %2029 = vmatprep.subr.bf16.mxu0 0
    %2030 = vmatpush1.bf16.msra.mxu0 %v1685
    %2031 = vmatprep.subr.bf16.mxu0 0
    %2032 = vmatpush1.bf16.msra.mxu0 0
    %2033 = vmatprep.subr.bf16.mxu0 0
    %2034 = vmatpush1.bf16.msra.mxu0 0
    %2035 = vmatprep.subr.bf16.mxu0 0
    %2036 = vmatpush1.bf16.msra.mxu0 0
    %2037 = vmatprep.subr.bf16.mxu0 0
    %2038 = vmatpush1.bf16.msra.mxu0 0
    %2039 = vmatprep.subr.bf16.mxu0 0
    %2040 = vmatpush1.bf16.msra.mxu0 0
    %2041 = vmatprep.subr.bf16.mxu0 0
    %2042 = vmatpush1.bf16.msra.mxu0 0
    %2043 = vmatprep.subr.bf16.mxu0 0
    %2044 = vmatpush1.bf16.msra.mxu0 0
    %2045 = vmatprep.subr.bf16.mxu0 0
    %2046 = vmatpush1.bf16.msra.mxu0 0
    %2047 = vmatprep.subr.bf16.mxu0 0
    %2048 = vmatpush1.bf16.msra.mxu0 0
    %2049 = vmatprep.subr.bf16.mxu0 0
    %2050 = vmatpush1.bf16.msra.mxu0 0
    %2051 = vmatprep.subr.bf16.mxu0 0
    %2052 = vmatpush1.bf16.msra.mxu0 0
    %2053 = vmatprep.subr.bf16.mxu0 0
    %2054 = vmatpush1.bf16.msra.mxu0 0
    %2055 = vmatprep.mubr.bf16.mxu0 0
    %2056 = vmatmul.mubr.bf16.gmra.mrb[0].mxu0 %v2021
    %v2057 = vpop.f32.mrb[0].mxu0
    %v2058 = vadd.f32 0.0, %v2057
    %v2059 = vpop.f32.mrb[0].mxu0
    %v2060 = vpop.f32.mrb[0].mxu0
    %v2061 = vadd.f32 0.0, %v2060
    %v2062 = vpop.f32.mrb[0].mxu0
    %2063 = vdwg.mxu0
    %v2064 = vmul.f32 %v2058, 0.25
    %v2065 = vmul.f32 %v2061, 0.25
    %v2066 = vlaneseq
    %v2067 = vshrl.u32 %v2066, 7
    %v2068 = vsub.s32 1, %v2067
    %v2069 = vrot.slane %v1493, %v2068
    %v2070 = vmul.f32 %v2064, %v2069
    %v2071 = vmul.f32 %v2065, %v2069
    %2073 = vrot.lane.b32.xlu0 %v2069, 96
    %v2074 = vpop.permute.xlu0 %2073
    %v2076 = vmul.f32 %v1655, %v2074
    %v2077 = vmul.f32 %v1659, %v2074
    %v2078 = vadd.f32 %v2070, %v2076
    %v2079 = vadd.f32 %v2071, %v2077
    %v2080 = vsel %vm235, %v2078, 0.0
    %2081 = vadd.xlane.f32.xlu0 %v2080
    %v2082 = vpop.xlane.xlu0 %2081
    %v2083 = vsel %vm235, %v2079, 0.0
    %2084 = vadd.xlane.f32.xlu0 %v2083
    %v2085 = vpop.xlane.xlu0 %2084
    %v2086 = vxor.u32 %v2082, 2147483648
    %v2087 = vxor.u32 %v2085, 2147483648
    %v2088 = vmul.f32 %v2086, 1.442695
    %v2089 = vpow.pop %v2088
    %v2090 = vmul.f32 %v2087, 1.442695
    %v2091 = vpow.pop %v2090
    %v2092 = vadd.f32 %v2089, 1.0
    %v2093 = vadd.f32 %v2091, 1.0
    %v2094 = vrcp.pop %v2092
    %v2095 = vmul.f32 1.0, %v2094
    %v2096 = vrcp.pop %v2093
    %v2097 = vmul.f32 1.0, %v2096
    %v2098 = vmul.f32 %v2095, %v1655
    %v2099 = vmul.f32 %v2097, %v1659
    %v2100 = vsub.f32 1.0, %v2095
    %v2101 = vsub.f32 1.0, %v2097
    %v2102 = vmul.f32 %v2100, %v2064
    %v2103 = vmul.f32 %v2101, %v2065
    %v2104 = vadd.f32 %v2098, %v2102
    %v2105 = vadd.f32 %v2099, %v2103
    %v2106 = vsel %vm235, %v2104, 0.0
    %2107 = vadd.xlane.f32.xlu0 %v2106
    %v2108 = vpop.xlane.xlu0 %2107
    %v2109 = vsel %vm235, %v2105, 0.0
    %2110 = vadd.xlane.f32.xlu0 %v2109
    %v2111 = vpop.xlane.xlu0 %2110
    %v2112 = vmul.f32 %v2108, %v789
    %v2113 = vmul.f32 %v2111, %v789
    %v2114 = vsub.f32 %v2104, %v2112
    %v2115 = vsub.f32 %v2105, %v2113
    %v2116 = vmul.f32 %v2114, %v2114
    %v2117 = vmul.f32 %v2115, %v2115
    %v2118 = vsel %vm235, %v2116, 0.0
    %2119 = vadd.xlane.f32.xlu0 %v2118
    %v2120 = vpop.xlane.xlu0 %2119
    %v2121 = vsel %vm235, %v2117, 0.0
    %2122 = vadd.xlane.f32.xlu0 %v2121
    %v2123 = vpop.xlane.xlu0 %2122
    %v2124 = vmul.f32 %v2120, %v789
    %v2125 = vmul.f32 %v2123, %v789
    %v2126 = vadd.f32 %v2124, 1e-05
    %v2127 = vadd.f32 %v2125, 1e-05
    %v2128 = vrsqrt.pop %v2126
    %v2129 = vrsqrt.pop %v2127
    %v2130 = vmul.f32 %v2114, %v2128
    %v2131 = vmul.f32 %v2115, %v2129
    %2132 = vrot.lane.b32.xlu0 %v2069, 64
    %v2133 = vpop.permute.xlu0 %2132
    %v2135 = vmul.f32 %v2130, %v2133
    %v2136 = vmul.f32 %v2131, %v2133
    %2137 = vrot.lane.b32.xlu0 %v2069, 32
    %v2138 = vpop.permute.xlu0 %2137
    %v2140 = vadd.f32 %v2135, %v2138
    %v2141 = vadd.f32 %v2136, %v2138
    %v2142 = vmax.f32 %v2140, 0.0
    %v2143 = vmax.f32 %v2141, 0.0
    %s2144 = scalar_lea.vmem [#allocation7], 192
    %v2145 = vld [vmem:[%s2144] sm:$0xff]
    %v2146 = vld [vmem:[%s2144 + $0x8] sm:$0xff]
    %v2147 = vld [vmem:[%s2144 + $0x10] sm:$0xff]
    %v2148 = vld [vmem:[%s2144 + $0x18] sm:$0xff]
    %v2149 = vld [vmem:[%s2144 + $0x20] sm:$0xff]
    %v2150 = vld [vmem:[%s2144 + $0x28] sm:$0xff]
    %v2151 = vld [vmem:[%s2144 + $0x30] sm:$0xff]
    %v2152 = vld [vmem:[%s2144 + $0x38] sm:$0xff]
    %s2153 = scalar_lea.vmem [#allocation8], 24
    %v2154 = vld [vmem:[%s2153] sm:$0xff]
    %v2155 = vpack.c.bf16 %v2143, %v2142
    %v2157 = vlaneseq
    %v2158 = vshrl.u32 %v2157, 7
    %v2159 = vsub.s32 0, %v2158
    %v2160 = vrot.slane %v2154, %v2159
    %v2161 = vlaneseq
    %v2162 = vshrl.u32 %v2161, 7
    %v2163 = vsub.s32 2, %v2162
    %v2164 = vrot.slane %v2154, %v2163
    %v2165 = vlaneseq
    %v2166 = vshrl.u32 %v2165, 7
    %v2167 = vsub.s32 4, %v2166
    %v2168 = vrot.slane %v2154, %v2167
    %v2169 = vlaneseq
    %v2170 = vshrl.u32 %v2169, 7
    %v2171 = vsub.s32 6, %v2170
    %v2172 = vrot.slane %v2154, %v2171
    %v2177 = vlaneseq
    %v2178 = vshrl.u32 %v2177, 7
    %v2179 = vsub.s32 0, %v2178
    %v2180 = vrot.slane %v2160, %v2179
    %v2181 = vlaneseq
    %v2182 = vshrl.u32 %v2181, 7
    %v2183 = vsub.s32 0, %v2182
    %v2184 = vrot.slane %v2164, %v2183
    %v2185 = vlaneseq
    %v2186 = vshrl.u32 %v2185, 7
    %v2187 = vsub.s32 0, %v2186
    %v2188 = vrot.slane %v2168, %v2187
    %v2189 = vlaneseq
    %v2190 = vshrl.u32 %v2189, 7
    %v2191 = vsub.s32 0, %v2190
    %v2192 = vrot.slane %v2172, %v2191
    %v2201 = vunpack.c.l.b16 %v2145
    %v2202 = vunpack.c.h.b16 %v2145
    %v2203 = vunpack.c.l.b16 %v2146
    %v2204 = vunpack.c.h.b16 %v2146
    %v2205 = vunpack.c.l.b16 %v2147
    %v2206 = vunpack.c.h.b16 %v2147
    %v2207 = vunpack.c.l.b16 %v2148
    %v2208 = vunpack.c.h.b16 %v2148
    %v2209 = vunpack.c.l.b16 %v2149
    %v2210 = vunpack.c.h.b16 %v2149
    %v2211 = vunpack.c.l.b16 %v2150
    %v2212 = vunpack.c.h.b16 %v2150
    %v2213 = vunpack.c.l.b16 %v2151
    %v2214 = vunpack.c.h.b16 %v2151
    %v2215 = vunpack.c.l.b16 %v2152
    %v2216 = vunpack.c.h.b16 %v2152
    %v2217 = vpack.c.b16 %v2205, %v2201
    %v2218 = vpack.c.b16 %v2206, %v2202
    %v2219 = vpack.c.b16 %v2207, %v2203
    %v2220 = vpack.c.b16 %v2208, %v2204
    %v2221 = vpack.c.b16 %v2213, %v2209
    %v2222 = vpack.c.b16 %v2214, %v2210
    %v2223 = vpack.c.b16 %v2215, %v2211
    %v2224 = vpack.c.b16 %v2216, %v2212
    %v2234 = vsel %vm235, %v2155, 0
    %2236 = vmatprep.subr.bf16.mxu0 %v2218
    %2237 = vmatpush1.bf16.msra.mxu0 %v2217
    %2238 = vmatprep.subr.bf16.mxu0 %v2222
    %2239 = vmatpush1.bf16.msra.mxu0 %v2221
    %2240 = vmatprep.subr.bf16.mxu0 0
    %2241 = vmatpush1.bf16.msra.mxu0 0
    %2242 = vmatprep.subr.bf16.mxu0 0
    %2243 = vmatpush1.bf16.msra.mxu0 0
    %2244 = vmatprep.subr.bf16.mxu0 0
    %2245 = vmatpush1.bf16.msra.mxu0 0
    %2246 = vmatprep.subr.bf16.mxu0 0
    %2247 = vmatpush1.bf16.msra.mxu0 0
    %2248 = vmatprep.subr.bf16.mxu0 0
    %2249 = vmatpush1.bf16.msra.mxu0 0
    %2250 = vmatprep.subr.bf16.mxu0 0
    %2251 = vmatpush1.bf16.msra.mxu0 0
    %2252 = vmatprep.subr.bf16.mxu0 0
    %2253 = vmatpush1.bf16.msra.mxu0 0
    %2254 = vmatprep.subr.bf16.mxu0 0
    %2255 = vmatpush1.bf16.msra.mxu0 0
    %2256 = vmatprep.subr.bf16.mxu0 0
    %2257 = vmatpush1.bf16.msra.mxu0 0
    %2258 = vmatprep.subr.bf16.mxu0 0
    %2259 = vmatpush1.bf16.msra.mxu0 0
    %2260 = vmatprep.subr.bf16.mxu0 0
    %2261 = vmatpush1.bf16.msra.mxu0 0
    %2262 = vmatprep.subr.bf16.mxu0 0
    %2263 = vmatpush1.bf16.msra.mxu0 0
    %2264 = vmatprep.subr.bf16.mxu0 0
    %2265 = vmatpush1.bf16.msra.mxu0 0
    %2266 = vmatprep.subr.bf16.mxu0 0
    %2267 = vmatpush1.bf16.msra.mxu0 0
    %2268 = vmatprep.mubr.bf16.mxu0 0
    %2269 = vmatmul.mubr.bf16.gmra.mrb[0].mxu0 %v2234
    %v2270 = vpop.f32.mrb[0].mxu0
    %v2271 = vadd.f32 %v2180, %v2270
    %v2272 = vpop.f32.mrb[0].mxu0
    %v2273 = vadd.f32 %v2184, %v2272
    %v2274 = vpop.f32.mrb[0].mxu0
    %v2275 = vadd.f32 %v2180, %v2274
    %v2276 = vpop.f32.mrb[0].mxu0
    %v2277 = vadd.f32 %v2184, %v2276
    %2278 = vdwg.mxu0
    %2279 = vmatprep.subr.bf16.mxu0 %v2220
    %2280 = vmatpush1.bf16.msra.mxu0 %v2219
    %2281 = vmatprep.subr.bf16.mxu0 %v2224
    %2282 = vmatpush1.bf16.msra.mxu0 %v2223
    %2283 = vmatprep.subr.bf16.mxu0 0
    %2284 = vmatpush1.bf16.msra.mxu0 0
    %2285 = vmatprep.subr.bf16.mxu0 0
    %2286 = vmatpush1.bf16.msra.mxu0 0
    %2287 = vmatprep.subr.bf16.mxu0 0
    %2288 = vmatpush1.bf16.msra.mxu0 0
    %2289 = vmatprep.subr.bf16.mxu0 0
    %2290 = vmatpush1.bf16.msra.mxu0 0
    %2291 = vmatprep.subr.bf16.mxu0 0
    %2292 = vmatpush1.bf16.msra.mxu0 0
    %2293 = vmatprep.subr.bf16.mxu0 0
    %2294 = vmatpush1.bf16.msra.mxu0 0
    %2295 = vmatprep.subr.bf16.mxu0 0
    %2296 = vmatpush1.bf16.msra.mxu0 0
    %2297 = vmatprep.subr.bf16.mxu0 0
    %2298 = vmatpush1.bf16.msra.mxu0 0
    %2299 = vmatprep.subr.bf16.mxu0 0
    %2300 = vmatpush1.bf16.msra.mxu0 0
    %2301 = vmatprep.subr.bf16.mxu0 0
    %2302 = vmatpush1.bf16.msra.mxu0 0
    %2303 = vmatprep.subr.bf16.mxu0 0
    %2304 = vmatpush1.bf16.msra.mxu0 0
    %2305 = vmatprep.subr.bf16.mxu0 0
    %2306 = vmatpush1.bf16.msra.mxu0 0
    %2307 = vmatprep.subr.bf16.mxu0 0
    %2308 = vmatpush1.bf16.msra.mxu0 0
    %2309 = vmatprep.subr.bf16.mxu0 0
    %2310 = vmatpush1.bf16.msra.mxu0 0
    %2311 = vmatprep.mubr.bf16.mxu0 0
    %2312 = vmatmul.mubr.bf16.gmra.mrb[0].mxu0 %v2234
    %v2313 = vpop.f32.mrb[0].mxu0
    %v2314 = vadd.f32 %v2188, %v2313
    %v2315 = vpop.f32.mrb[0].mxu0
    %v2316 = vadd.f32 %v2192, %v2315
    %v2317 = vpop.f32.mrb[0].mxu0
    %v2318 = vadd.f32 %v2188, %v2317
    %v2319 = vpop.f32.mrb[0].mxu0
    %v2320 = vadd.f32 %v2192, %v2319
    %2321 = vdwg.mxu0
    %v2322 = vpack.c.bf16 %v2277, %v2273
    %2325 = vrot.lane.b32.xlu0 %v2314, 96
    %v2326 = vpop.permute.xlu0 %2325
    %2327 = vrot.lane.b32.xlu0 %v2318, 96
    %v2328 = vpop.permute.xlu0 %2327
    %2331 = vrot.lane.b32.xlu0 %v2314, 64
    %v2332 = vpop.permute.xlu0 %2331
    %2333 = vrot.lane.b32.xlu0 %v2318, 64
    %v2334 = vpop.permute.xlu0 %2333
    %2337 = vrot.lane.b32.xlu0 %v2314, 32
    %v2338 = vpop.permute.xlu0 %2337
    %2339 = vrot.lane.b32.xlu0 %v2318, 32
    %v2340 = vpop.permute.xlu0 %2339
    %v2343 = vpack.c.bf16 %v2318, %v2314
    %v2344 = vpack.c.bf16 %v2328, %v2326
    %v2345 = vpack.c.bf16 %v2334, %v2332
    %v2346 = vpack.c.bf16 %v2340, %v2338
    %v2347 = vpack.c.bf16 %v2275, %v2271
    %v2349 = vsel %vm235, %v2347, 0
    %v2352 = vsel %vm235, %v2322, 0
    %2354 = vmatprep.subr.bf16.mxu0 0
    %2355 = vmatpush1.bf16.xpose.msra.mxu0 %v2352
    %2356 = vmatprep.subr.bf16.mxu0 0
    %2357 = vmatpush1.bf16.xpose.msra.mxu0 0
    %2358 = vmatprep.subr.bf16.mxu0 0
    %2359 = vmatpush1.bf16.xpose.msra.mxu0 0
    %2360 = vmatprep.subr.bf16.mxu0 0
    %2361 = vmatpush1.bf16.xpose.msra.mxu0 0
    %2362 = vmatprep.subr.bf16.mxu0 0
    %2363 = vmatpush1.bf16.xpose.msra.mxu0 0
    %2364 = vmatprep.subr.bf16.mxu0 0
    %2365 = vmatpush1.bf16.xpose.msra.mxu0 0
    %2366 = vmatprep.subr.bf16.mxu0 0
    %2367 = vmatpush1.bf16.xpose.msra.mxu0 0
    %2368 = vmatprep.subr.bf16.mxu0 0
    %2369 = vmatpush1.bf16.xpose.msra.mxu0 0
    %2370 = vmatprep.subr.bf16.mxu0 0
    %2371 = vmatpush1.bf16.xpose.msra.mxu0 0
    %2372 = vmatprep.subr.bf16.mxu0 0
    %2373 = vmatpush1.bf16.xpose.msra.mxu0 0
    %2374 = vmatprep.subr.bf16.mxu0 0
    %2375 = vmatpush1.bf16.xpose.msra.mxu0 0
    %2376 = vmatprep.subr.bf16.mxu0 0
    %2377 = vmatpush1.bf16.xpose.msra.mxu0 0
    %2378 = vmatprep.subr.bf16.mxu0 0
    %2379 = vmatpush1.bf16.xpose.msra.mxu0 0
    %2380 = vmatprep.subr.bf16.mxu0 0
    %2381 = vmatpush1.bf16.xpose.msra.mxu0 0
    %2382 = vmatprep.subr.bf16.mxu0 0
    %2383 = vmatpush1.bf16.xpose.msra.mxu0 0
    %2384 = vmatprep.subr.bf16.mxu0 0
    %2385 = vmatpush1.bf16.xpose.msra.mxu0 0
    %2386 = vmatprep.mubr.bf16.mxu0 0
    %2387 = vmatmul.mubr.bf16.gmra.mrb[0].mxu0 %v2349
    %v2388 = vpop.f32.mrb[0].mxu0
    %v2389 = vadd.f32 0.0, %v2388
    %v2390 = vpop.f32.mrb[0].mxu0
    %v2391 = vpop.f32.mrb[0].mxu0
    %v2392 = vadd.f32 0.0, %v2391
    %v2393 = vpop.f32.mrb[0].mxu0
    %2394 = vdwg.mxu0
    %v2395 = vsel %vm406, %v2389, -1e+30
    %v2396 = vsel %vm407, %v2392, -1e+30
    %v2397 = vsel %vm410, %v2395, -inf
    %2398 = vmax.xlane.f32.xlu0 %v2397
    %v2399 = vpop.xlane.xlu0 %2398
    %v2400 = vsel %vm410, %v2396, -inf
    %2401 = vmax.xlane.f32.xlu0 %v2400
    %v2402 = vpop.xlane.xlu0 %2401
    %v2403 = vsub.f32 %v2395, %v2399
    %v2404 = vsub.f32 %v2396, %v2402
    %v2405 = vmul.f32 %v2403, 1.442695
    %v2406 = vpow.pop %v2405
    %v2407 = vmul.f32 %v2404, 1.442695
    %v2408 = vpow.pop %v2407
    %v2409 = vsel %vm406, %v2406, 0.0
    %v2410 = vsel %vm407, %v2408, 0.0
    %v2411 = vsel %vm410, %v2409, 0.0
    %2412 = vadd.xlane.f32.xlu0 %v2411
    %v2413 = vpop.xlane.xlu0 %2412
    %v2414 = vsel %vm410, %v2410, 0.0
    %2415 = vadd.xlane.f32.xlu0 %v2414
    %v2416 = vpop.xlane.xlu0 %2415
    %v2417 = vmax.f32 %v2413, 1e-16
    %v2418 = vmax.f32 %v2416, 1e-16
    %v2419 = vrcp.pop %v2417
    %v2420 = vrcp.pop %v2418
    %v2421 = vmul.f32 %v2409, %v2419
    %v2422 = vmul.f32 %v2410, %v2420
    %v2423 = vpack.c.bf16 %v2422, %v2421
    %2425 = vrot.lane.b32.xlu0 %v2347, 96
    %v2426 = vpop.permute.xlu0 %2425
    %2428 = vrot.lane.b32.xlu0 %v2322, 96
    %v2429 = vpop.permute.xlu0 %2428
    %v2431 = vsel %vm235, %v2426, 0
    %v2434 = vsel %vm235, %v2429, 0
    %2436 = vmatprep.subr.bf16.mxu0 0
    %2437 = vmatpush1.bf16.xpose.msra.mxu0 %v2434
    %2438 = vmatprep.subr.bf16.mxu0 0
    %2439 = vmatpush1.bf16.xpose.msra.mxu0 0
    %2440 = vmatprep.subr.bf16.mxu0 0
    %2441 = vmatpush1.bf16.xpose.msra.mxu0 0
    %2442 = vmatprep.subr.bf16.mxu0 0
    %2443 = vmatpush1.bf16.xpose.msra.mxu0 0
    %2444 = vmatprep.subr.bf16.mxu0 0
    %2445 = vmatpush1.bf16.xpose.msra.mxu0 0
    %2446 = vmatprep.subr.bf16.mxu0 0
    %2447 = vmatpush1.bf16.xpose.msra.mxu0 0
    %2448 = vmatprep.subr.bf16.mxu0 0
    %2449 = vmatpush1.bf16.xpose.msra.mxu0 0
    %2450 = vmatprep.subr.bf16.mxu0 0
    %2451 = vmatpush1.bf16.xpose.msra.mxu0 0
    %2452 = vmatprep.subr.bf16.mxu0 0
    %2453 = vmatpush1.bf16.xpose.msra.mxu0 0
    %2454 = vmatprep.subr.bf16.mxu0 0
    %2455 = vmatpush1.bf16.xpose.msra.mxu0 0
    %2456 = vmatprep.subr.bf16.mxu0 0
    %2457 = vmatpush1.bf16.xpose.msra.mxu0 0
    %2458 = vmatprep.subr.bf16.mxu0 0
    %2459 = vmatpush1.bf16.xpose.msra.mxu0 0
    %2460 = vmatprep.subr.bf16.mxu0 0
    %2461 = vmatpush1.bf16.xpose.msra.mxu0 0
    %2462 = vmatprep.subr.bf16.mxu0 0
    %2463 = vmatpush1.bf16.xpose.msra.mxu0 0
    %2464 = vmatprep.subr.bf16.mxu0 0
    %2465 = vmatpush1.bf16.xpose.msra.mxu0 0
    %2466 = vmatprep.subr.bf16.mxu0 0
    %2467 = vmatpush1.bf16.xpose.msra.mxu0 0
    %2468 = vmatprep.mubr.bf16.mxu0 0
    %2469 = vmatmul.mubr.bf16.gmra.mrb[0].mxu0 %v2431
    %v2470 = vpop.f32.mrb[0].mxu0
    %v2471 = vadd.f32 0.0, %v2470
    %v2472 = vpop.f32.mrb[0].mxu0
    %v2473 = vpop.f32.mrb[0].mxu0
    %v2474 = vadd.f32 0.0, %v2473
    %v2475 = vpop.f32.mrb[0].mxu0
    %2476 = vdwg.mxu0
    %v2477 = vsel %vm406, %v2471, -1e+30
    %v2478 = vsel %vm407, %v2474, -1e+30
    %v2479 = vsel %vm410, %v2477, -inf
    %2480 = vmax.xlane.f32.xlu0 %v2479
    %v2481 = vpop.xlane.xlu0 %2480
    %v2482 = vsel %vm410, %v2478, -inf
    %2483 = vmax.xlane.f32.xlu0 %v2482
    %v2484 = vpop.xlane.xlu0 %2483
    %v2485 = vsub.f32 %v2477, %v2481
    %v2486 = vsub.f32 %v2478, %v2484
    %v2487 = vmul.f32 %v2485, 1.442695
    %v2488 = vpow.pop %v2487
    %v2489 = vmul.f32 %v2486, 1.442695
    %v2490 = vpow.pop %v2489
    %v2491 = vsel %vm406, %v2488, 0.0
    %v2492 = vsel %vm407, %v2490, 0.0
    %v2493 = vsel %vm410, %v2491, 0.0
    %2494 = vadd.xlane.f32.xlu0 %v2493
    %v2495 = vpop.xlane.xlu0 %2494
    %v2496 = vsel %vm410, %v2492, 0.0
    %2497 = vadd.xlane.f32.xlu0 %v2496
    %v2498 = vpop.xlane.xlu0 %2497
    %v2499 = vmax.f32 %v2495, 1e-16
    %v2500 = vmax.f32 %v2498, 1e-16
    %v2501 = vrcp.pop %v2499
    %v2502 = vrcp.pop %v2500
    %v2503 = vmul.f32 %v2491, %v2501
    %v2504 = vmul.f32 %v2492, %v2502
    %v2505 = vpack.c.bf16 %v2504, %v2503
    %2506 = vrot.lane.b32.xlu0 %v2347, 64
    %v2507 = vpop.permute.xlu0 %2506
    %2508 = vrot.lane.b32.xlu0 %v2322, 64
    %v2509 = vpop.permute.xlu0 %2508
    %v2511 = vsel %vm235, %v2507, 0
    %v2514 = vsel %vm235, %v2509, 0
    %2516 = vmatprep.subr.bf16.mxu0 0
    %2517 = vmatpush1.bf16.xpose.msra.mxu0 %v2514
    %2518 = vmatprep.subr.bf16.mxu0 0
    %2519 = vmatpush1.bf16.xpose.msra.mxu0 0
    %2520 = vmatprep.subr.bf16.mxu0 0
    %2521 = vmatpush1.bf16.xpose.msra.mxu0 0
    %2522 = vmatprep.subr.bf16.mxu0 0
    %2523 = vmatpush1.bf16.xpose.msra.mxu0 0
    %2524 = vmatprep.subr.bf16.mxu0 0
    %2525 = vmatpush1.bf16.xpose.msra.mxu0 0
    %2526 = vmatprep.subr.bf16.mxu0 0
    %2527 = vmatpush1.bf16.xpose.msra.mxu0 0
    %2528 = vmatprep.subr.bf16.mxu0 0
    %2529 = vmatpush1.bf16.xpose.msra.mxu0 0
    %2530 = vmatprep.subr.bf16.mxu0 0
    %2531 = vmatpush1.bf16.xpose.msra.mxu0 0
    %2532 = vmatprep.subr.bf16.mxu0 0
    %2533 = vmatpush1.bf16.xpose.msra.mxu0 0
    %2534 = vmatprep.subr.bf16.mxu0 0
    %2535 = vmatpush1.bf16.xpose.msra.mxu0 0
    %2536 = vmatprep.subr.bf16.mxu0 0
    %2537 = vmatpush1.bf16.xpose.msra.mxu0 0
    %2538 = vmatprep.subr.bf16.mxu0 0
    %2539 = vmatpush1.bf16.xpose.msra.mxu0 0
    %2540 = vmatprep.subr.bf16.mxu0 0
    %2541 = vmatpush1.bf16.xpose.msra.mxu0 0
    %2542 = vmatprep.subr.bf16.mxu0 0
    %2543 = vmatpush1.bf16.xpose.msra.mxu0 0
    %2544 = vmatprep.subr.bf16.mxu0 0
    %2545 = vmatpush1.bf16.xpose.msra.mxu0 0
    %2546 = vmatprep.subr.bf16.mxu0 0
    %2547 = vmatpush1.bf16.xpose.msra.mxu0 0
    %2548 = vmatprep.mubr.bf16.mxu0 0
    %2549 = vmatmul.mubr.bf16.gmra.mrb[0].mxu0 %v2511
    %v2550 = vpop.f32.mrb[0].mxu0
    %v2551 = vadd.f32 0.0, %v2550
    %v2552 = vpop.f32.mrb[0].mxu0
    %v2553 = vpop.f32.mrb[0].mxu0
    %v2554 = vadd.f32 0.0, %v2553
    %v2555 = vpop.f32.mrb[0].mxu0
    %2556 = vdwg.mxu0
    %v2557 = vsel %vm406, %v2551, -1e+30
    %v2558 = vsel %vm407, %v2554, -1e+30
    %v2559 = vsel %vm410, %v2557, -inf
    %2560 = vmax.xlane.f32.xlu0 %v2559
    %v2561 = vpop.xlane.xlu0 %2560
    %v2562 = vsel %vm410, %v2558, -inf
    %2563 = vmax.xlane.f32.xlu0 %v2562
    %v2564 = vpop.xlane.xlu0 %2563
    %v2565 = vsub.f32 %v2557, %v2561
    %v2566 = vsub.f32 %v2558, %v2564
    %v2567 = vmul.f32 %v2565, 1.442695
    %v2568 = vpow.pop %v2567
    %v2569 = vmul.f32 %v2566, 1.442695
    %v2570 = vpow.pop %v2569
    %v2571 = vsel %vm406, %v2568, 0.0
    %v2572 = vsel %vm407, %v2570, 0.0
    %v2573 = vsel %vm410, %v2571, 0.0
    %2574 = vadd.xlane.f32.xlu0 %v2573
    %v2575 = vpop.xlane.xlu0 %2574
    %v2576 = vsel %vm410, %v2572, 0.0
    %2577 = vadd.xlane.f32.xlu0 %v2576
    %v2578 = vpop.xlane.xlu0 %2577
    %v2579 = vmax.f32 %v2575, 1e-16
    %v2580 = vmax.f32 %v2578, 1e-16
    %v2581 = vrcp.pop %v2579
    %v2582 = vrcp.pop %v2580
    %v2583 = vmul.f32 %v2571, %v2581
    %v2584 = vmul.f32 %v2572, %v2582
    %v2585 = vpack.c.bf16 %v2584, %v2583
    %2586 = vrot.lane.b32.xlu0 %v2347, 32
    %v2587 = vpop.permute.xlu0 %2586
    %2588 = vrot.lane.b32.xlu0 %v2322, 32
    %v2589 = vpop.permute.xlu0 %2588
    %v2591 = vsel %vm235, %v2587, 0
    %v2594 = vsel %vm235, %v2589, 0
    %2596 = vmatprep.subr.bf16.mxu0 0
    %2597 = vmatpush1.bf16.xpose.msra.mxu0 %v2594
    %2598 = vmatprep.subr.bf16.mxu0 0
    %2599 = vmatpush1.bf16.xpose.msra.mxu0 0
    %2600 = vmatprep.subr.bf16.mxu0 0
    %2601 = vmatpush1.bf16.xpose.msra.mxu0 0
    %2602 = vmatprep.subr.bf16.mxu0 0
    %2603 = vmatpush1.bf16.xpose.msra.mxu0 0
    %2604 = vmatprep.subr.bf16.mxu0 0
    %2605 = vmatpush1.bf16.xpose.msra.mxu0 0
    %2606 = vmatprep.subr.bf16.mxu0 0
    %2607 = vmatpush1.bf16.xpose.msra.mxu0 0
    %2608 = vmatprep.subr.bf16.mxu0 0
    %2609 = vmatpush1.bf16.xpose.msra.mxu0 0
    %2610 = vmatprep.subr.bf16.mxu0 0
    %2611 = vmatpush1.bf16.xpose.msra.mxu0 0
    %2612 = vmatprep.subr.bf16.mxu0 0
    %2613 = vmatpush1.bf16.xpose.msra.mxu0 0
    %2614 = vmatprep.subr.bf16.mxu0 0
    %2615 = vmatpush1.bf16.xpose.msra.mxu0 0
    %2616 = vmatprep.subr.bf16.mxu0 0
    %2617 = vmatpush1.bf16.xpose.msra.mxu0 0
    %2618 = vmatprep.subr.bf16.mxu0 0
    %2619 = vmatpush1.bf16.xpose.msra.mxu0 0
    %2620 = vmatprep.subr.bf16.mxu0 0
    %2621 = vmatpush1.bf16.xpose.msra.mxu0 0
    %2622 = vmatprep.subr.bf16.mxu0 0
    %2623 = vmatpush1.bf16.xpose.msra.mxu0 0
    %2624 = vmatprep.subr.bf16.mxu0 0
    %2625 = vmatpush1.bf16.xpose.msra.mxu0 0
    %2626 = vmatprep.subr.bf16.mxu0 0
    %2627 = vmatpush1.bf16.xpose.msra.mxu0 0
    %2628 = vmatprep.mubr.bf16.mxu0 0
    %2629 = vmatmul.mubr.bf16.gmra.mrb[0].mxu0 %v2591
    %v2630 = vpop.f32.mrb[0].mxu0
    %v2631 = vadd.f32 0.0, %v2630
    %v2632 = vpop.f32.mrb[0].mxu0
    %v2633 = vpop.f32.mrb[0].mxu0
    %v2634 = vadd.f32 0.0, %v2633
    %v2635 = vpop.f32.mrb[0].mxu0
    %2636 = vdwg.mxu0
    %v2637 = vsel %vm406, %v2631, -1e+30
    %v2638 = vsel %vm407, %v2634, -1e+30
    %v2639 = vsel %vm410, %v2637, -inf
    %2640 = vmax.xlane.f32.xlu0 %v2639
    %v2641 = vpop.xlane.xlu0 %2640
    %v2642 = vsel %vm410, %v2638, -inf
    %2643 = vmax.xlane.f32.xlu0 %v2642
    %v2644 = vpop.xlane.xlu0 %2643
    %v2645 = vsub.f32 %v2637, %v2641
    %v2646 = vsub.f32 %v2638, %v2644
    %v2647 = vmul.f32 %v2645, 1.442695
    %v2648 = vpow.pop %v2647
    %v2649 = vmul.f32 %v2646, 1.442695
    %v2650 = vpow.pop %v2649
    %v2651 = vsel %vm406, %v2648, 0.0
    %v2652 = vsel %vm407, %v2650, 0.0
    %v2653 = vsel %vm410, %v2651, 0.0
    %2654 = vadd.xlane.f32.xlu0 %v2653
    %v2655 = vpop.xlane.xlu0 %2654
    %v2656 = vsel %vm410, %v2652, 0.0
    %2657 = vadd.xlane.f32.xlu0 %v2656
    %v2658 = vpop.xlane.xlu0 %2657
    %v2659 = vmax.f32 %v2655, 1e-16
    %v2660 = vmax.f32 %v2658, 1e-16
    %v2661 = vrcp.pop %v2659
    %v2662 = vrcp.pop %v2660
    %v2663 = vmul.f32 %v2651, %v2661
    %v2664 = vmul.f32 %v2652, %v2662
    %v2665 = vpack.c.bf16 %v2664, %v2663
    %2667 = vrot.lane.b32.xlu0 %v2505, 16
    %v2668 = vpop.permute.xlu0 %2667
    %2670 = vrot.lane.b32.xlu0 %v2585, 32
    %v2671 = vpop.permute.xlu0 %2670
    %2673 = vrot.lane.b32.xlu0 %v2665, 48
    %v2674 = vpop.permute.xlu0 %2673
    %v2677 = vsel %vm410, %v2423, %v2668
    %v2679 = vsel %vm235, %v2677, %v2671
    %v2681 = vsel %vm694, %v2679, %v2674
    %v2682 = vsel %vm697, %v2681, 0
    %2684 = vmatprep.subr.bf16.mxu0 0
    %2685 = vmatpush1.bf16.msra.mxu0 %v2343
    %2686 = vmatprep.subr.bf16.mxu0 0
    %2687 = vmatpush1.bf16.msra.mxu0 %v2344
    %2688 = vmatprep.subr.bf16.mxu0 0
    %2689 = vmatpush1.bf16.msra.mxu0 %v2345
    %2690 = vmatprep.subr.bf16.mxu0 0
    %2691 = vmatpush1.bf16.msra.mxu0 %v2346
    %2692 = vmatprep.subr.bf16.mxu0 0
    %2693 = vmatpush1.bf16.msra.mxu0 0
    %2694 = vmatprep.subr.bf16.mxu0 0
    %2695 = vmatpush1.bf16.msra.mxu0 0
    %2696 = vmatprep.subr.bf16.mxu0 0
    %2697 = vmatpush1.bf16.msra.mxu0 0
    %2698 = vmatprep.subr.bf16.mxu0 0
    %2699 = vmatpush1.bf16.msra.mxu0 0
    %2700 = vmatprep.subr.bf16.mxu0 0
    %2701 = vmatpush1.bf16.msra.mxu0 0
    %2702 = vmatprep.subr.bf16.mxu0 0
    %2703 = vmatpush1.bf16.msra.mxu0 0
    %2704 = vmatprep.subr.bf16.mxu0 0
    %2705 = vmatpush1.bf16.msra.mxu0 0
    %2706 = vmatprep.subr.bf16.mxu0 0
    %2707 = vmatpush1.bf16.msra.mxu0 0
    %2708 = vmatprep.subr.bf16.mxu0 0
    %2709 = vmatpush1.bf16.msra.mxu0 0
    %2710 = vmatprep.subr.bf16.mxu0 0
    %2711 = vmatpush1.bf16.msra.mxu0 0
    %2712 = vmatprep.subr.bf16.mxu0 0
    %2713 = vmatpush1.bf16.msra.mxu0 0
    %2714 = vmatprep.subr.bf16.mxu0 0
    %2715 = vmatpush1.bf16.msra.mxu0 0
    %2716 = vmatprep.mubr.bf16.mxu0 0
    %2717 = vmatmul.mubr.bf16.gmra.mrb[0].mxu0 %v2682
    %v2718 = vpop.f32.mrb[0].mxu0
    %v2719 = vadd.f32 0.0, %v2718
    %v2720 = vpop.f32.mrb[0].mxu0
    %v2721 = vpop.f32.mrb[0].mxu0
    %v2722 = vadd.f32 0.0, %v2721
    %v2723 = vpop.f32.mrb[0].mxu0
    %2724 = vdwg.mxu0
    %v2725 = vmul.f32 %v2719, 0.25
    %v2726 = vmul.f32 %v2722, 0.25
    %v2727 = vlaneseq
    %v2728 = vshrl.u32 %v2727, 7
    %v2729 = vsub.s32 1, %v2728
    %v2730 = vrot.slane %v2154, %v2729
    %v2731 = vmul.f32 %v2725, %v2730
    %v2732 = vmul.f32 %v2726, %v2730
    %2734 = vrot.lane.b32.xlu0 %v2730, 96
    %v2735 = vpop.permute.xlu0 %2734
    %v2737 = vmul.f32 %v2316, %v2735
    %v2738 = vmul.f32 %v2320, %v2735
    %v2739 = vadd.f32 %v2731, %v2737
    %v2740 = vadd.f32 %v2732, %v2738
    %v2741 = vsel %vm235, %v2739, 0.0
    %2742 = vadd.xlane.f32.xlu0 %v2741
    %v2743 = vpop.xlane.xlu0 %2742
    %v2744 = vsel %vm235, %v2740, 0.0
    %2745 = vadd.xlane.f32.xlu0 %v2744
    %v2746 = vpop.xlane.xlu0 %2745
    %v2747 = vxor.u32 %v2743, 2147483648
    %v2748 = vxor.u32 %v2746, 2147483648
    %v2749 = vmul.f32 %v2747, 1.442695
    %v2750 = vpow.pop %v2749
    %v2751 = vmul.f32 %v2748, 1.442695
    %v2752 = vpow.pop %v2751
    %v2753 = vadd.f32 %v2750, 1.0
    %v2754 = vadd.f32 %v2752, 1.0
    %v2755 = vrcp.pop %v2753
    %v2756 = vmul.f32 1.0, %v2755
    %v2757 = vrcp.pop %v2754
    %v2758 = vmul.f32 1.0, %v2757
    %v2759 = vmul.f32 %v2756, %v2316
    %v2760 = vmul.f32 %v2758, %v2320
    %v2761 = vsub.f32 1.0, %v2756
    %v2762 = vsub.f32 1.0, %v2758
    %v2763 = vmul.f32 %v2761, %v2725
    %v2764 = vmul.f32 %v2762, %v2726
    %v2765 = vadd.f32 %v2759, %v2763
    %v2766 = vadd.f32 %v2760, %v2764
    %v2767 = vsel %vm235, %v2765, 0.0
    %2768 = vadd.xlane.f32.xlu0 %v2767
    %v2769 = vpop.xlane.xlu0 %2768
    %v2770 = vsel %vm235, %v2766, 0.0
    %2771 = vadd.xlane.f32.xlu0 %v2770
    %v2772 = vpop.xlane.xlu0 %2771
    %v2773 = vmul.f32 %v2769, %v789
    %v2774 = vmul.f32 %v2772, %v789
    %v2775 = vsub.f32 %v2765, %v2773
    %v2776 = vsub.f32 %v2766, %v2774
    %v2777 = vmul.f32 %v2775, %v2775
    %v2778 = vmul.f32 %v2776, %v2776
    %v2779 = vsel %vm235, %v2777, 0.0
    %2780 = vadd.xlane.f32.xlu0 %v2779
    %v2781 = vpop.xlane.xlu0 %2780
    %v2782 = vsel %vm235, %v2778, 0.0
    %2783 = vadd.xlane.f32.xlu0 %v2782
    %v2784 = vpop.xlane.xlu0 %2783
    %v2785 = vmul.f32 %v2781, %v789
    %v2786 = vmul.f32 %v2784, %v789
    %v2787 = vadd.f32 %v2785, 1e-05
    %v2788 = vadd.f32 %v2786, 1e-05
    %v2789 = vrsqrt.pop %v2787
    %v2790 = vrsqrt.pop %v2788
    %v2791 = vmul.f32 %v2775, %v2789
    %v2792 = vmul.f32 %v2776, %v2790
    %2793 = vrot.lane.b32.xlu0 %v2730, 64
    %v2794 = vpop.permute.xlu0 %2793
    %v2796 = vmul.f32 %v2791, %v2794
    %v2797 = vmul.f32 %v2792, %v2794
    %2798 = vrot.lane.b32.xlu0 %v2730, 32
    %v2799 = vpop.permute.xlu0 %2798
    %v2801 = vadd.f32 %v2796, %v2799
    %v2802 = vadd.f32 %v2797, %v2799
    %v2803 = vmax.f32 %v2801, 0.0
    %v2804 = vmax.f32 %v2802, 0.0
    %v2805 = vld [vmem:[%s2] sm:$0x1]
    %v2806 = vunpack.c.l.bf16 %v2805
    %vm2807 = vcmask 123904
    %v2808 = vsel %vm2807, %v2806, 0.0
    %2809 = vadd.xlane.f32.xlu0 %v2808
    %v2810 = vpop.xlane.xlu0 %2809
    %v2811 = vpack.c.bf16 %v2804, %v2803
    %v2813 = vsel %vm410, %v2805, 0
    %2815 = vmatprep.subr.bf16.mxu0 0
    %2816 = vmatpush1.bf16.msra.mxu0 %v2811
    %2817 = vmatprep.subr.bf16.mxu0 0
    %2818 = vmatpush1.bf16.msra.mxu0 0
    %2819 = vmatprep.subr.bf16.mxu0 0
    %2820 = vmatpush1.bf16.msra.mxu0 0
    %2821 = vmatprep.subr.bf16.mxu0 0
    %2822 = vmatpush1.bf16.msra.mxu0 0
    %2823 = vmatprep.subr.bf16.mxu0 0
    %2824 = vmatpush1.bf16.msra.mxu0 0
    %2825 = vmatprep.subr.bf16.mxu0 0
    %2826 = vmatpush1.bf16.msra.mxu0 0
    %2827 = vmatprep.subr.bf16.mxu0 0
    %2828 = vmatpush1.bf16.msra.mxu0 0
    %2829 = vmatprep.subr.bf16.mxu0 0
    %2830 = vmatpush1.bf16.msra.mxu0 0
    %2831 = vmatprep.subr.bf16.mxu0 0
    %2832 = vmatpush1.bf16.msra.mxu0 0
    %2833 = vmatprep.subr.bf16.mxu0 0
    %2834 = vmatpush1.bf16.msra.mxu0 0
    %2835 = vmatprep.subr.bf16.mxu0 0
    %2836 = vmatpush1.bf16.msra.mxu0 0
    %2837 = vmatprep.subr.bf16.mxu0 0
    %2838 = vmatpush1.bf16.msra.mxu0 0
    %2839 = vmatprep.subr.bf16.mxu0 0
    %2840 = vmatpush1.bf16.msra.mxu0 0
    %2841 = vmatprep.subr.bf16.mxu0 0
    %2842 = vmatpush1.bf16.msra.mxu0 0
    %2843 = vmatprep.subr.bf16.mxu0 0
    %2844 = vmatpush1.bf16.msra.mxu0 0
    %2845 = vmatprep.subr.bf16.mxu0 0
    %2846 = vmatpush1.bf16.msra.mxu0 0
    %2847 = vmatprep.mubr.bf16.mxu0 0
    %2848 = vmatmul.mubr.bf16.gmra.mrb[0].mxu0 %v2813
    %v2849 = vpop.f32.mrb[0].mxu0
    %v2850 = vadd.f32 0.0, %v2849
    %v2851 = vpop.f32.mrb[0].mxu0
    %v2852 = vpop.f32.mrb[0].mxu0
    %v2853 = vpop.f32.mrb[0].mxu0
    %2854 = vdwg.mxu0
    %v2855 = vmax.f32 %v2810, 1.0
    %v2856 = vrcp.pop %v2855
    %v2857 = vmul.f32 %v2850, %v2856
    %vm2858 = vcmask 254976
    %2859 = vst.msk [vmem:[#allocation10] sm:$0x3] %vm2858, %v2857
    // Predicated region
    $region42: #{tpu_custom_call.1} parent=1 // pred_check
      _
    $region43: #{tpu_custom_call.1} parent=1 // pred_check_branch
      %2861 = sbr.rel (0) target = $region45
    $region44: #{tpu_custom_call.1} parent=1 // pred_region
      %s2863 = ssub.s32 32, 32
      %2864 = vsyncadd [#allocation4], %s2863
      %s2866 = sshll.u32 [#allocation10], 4
      %s2867 = int_to_ptr.vmem [resolvable:$true] %s2866
      %2869 = dma.vmem_to_hbm [thread:$0]  %s2867, 32, %s6, [#allocation4]
    $region45: #{tpu_custom_call.1} parent=1 // pred_fallthru
      _
    // Predicated region
    $region46: #{tpu_custom_call.1} parent=1 // pred_check
      _
    $region47: #{tpu_custom_call.1} parent=1 // pred_check_branch
      %2871 = sbr.rel (0) target = $region49
    $region48: #{tpu_custom_call.1} parent=1 // pred_region
      %2872 = dma.done [#allocation4], 32
    $region49: #{tpu_custom_call.1} parent=1 // pred_fallthru
      _
    %2873 = vsyncpa [#allocation3], 1
    %2874 = vsyncpa [#allocation6], 1
    %2875 = vsyncpa [#allocation9], 1
    %2876 = vsyncpa [#allocation4], 1

</llo_original>
